<compile_context>
chip_gen: v7x
topology: tpu7x:2x2x1
jax: 0.10.0
libtpu: 0.0.40
codegen_flags: <defaults>
</compile_context>

<pallas_src>
import functools

import jax
import jax.numpy as jnp
from jax.experimental import pallas as pl

D_MODEL = 32          # conv out-channels == transformer d_model == GCN width
HEADS = 4
DIM_FF = 2048         # nn.TransformerEncoderLayer default dim_feedforward
FFN_CHUNK = 512       # lane-dense chunking of the 2048-wide FFN

_NT = (((1,), (1,)), ((), ()))   # dot_general "A @ B^T" dimension numbers


def _layer_norm(x, g, b, eps=1e-5):
    mu = jnp.mean(x, axis=-1, keepdims=True)
    var = jnp.mean((x - mu) ** 2, axis=-1, keepdims=True)
    return (x - mu) * jax.lax.rsqrt(var + eps) * g + b


def _model_kernel(patches_ref, conv_w_ref, sqw_ref, ffn_w1_ref, ffn_w2t_ref,
                  ffn_b1_ref, fc_w_ref, adj_ref, small_ref, out_ref,
                  *, L, N, E, heads, dim_ff, ffn_chunk, num_classes):
    f32 = jnp.float32
    bf16 = jnp.bfloat16
    hd = E // heads
    scale = 1.0 / float(hd) ** 0.5

    # ---- one packed DMA of every tiny per-feature parameter ----------------------
    sp = small_ref[...]                                  # (heads + 12, E) f32
    gt = sp[0:heads, :]                                  # (heads, E) head broadcast
    r = heads
    conv_b  = sp[r + 0:r + 1, :]
    q_b     = sp[r + 1:r + 2, :]
    k_b     = sp[r + 2:r + 3, :]
    v_b     = sp[r + 3:r + 4, :]
    oproj_b = sp[r + 4:r + 5, :]
    ln1_g   = sp[r + 5:r + 6, :]
    ln1_b   = sp[r + 6:r + 7, :]
    ln2_g   = sp[r + 7:r + 8, :]
    ln2_b   = sp[r + 8:r + 9, :]
    ffn_b2  = sp[r + 9:r + 10, :]
    gcn_b   = sp[r + 10:r + 11, :]
    fc_b    = sp[r + 11:r + 12, 0:num_classes]

    # ---- Conv2d(16->32, 3x3, pad=1) as im2col matmul (bf16 in, f32 acc) ----------
    tok = jnp.dot(patches_ref[...], conv_w_ref[...],
                  preferred_element_type=f32) + conv_b           # (L*N, E)
    tok_b = tok.astype(bf16)

    # ---- TransformerEncoderLayer self-attention (seq axis = dim 0, length L) -----
    # Three separate (E,E) projections: no non-tile-aligned lane slices.
    q = jnp.dot(tok_b, sqw_ref[0], preferred_element_type=f32) + q_b
    k = jnp.dot(tok_b, sqw_ref[1], preferred_element_type=f32) + k_b
    v = jnp.dot(tok_b, sqw_ref[2], preferred_element_type=f32) + v_b

    # Stack all L*L (query, key) pairs so the head-reduce / head-broadcast run as
    # 2 MXU pushes with M = L*L*N instead of 2*L*L tiny M = N ones.
    q_rep = jnp.concatenate(
        [q[b * N:(b + 1) * N, :] for b in range(L) for _ in range(L)], axis=0)
    k_rep = jnp.concatenate([k] * L, axis=0)
    v_rep = jnp.concatenate([v] * L, axis=0)

    prod = (q_rep * scale) * k_rep                               # (L*L*N, E)
    s_all = jax.lax.dot_general(prod, gt, _NT,
                                preferred_element_type=f32)      # (L*L*N, heads)

    p_rows = []
    for b in range(L):
        sb = [s_all[(b * L + b2) * N:(b * L + b2 + 1) * N, :] for b2 in range(L)]
        m = sb[0]
        for b2 in range(1, L):
            m = jnp.maximum(m, sb[b2])
        e = [jnp.exp(s - m) for s in sb]
        den = e[0]
        for b2 in range(1, L):
            den = den + e[b2]
        inv = 1.0 / den                                          # exact softmax
        p_rows.extend(eb * inv for eb in e)
    p_all = jnp.concatenate(p_rows, axis=0)                      # (L*L*N, heads)

    p_full = jnp.dot(p_all, gt, preferred_element_type=f32)      # (L*L*N, E)
    pv = p_full * v_rep
    o_rows = []
    for b in range(L):
        o = pv[(b * L) * N:(b * L + 1) * N, :]
        for b2 in range(1, L):
            o = o + pv[(b * L + b2) * N:(b * L + b2 + 1) * N, :]
        o_rows.append(o)
    attn = jnp.concatenate(o_rows, axis=0)                       # (L*N, E)

    attn = jnp.dot(attn.astype(bf16), sqw_ref[3],
                   preferred_element_type=f32) + oproj_b
    x = _layer_norm(tok + attn, ln1_g, ln1_b)                    # post-norm

    # ---- FFN 32 -> 2048 -> 32, ReLU, lane-dense bf16 weights, 512-wide chunks ----
    xb = x.astype(bf16)
    y = jnp.zeros((L * N, E), f32)
    for c in range(dim_ff // ffn_chunk):
        lo, hi = c * ffn_chunk, (c + 1) * ffn_chunk
        hc = jnp.dot(xb, ffn_w1_ref[:, lo:hi],
                     preferred_element_type=f32) + ffn_b1_ref[:, lo:hi]
        hc = jnp.maximum(hc, 0.0).astype(bf16)                   # bf16 bounds vregs
        y = y + jax.lax.dot_general(hc, ffn_w2t_ref[:, lo:hi], _NT,
                                    preferred_element_type=f32)
    y = y + ffn_b2
    x = _layer_norm(x + y, ln2_g, ln2_b)                         # (L*N, E)

    # ---- permute(0, 2, 1).reshape(B*C, H*W): per-batch 32x32 transpose -----------
    nodes = jnp.concatenate([x[b * N:(b + 1) * N, :].T for b in range(L)], axis=0)

    # ---- two GCNConv layers (shared weights), ReLU between, dropout = identity ---
    adj = adj_ref[...]                                           # (L*E, L*E) bf16
    gw = sqw_ref[4]                                              # (E, E) bf16
    xw = jnp.dot(nodes.astype(bf16), gw, preferred_element_type=f32)
    h1 = jnp.dot(adj, xw.astype(bf16), preferred_element_type=f32) + gcn_b
    h1 = jnp.maximum(h1, 0.0)
    xw2 = jnp.dot(h1.astype(bf16), gw, preferred_element_type=f32)
    h2 = jnp.dot(adj, xw2.astype(bf16), preferred_element_type=f32) + gcn_b

    # ---- classifier + fused log_softmax ------------------------------------------
    logits = jnp.dot(h2.astype(bf16), fc_w_ref[...],
                     preferred_element_type=f32) + fc_b
    mx = jnp.max(logits, axis=-1, keepdims=True)
    lse = jnp.log(jnp.sum(jnp.exp(logits - mx), axis=-1, keepdims=True)) + mx
    out_ref[...] = (logits - lse).astype(out_ref.dtype)


def _normalized_adjacency(edge_index, num_nodes):
    # D^-1/2 (A + I) D^-1/2 built with a one-hot MXU contraction instead of a
    # serialized scatter-add (scatter dominated end-to-end latency previously).
    src, dst = edge_index[0], edge_index[1]
    oh_src = jax.nn.one_hot(src, num_nodes, dtype=jnp.float32)
    oh_dst = jax.nn.one_hot(dst, num_nodes, dtype=jnp.float32)
    a = jnp.dot(oh_dst.T, oh_src) + jnp.eye(num_nodes, dtype=jnp.float32)
    dinv = jax.lax.rsqrt(jnp.maximum(jnp.sum(a, axis=1), 1e-12))
    return a * dinv[:, None] * dinv[None, :]


def model1_forward(params, x, edge_index, *, num_classes):
    B, c_in, H, W = x.shape
    E = D_MODEL
    # The PyTorch forward reshapes the transformer output to (B*32, H*W) and feeds it
    # to GCNConv(32, 32), so the spatial size must satisfy H*W == 32.
    assert H * W == E, "GCNConv(32, 32) requires H*W == 32"
    assert num_classes <= E
    N = H * W
    num_nodes = B * E

    # im2col for the 3x3 conv (pure layout work, left to XLA); bf16 at the boundary.
    x_nhwc = jnp.transpose(x, (0, 2, 3, 1))
    xp = jnp.pad(x_nhwc, ((0, 0), (1, 1), (1, 1), (0, 0)))
    cols = [xp[:, kh:kh + H, kw:kw + W, :] for kh in range(3) for kw in range(3)]
    patches = jnp.concatenate(cols, axis=-1).reshape(B * N, 9 * c_in)
    patches = patches.astype(jnp.bfloat16)

    adj = _normalized_adjacency(edge_index, num_nodes).astype(jnp.bfloat16)

    kern = functools.partial(_model_kernel, L=B, N=N, E=E, heads=HEADS,
                             dim_ff=DIM_FF, ffn_chunk=FFN_CHUNK,
                             num_classes=num_classes)
    # Single fused launch, no grid: total working set ~0.5 MiB, far below VMEM on
    # v5e/v6e/v7x; a 2-TC split or grid would be pure sync/DMA overhead at this size.
    return pl.pallas_call(
        kern,
        out_shape=jax.ShapeDtypeStruct((num_nodes, num_classes), jnp.float32),
    )(patches, params["conv_w"], params["sq_w"], params["ffn_w1"],
      params["ffn_w2t"], params["ffn_b1"], params["fc_w"], adj, params["small"])


def init_params(key, in_channels, num_classes):
    assert num_classes <= D_MODEL
    keys = iter(jax.random.split(key, 16))
    f32, bf16 = jnp.float32, jnp.bfloat16
    E = D_MODEL

    def Wm(shape, scale=0.02):
        return scale * jax.random.normal(next(keys), shape, f32)

    conv_w = Wm((9 * in_channels, E))
    wq, wk, wv = Wm((E, E)), Wm((E, E)), Wm((E, E))
    out_w = Wm((E, E))
    gcn_w = Wm((E, E))
    ffn_w1 = Wm((E, DIM_FF))
    ffn_w2 = Wm((DIM_FF, E))
    fc_w = Wm((E, num_classes))

    zero = jnp.zeros((1, E), f32)
    one = jnp.ones((1, E), f32)
    fc_b = jnp.zeros((1, E), f32)            # padded to E; kernel slices :num_classes
    head_id = jnp.arange(E, dtype=jnp.int32) // (E // HEADS)
    gt = (head_id[None, :] ==
          jnp.arange(HEADS, dtype=jnp.int32)[:, None]).astype(f32)   # (HEADS, E)

    # Packed (HEADS+12, E) array: head-broadcast matrix + all tiny bias / LN params
    # -> the kernel sees ONE small DMA instead of a dozen.
    small = jnp.concatenate([
        gt,                       # rows 0..HEADS-1 : head-broadcast matrix
        zero,                     # conv bias
        zero, zero, zero,         # q / k / v biases
        zero,                     # out_proj bias
        one, zero,                # ln1 gamma / beta
        one, zero,                # ln2 gamma / beta
        zero,                     # ffn second-layer bias
        zero,                     # gcn bias
        fc_b,                     # fc bias (padded to E)
    ], axis=0)

    return dict(
        conv_w=conv_w.astype(bf16),                                # (9*Cin, E)
        sq_w=jnp.stack([wq, wk, wv, out_w, gcn_w]).astype(bf16),   # (5, E, E)
        ffn_w1=ffn_w1.astype(bf16),                                # (E, 2048)
        ffn_w2t=ffn_w2.T.astype(bf16),                             # (E, 2048) lane-dense
        ffn_b1=jnp.zeros((1, DIM_FF), f32),
        fc_w=fc_w.astype(bf16),                                    # (E, num_classes)
        small=small,                                               # (16, E) f32
    )


if __name__ == "__main__":
    key = jax.random.PRNGKey(0)
    pkey, xkey = jax.random.split(key)

    B, C_IN, H, W = 2, 16, 4, 8       # H*W == 32 as required by GCNConv(32, 32)
    NUM_CLASSES = 10

    params = init_params(pkey, C_IN, NUM_CLASSES)
    x = jax.random.normal(xkey, (B, C_IN, H, W), jnp.float32)

    # Deterministic bidirectional ring graph over the B*32 nodes.
    n_nodes = B * D_MODEL
    idx = jnp.arange(n_nodes, dtype=jnp.int32)
    src = jnp.concatenate([idx, (idx + 1) % n_nodes])
    dst = jnp.concatenate([(idx + 1) % n_nodes, idx])
    edge_index = jnp.stack([src, dst], axis=0)

    fwd = jax.jit(functools.partial(model1_forward, num_classes=NUM_CLASSES))
    out = jax.block_until_ready(fwd(params, x, edge_index))

    assert out.shape == (n_nodes, NUM_CLASSES), out.shape
    assert bool(jnp.all(jnp.isfinite(out)))
    print("KERNEL_OK")
</pallas_src>

<mosaic_0001>
module attributes {stable_mosaic.version = 11 : i64} {
  func.func @_model_kernel(%arg0: memref<64x144xbf16, #tpu.memory_space<vmem>>, %arg1: memref<144x32xbf16, #tpu.memory_space<vmem>>, %arg2: memref<5x32x32xbf16, #tpu.memory_space<vmem>>, %arg3: memref<32x2048xbf16, #tpu.memory_space<vmem>>, %arg4: memref<32x2048xbf16, #tpu.memory_space<vmem>>, %arg5: memref<1x2048xf32, #tpu.memory_space<vmem>>, %arg6: memref<32x10xbf16, #tpu.memory_space<vmem>>, %arg7: memref<64x64xbf16, #tpu.memory_space<vmem>>, %arg8: memref<16x32xf32, #tpu.memory_space<vmem>>, %arg9: memref<64x10xf32, #tpu.memory_space<vmem>>) attributes {dimension_semantics = [], scalar_prefetch = 0 : i64, scratch_operands = 0 : i64, tpu.core_type = #tpu.core_type<tc>} {
    %c0 = arith.constant 0 : index
    %c0_0 = arith.constant 0 : index
    %0 = vector.load %arg8[%c0, %c0_0] : memref<16x32xf32, #tpu.memory_space<vmem>>, vector<16x32xf32>
    %1 = vector.extract_strided_slice %0 {offsets = [0, 0], sizes = [4, 32], strides = [1, 1]} : vector<16x32xf32> to vector<4x32xf32>
    %2 = vector.extract_strided_slice %0 {offsets = [4, 0], sizes = [1, 32], strides = [1, 1]} : vector<16x32xf32> to vector<1x32xf32>
    %3 = vector.extract_strided_slice %0 {offsets = [5, 0], sizes = [1, 32], strides = [1, 1]} : vector<16x32xf32> to vector<1x32xf32>
    %4 = vector.extract_strided_slice %0 {offsets = [6, 0], sizes = [1, 32], strides = [1, 1]} : vector<16x32xf32> to vector<1x32xf32>
    %5 = vector.extract_strided_slice %0 {offsets = [7, 0], sizes = [1, 32], strides = [1, 1]} : vector<16x32xf32> to vector<1x32xf32>
    %6 = vector.extract_strided_slice %0 {offsets = [8, 0], sizes = [1, 32], strides = [1, 1]} : vector<16x32xf32> to vector<1x32xf32>
    %7 = vector.extract_strided_slice %0 {offsets = [9, 0], sizes = [1, 32], strides = [1, 1]} : vector<16x32xf32> to vector<1x32xf32>
    %8 = vector.extract_strided_slice %0 {offsets = [10, 0], sizes = [1, 32], strides = [1, 1]} : vector<16x32xf32> to vector<1x32xf32>
    %9 = vector.extract_strided_slice %0 {offsets = [11, 0], sizes = [1, 32], strides = [1, 1]} : vector<16x32xf32> to vector<1x32xf32>
    %10 = vector.extract_strided_slice %0 {offsets = [12, 0], sizes = [1, 32], strides = [1, 1]} : vector<16x32xf32> to vector<1x32xf32>
    %11 = vector.extract_strided_slice %0 {offsets = [13, 0], sizes = [1, 32], strides = [1, 1]} : vector<16x32xf32> to vector<1x32xf32>
    %12 = vector.extract_strided_slice %0 {offsets = [14, 0], sizes = [1, 32], strides = [1, 1]} : vector<16x32xf32> to vector<1x32xf32>
    %13 = vector.extract_strided_slice %0 {offsets = [15, 0], sizes = [1, 10], strides = [1, 1]} : vector<16x32xf32> to vector<1x10xf32>
    %c0_1 = arith.constant 0 : index
    %c0_2 = arith.constant 0 : index
    %14 = vector.load %arg0[%c0_1, %c0_2] : memref<64x144xbf16, #tpu.memory_space<vmem>>, vector<64x144xbf16>
    %c0_3 = arith.constant 0 : index
    %c0_4 = arith.constant 0 : index
    %15 = vector.load %arg1[%c0_3, %c0_4] : memref<144x32xbf16, #tpu.memory_space<vmem>>, vector<144x32xbf16>
    %cst = arith.constant dense<0.000000e+00> : vector<64x32xf32>
    %16 = tpu.matmul %14, %15, %cst {dimension_numbers = #tpu.dot_dimension_numbers<[1], [0], [0], [1], [0, 0, 1, 1], [], []>} : vector<64x144xbf16>, vector<144x32xbf16>, vector<64x32xf32> -> vector<64x32xf32>
    %17 = vector.broadcast %2 : vector<1x32xf32> to vector<64x32xf32>
    %18 = arith.addf %16, %17 : vector<64x32xf32>
    %19 = arith.truncf %18 : vector<64x32xf32> to vector<64x32xbf16>
    %c0_5 = arith.constant 0 : index
    %c0_6 = arith.constant 0 : index
    %c0_7 = arith.constant 0 : index
    %20 = vector.load %arg2[%c0_5, %c0_6, %c0_7] : memref<5x32x32xbf16, #tpu.memory_space<vmem>>, vector<1x32x32xbf16>
    %21 = vector.shape_cast %20 : vector<1x32x32xbf16> to vector<32x32xbf16>
    %cst_8 = arith.constant dense<0.000000e+00> : vector<64x32xf32>
    %22 = tpu.matmul %19, %21, %cst_8 {dimension_numbers = #tpu.dot_dimension_numbers<[1], [0], [0], [1], [0, 0, 1, 1], [], []>} : vector<64x32xbf16>, vector<32x32xbf16>, vector<64x32xf32> -> vector<64x32xf32>
    %23 = vector.broadcast %3 : vector<1x32xf32> to vector<64x32xf32>
    %24 = arith.addf %22, %23 : vector<64x32xf32>
    %c1 = arith.constant 1 : index
    %c0_9 = arith.constant 0 : index
    %c0_10 = arith.constant 0 : index
    %25 = vector.load %arg2[%c1, %c0_9, %c0_10] : memref<5x32x32xbf16, #tpu.memory_space<vmem>>, vector<1x32x32xbf16>
    %26 = vector.shape_cast %25 : vector<1x32x32xbf16> to vector<32x32xbf16>
    %cst_11 = arith.constant dense<0.000000e+00> : vector<64x32xf32>
    %27 = tpu.matmul %19, %26, %cst_11 {dimension_numbers = #tpu.dot_dimension_numbers<[1], [0], [0], [1], [0, 0, 1, 1], [], []>} : vector<64x32xbf16>, vector<32x32xbf16>, vector<64x32xf32> -> vector<64x32xf32>
    %28 = vector.broadcast %4 : vector<1x32xf32> to vector<64x32xf32>
    %29 = arith.addf %27, %28 : vector<64x32xf32>
    %c2 = arith.constant 2 : index
    %c0_12 = arith.constant 0 : index
    %c0_13 = arith.constant 0 : index
    %30 = vector.load %arg2[%c2, %c0_12, %c0_13] : memref<5x32x32xbf16, #tpu.memory_space<vmem>>, vector<1x32x32xbf16>
    %31 = vector.shape_cast %30 : vector<1x32x32xbf16> to vector<32x32xbf16>
    %cst_14 = arith.constant dense<0.000000e+00> : vector<64x32xf32>
    %32 = tpu.matmul %19, %31, %cst_14 {dimension_numbers = #tpu.dot_dimension_numbers<[1], [0], [0], [1], [0, 0, 1, 1], [], []>} : vector<64x32xbf16>, vector<32x32xbf16>, vector<64x32xf32> -> vector<64x32xf32>
    %33 = vector.broadcast %5 : vector<1x32xf32> to vector<64x32xf32>
    %34 = arith.addf %32, %33 : vector<64x32xf32>
    %35 = vector.extract_strided_slice %24 {offsets = [0, 0], sizes = [32, 32], strides = [1, 1]} : vector<64x32xf32> to vector<32x32xf32>
    %36 = vector.extract_strided_slice %24 {offsets = [0, 0], sizes = [32, 32], strides = [1, 1]} : vector<64x32xf32> to vector<32x32xf32>
    %37 = vector.extract_strided_slice %24 {offsets = [32, 0], sizes = [32, 32], strides = [1, 1]} : vector<64x32xf32> to vector<32x32xf32>
    %38 = vector.extract_strided_slice %24 {offsets = [32, 0], sizes = [32, 32], strides = [1, 1]} : vector<64x32xf32> to vector<32x32xf32>
    %39 = tpu.concatenate %35, %36, %37, %38 in 0 : vector<32x32xf32>, vector<32x32xf32>, vector<32x32xf32>, vector<32x32xf32> -> vector<128x32xf32>
    %40 = tpu.concatenate %29, %29 in 0 : vector<64x32xf32>, vector<64x32xf32> -> vector<128x32xf32>
    %41 = tpu.concatenate %34, %34 in 0 : vector<64x32xf32>, vector<64x32xf32> -> vector<128x32xf32>
    %cst_15 = arith.constant 0.353553385 : f32
    %42 = vector.broadcast %cst_15 : f32 to vector<128x32xf32>
    %43 = arith.mulf %39, %42 : vector<128x32xf32>
    %44 = arith.mulf %43, %40 : vector<128x32xf32>
    %cst_16 = arith.constant dense<0.000000e+00> : vector<128x4xf32>
    %45 = tpu.matmul %44, %1, %cst_16 {dimension_numbers = #tpu.dot_dimension_numbers<[1], [1], [0], [0], [0, 0, 1, 0], [], []>} : vector<128x32xf32>, vector<4x32xf32>, vector<128x4xf32> -> vector<128x4xf32>
    %46 = vector.extract_strided_slice %45 {offsets = [0, 0], sizes = [32, 4], strides = [1, 1]} : vector<128x4xf32> to vector<32x4xf32>
    %47 = vector.extract_strided_slice %45 {offsets = [32, 0], sizes = [32, 4], strides = [1, 1]} : vector<128x4xf32> to vector<32x4xf32>
    %48 = arith.maximumf %46, %47 : vector<32x4xf32>
    %49 = arith.subf %46, %48 : vector<32x4xf32>
    %50 = math.exp %49 : vector<32x4xf32>
    %51 = arith.subf %47, %48 : vector<32x4xf32>
    %52 = math.exp %51 : vector<32x4xf32>
    %53 = arith.addf %50, %52 : vector<32x4xf32>
    %cst_17 = arith.constant 1.000000e+00 : f32
    %54 = vector.broadcast %cst_17 : f32 to vector<32x4xf32>
    %55 = arith.divf %54, %53 : vector<32x4xf32>
    %56 = arith.mulf %50, %55 : vector<32x4xf32>
    %57 = arith.mulf %52, %55 : vector<32x4xf32>
    %58 = vector.extract_strided_slice %45 {offsets = [64, 0], sizes = [32, 4], strides = [1, 1]} : vector<128x4xf32> to vector<32x4xf32>
    %59 = vector.extract_strided_slice %45 {offsets = [96, 0], sizes = [32, 4], strides = [1, 1]} : vector<128x4xf32> to vector<32x4xf32>
    %60 = arith.maximumf %58, %59 : vector<32x4xf32>
    %61 = arith.subf %58, %60 : vector<32x4xf32>
    %62 = math.exp %61 : vector<32x4xf32>
    %63 = arith.subf %59, %60 : vector<32x4xf32>
    %64 = math.exp %63 : vector<32x4xf32>
    %65 = arith.addf %62, %64 : vector<32x4xf32>
    %cst_18 = arith.constant 1.000000e+00 : f32
    %66 = vector.broadcast %cst_18 : f32 to vector<32x4xf32>
    %67 = arith.divf %66, %65 : vector<32x4xf32>
    %68 = arith.mulf %62, %67 : vector<32x4xf32>
    %69 = arith.mulf %64, %67 : vector<32x4xf32>
    %70 = tpu.concatenate %56, %57, %68, %69 in 0 : vector<32x4xf32>, vector<32x4xf32>, vector<32x4xf32>, vector<32x4xf32> -> vector<128x4xf32>
    %cst_19 = arith.constant dense<0.000000e+00> : vector<128x32xf32>
    %71 = tpu.matmul %70, %1, %cst_19 {dimension_numbers = #tpu.dot_dimension_numbers<[1], [0], [0], [1], [0, 0, 1, 1], [], []>} : vector<128x4xf32>, vector<4x32xf32>, vector<128x32xf32> -> vector<128x32xf32>
    %72 = arith.mulf %71, %41 : vector<128x32xf32>
    %73 = vector.extract_strided_slice %72 {offsets = [0, 0], sizes = [32, 32], strides = [1, 1]} : vector<128x32xf32> to vector<32x32xf32>
    %74 = vector.extract_strided_slice %72 {offsets = [32, 0], sizes = [32, 32], strides = [1, 1]} : vector<128x32xf32> to vector<32x32xf32>
    %75 = arith.addf %73, %74 : vector<32x32xf32>
    %76 = vector.extract_strided_slice %72 {offsets = [64, 0], sizes = [32, 32], strides = [1, 1]} : vector<128x32xf32> to vector<32x32xf32>
    %77 = vector.extract_strided_slice %72 {offsets = [96, 0], sizes = [32, 32], strides = [1, 1]} : vector<128x32xf32> to vector<32x32xf32>
    %78 = arith.addf %76, %77 : vector<32x32xf32>
    %79 = tpu.concatenate %75, %78 in 0 : vector<32x32xf32>, vector<32x32xf32> -> vector<64x32xf32>
    %80 = arith.truncf %79 : vector<64x32xf32> to vector<64x32xbf16>
    %c3 = arith.constant 3 : index
    %c0_20 = arith.constant 0 : index
    %c0_21 = arith.constant 0 : index
    %81 = vector.load %arg2[%c3, %c0_20, %c0_21] : memref<5x32x32xbf16, #tpu.memory_space<vmem>>, vector<1x32x32xbf16>
    %82 = vector.shape_cast %81 : vector<1x32x32xbf16> to vector<32x32xbf16>
    %cst_22 = arith.constant dense<0.000000e+00> : vector<64x32xf32>
    %83 = tpu.matmul %80, %82, %cst_22 {dimension_numbers = #tpu.dot_dimension_numbers<[1], [0], [0], [1], [0, 0, 1, 1], [], []>} : vector<64x32xbf16>, vector<32x32xbf16>, vector<64x32xf32> -> vector<64x32xf32>
    %84 = vector.broadcast %6 : vector<1x32xf32> to vector<64x32xf32>
    %85 = arith.addf %83, %84 : vector<64x32xf32>
    %86 = arith.addf %18, %85 : vector<64x32xf32>
    %cst_23 = arith.constant dense<0.000000e+00> : vector<64xf32>
    %87 = vector.multi_reduction <add>, %86, %cst_23 [1] : vector<64x32xf32> to vector<64xf32>
    %88 = vector.shape_cast %87 : vector<64xf32> to vector<64x1xf32>
    %cst_24 = arith.constant 3.200000e+01 : f32
    %89 = vector.broadcast %cst_24 : f32 to vector<64x1xf32>
    %90 = arith.divf %88, %89 : vector<64x1xf32>
    %91 = vector.broadcast %90 : vector<64x1xf32> to vector<64x32xf32>
    %92 = arith.subf %86, %91 : vector<64x32xf32>
    %93 = arith.mulf %92, %92 : vector<64x32xf32>
    %cst_25 = arith.constant dense<0.000000e+00> : vector<64xf32>
    %94 = vector.multi_reduction <add>, %93, %cst_25 [1] : vector<64x32xf32> to vector<64xf32>
    %95 = vector.shape_cast %94 : vector<64xf32> to vector<64x1xf32>
    %cst_26 = arith.constant 3.200000e+01 : f32
    %96 = vector.broadcast %cst_26 : f32 to vector<64x1xf32>
    %97 = arith.divf %95, %96 : vector<64x1xf32>
    %98 = vector.broadcast %90 : vector<64x1xf32> to vector<64x32xf32>
    %99 = arith.subf %86, %98 : vector<64x32xf32>
    %cst_27 = arith.constant 9.99999974E-6 : f32
    %100 = vector.broadcast %cst_27 : f32 to vector<64x1xf32>
    %101 = arith.addf %97, %100 : vector<64x1xf32>
    %102 = math.rsqrt %101 : vector<64x1xf32>
    %103 = vector.broadcast %102 : vector<64x1xf32> to vector<64x32xf32>
    %104 = arith.mulf %99, %103 : vector<64x32xf32>
    %105 = vector.broadcast %7 : vector<1x32xf32> to vector<64x32xf32>
    %106 = arith.mulf %104, %105 : vector<64x32xf32>
    %107 = vector.broadcast %8 : vector<1x32xf32> to vector<64x32xf32>
    %108 = arith.addf %106, %107 : vector<64x32xf32>
    %109 = arith.truncf %108 : vector<64x32xf32> to vector<64x32xbf16>
    %cst_28 = arith.constant 0.000000e+00 : f32
    %110 = vector.broadcast %cst_28 : f32 to vector<64x32xf32>
    %c0_29 = arith.constant 0 : index
    %c0_30 = arith.constant 0 : index
    %111 = vector.load %arg3[%c0_29, %c0_30] : memref<32x2048xbf16, #tpu.memory_space<vmem>>, vector<32x512xbf16>
    %cst_31 = arith.constant dense<0.000000e+00> : vector<64x512xf32>
    %112 = tpu.matmul %109, %111, %cst_31 {dimension_numbers = #tpu.dot_dimension_numbers<[1], [0], [0], [1], [0, 0, 1, 1], [], []>} : vector<64x32xbf16>, vector<32x512xbf16>, vector<64x512xf32> -> vector<64x512xf32>
    %c0_32 = arith.constant 0 : index
    %c0_33 = arith.constant 0 : index
    %113 = vector.load %arg5[%c0_32, %c0_33] : memref<1x2048xf32, #tpu.memory_space<vmem>>, vector<1x512xf32>
    %114 = vector.broadcast %113 : vector<1x512xf32> to vector<64x512xf32>
    %115 = arith.addf %112, %114 : vector<64x512xf32>
    %cst_34 = arith.constant 0.000000e+00 : f32
    %116 = vector.broadcast %cst_34 : f32 to vector<64x512xf32>
    %117 = arith.maximumf %115, %116 : vector<64x512xf32>
    %118 = arith.truncf %117 : vector<64x512xf32> to vector<64x512xbf16>
    %c0_35 = arith.constant 0 : index
    %c0_36 = arith.constant 0 : index
    %119 = vector.load %arg4[%c0_35, %c0_36] : memref<32x2048xbf16, #tpu.memory_space<vmem>>, vector<32x512xbf16>
    %cst_37 = arith.constant dense<0.000000e+00> : vector<64x32xf32>
    %120 = tpu.matmul %118, %119, %cst_37 {dimension_numbers = #tpu.dot_dimension_numbers<[1], [1], [0], [0], [0, 0, 1, 0], [], []>} : vector<64x512xbf16>, vector<32x512xbf16>, vector<64x32xf32> -> vector<64x32xf32>
    %121 = arith.addf %110, %120 : vector<64x32xf32>
    %c0_38 = arith.constant 0 : index
    %c512 = arith.constant 512 : index
    %122 = vector.load %arg3[%c0_38, %c512] : memref<32x2048xbf16, #tpu.memory_space<vmem>>, vector<32x512xbf16>
    %cst_39 = arith.constant dense<0.000000e+00> : vector<64x512xf32>
    %123 = tpu.matmul %109, %122, %cst_39 {dimension_numbers = #tpu.dot_dimension_numbers<[1], [0], [0], [1], [0, 0, 1, 1], [], []>} : vector<64x32xbf16>, vector<32x512xbf16>, vector<64x512xf32> -> vector<64x512xf32>
    %c0_40 = arith.constant 0 : index
    %c512_41 = arith.constant 512 : index
    %124 = vector.load %arg5[%c0_40, %c512_41] : memref<1x2048xf32, #tpu.memory_space<vmem>>, vector<1x512xf32>
    %125 = vector.broadcast %124 : vector<1x512xf32> to vector<64x512xf32>
    %126 = arith.addf %123, %125 : vector<64x512xf32>
    %cst_42 = arith.constant 0.000000e+00 : f32
    %127 = vector.broadcast %cst_42 : f32 to vector<64x512xf32>
    %128 = arith.maximumf %126, %127 : vector<64x512xf32>
    %129 = arith.truncf %128 : vector<64x512xf32> to vector<64x512xbf16>
    %c0_43 = arith.constant 0 : index
    %c512_44 = arith.constant 512 : index
    %130 = vector.load %arg4[%c0_43, %c512_44] : memref<32x2048xbf16, #tpu.memory_space<vmem>>, vector<32x512xbf16>
    %cst_45 = arith.constant dense<0.000000e+00> : vector<64x32xf32>
    %131 = tpu.matmul %129, %130, %cst_45 {dimension_numbers = #tpu.dot_dimension_numbers<[1], [1], [0], [0], [0, 0, 1, 0], [], []>} : vector<64x512xbf16>, vector<32x512xbf16>, vector<64x32xf32> -> vector<64x32xf32>
    %132 = arith.addf %121, %131 : vector<64x32xf32>
    %c0_46 = arith.constant 0 : index
    %c1024 = arith.constant 1024 : index
    %133 = vector.load %arg3[%c0_46, %c1024] : memref<32x2048xbf16, #tpu.memory_space<vmem>>, vector<32x512xbf16>
    %cst_47 = arith.constant dense<0.000000e+00> : vector<64x512xf32>
    %134 = tpu.matmul %109, %133, %cst_47 {dimension_numbers = #tpu.dot_dimension_numbers<[1], [0], [0], [1], [0, 0, 1, 1], [], []>} : vector<64x32xbf16>, vector<32x512xbf16>, vector<64x512xf32> -> vector<64x512xf32>
    %c0_48 = arith.constant 0 : index
    %c1024_49 = arith.constant 1024 : index
    %135 = vector.load %arg5[%c0_48, %c1024_49] : memref<1x2048xf32, #tpu.memory_space<vmem>>, vector<1x512xf32>
    %136 = vector.broadcast %135 : vector<1x512xf32> to vector<64x512xf32>
    %137 = arith.addf %134, %136 : vector<64x512xf32>
    %cst_50 = arith.constant 0.000000e+00 : f32
    %138 = vector.broadcast %cst_50 : f32 to vector<64x512xf32>
    %139 = arith.maximumf %137, %138 : vector<64x512xf32>
    %140 = arith.truncf %139 : vector<64x512xf32> to vector<64x512xbf16>
    %c0_51 = arith.constant 0 : index
    %c1024_52 = arith.constant 1024 : index
    %141 = vector.load %arg4[%c0_51, %c1024_52] : memref<32x2048xbf16, #tpu.memory_space<vmem>>, vector<32x512xbf16>
    %cst_53 = arith.constant dense<0.000000e+00> : vector<64x32xf32>
    %142 = tpu.matmul %140, %141, %cst_53 {dimension_numbers = #tpu.dot_dimension_numbers<[1], [1], [0], [0], [0, 0, 1, 0], [], []>} : vector<64x512xbf16>, vector<32x512xbf16>, vector<64x32xf32> -> vector<64x32xf32>
    %143 = arith.addf %132, %142 : vector<64x32xf32>
    %c0_54 = arith.constant 0 : index
    %c1536 = arith.constant 1536 : index
    %144 = vector.load %arg3[%c0_54, %c1536] : memref<32x2048xbf16, #tpu.memory_space<vmem>>, vector<32x512xbf16>
    %cst_55 = arith.constant dense<0.000000e+00> : vector<64x512xf32>
    %145 = tpu.matmul %109, %144, %cst_55 {dimension_numbers = #tpu.dot_dimension_numbers<[1], [0], [0], [1], [0, 0, 1, 1], [], []>} : vector<64x32xbf16>, vector<32x512xbf16>, vector<64x512xf32> -> vector<64x512xf32>
    %c0_56 = arith.constant 0 : index
    %c1536_57 = arith.constant 1536 : index
    %146 = vector.load %arg5[%c0_56, %c1536_57] : memref<1x2048xf32, #tpu.memory_space<vmem>>, vector<1x512xf32>
    %147 = vector.broadcast %146 : vector<1x512xf32> to vector<64x512xf32>
    %148 = arith.addf %145, %147 : vector<64x512xf32>
    %cst_58 = arith.constant 0.000000e+00 : f32
    %149 = vector.broadcast %cst_58 : f32 to vector<64x512xf32>
    %150 = arith.maximumf %148, %149 : vector<64x512xf32>
    %151 = arith.truncf %150 : vector<64x512xf32> to vector<64x512xbf16>
    %c0_59 = arith.constant 0 : index
    %c1536_60 = arith.constant 1536 : index
    %152 = vector.load %arg4[%c0_59, %c1536_60] : memref<32x2048xbf16, #tpu.memory_space<vmem>>, vector<32x512xbf16>
    %cst_61 = arith.constant dense<0.000000e+00> : vector<64x32xf32>
    %153 = tpu.matmul %151, %152, %cst_61 {dimension_numbers = #tpu.dot_dimension_numbers<[1], [1], [0], [0], [0, 0, 1, 0], [], []>} : vector<64x512xbf16>, vector<32x512xbf16>, vector<64x32xf32> -> vector<64x32xf32>
    %154 = arith.addf %143, %153 : vector<64x32xf32>
    %155 = vector.broadcast %11 : vector<1x32xf32> to vector<64x32xf32>
    %156 = arith.addf %154, %155 : vector<64x32xf32>
    %157 = arith.addf %108, %156 : vector<64x32xf32>
    %cst_62 = arith.constant dense<0.000000e+00> : vector<64xf32>
    %158 = vector.multi_reduction <add>, %157, %cst_62 [1] : vector<64x32xf32> to vector<64xf32>
    %159 = vector.shape_cast %158 : vector<64xf32> to vector<64x1xf32>
    %cst_63 = arith.constant 3.200000e+01 : f32
    %160 = vector.broadcast %cst_63 : f32 to vector<64x1xf32>
    %161 = arith.divf %159, %160 : vector<64x1xf32>
    %162 = vector.broadcast %161 : vector<64x1xf32> to vector<64x32xf32>
    %163 = arith.subf %157, %162 : vector<64x32xf32>
    %164 = arith.mulf %163, %163 : vector<64x32xf32>
    %cst_64 = arith.constant dense<0.000000e+00> : vector<64xf32>
    %165 = vector.multi_reduction <add>, %164, %cst_64 [1] : vector<64x32xf32> to vector<64xf32>
    %166 = vector.shape_cast %165 : vector<64xf32> to vector<64x1xf32>
    %cst_65 = arith.constant 3.200000e+01 : f32
    %167 = vector.broadcast %cst_65 : f32 to vector<64x1xf32>
    %168 = arith.divf %166, %167 : vector<64x1xf32>
    %169 = vector.broadcast %161 : vector<64x1xf32> to vector<64x32xf32>
    %170 = arith.subf %157, %169 : vector<64x32xf32>
    %cst_66 = arith.constant 9.99999974E-6 : f32
    %171 = vector.broadcast %cst_66 : f32 to vector<64x1xf32>
    %172 = arith.addf %168, %171 : vector<64x1xf32>
    %173 = math.rsqrt %172 : vector<64x1xf32>
    %174 = vector.broadcast %173 : vector<64x1xf32> to vector<64x32xf32>
    %175 = arith.mulf %170, %174 : vector<64x32xf32>
    %176 = vector.broadcast %9 : vector<1x32xf32> to vector<64x32xf32>
    %177 = arith.mulf %175, %176 : vector<64x32xf32>
    %178 = vector.broadcast %10 : vector<1x32xf32> to vector<64x32xf32>
    %179 = arith.addf %177, %178 : vector<64x32xf32>
    %180 = vector.extract_strided_slice %179 {offsets = [0, 0], sizes = [32, 32], strides = [1, 1]} : vector<64x32xf32> to vector<32x32xf32>
    %181 = tpu.transpose %180, [1, 0] : vector<32x32xf32> -> vector<32x32xf32>
    %182 = vector.extract_strided_slice %179 {offsets = [32, 0], sizes = [32, 32], strides = [1, 1]} : vector<64x32xf32> to vector<32x32xf32>
    %183 = tpu.transpose %182, [1, 0] : vector<32x32xf32> -> vector<32x32xf32>
    %184 = tpu.concatenate %181, %183 in 0 : vector<32x32xf32>, vector<32x32xf32> -> vector<64x32xf32>
    %c0_67 = arith.constant 0 : index
    %c0_68 = arith.constant 0 : index
    %185 = vector.load %arg7[%c0_67, %c0_68] : memref<64x64xbf16, #tpu.memory_space<vmem>>, vector<64x64xbf16>
    %c4 = arith.constant 4 : index
    %c0_69 = arith.constant 0 : index
    %c0_70 = arith.constant 0 : index
    %186 = vector.load %arg2[%c4, %c0_69, %c0_70] : memref<5x32x32xbf16, #tpu.memory_space<vmem>>, vector<1x32x32xbf16>
    %187 = vector.shape_cast %186 : vector<1x32x32xbf16> to vector<32x32xbf16>
    %188 = arith.truncf %184 : vector<64x32xf32> to vector<64x32xbf16>
    %cst_71 = arith.constant dense<0.000000e+00> : vector<64x32xf32>
    %189 = tpu.matmul %188, %187, %cst_71 {dimension_numbers = #tpu.dot_dimension_numbers<[1], [0], [0], [1], [0, 0, 1, 1], [], []>} : vector<64x32xbf16>, vector<32x32xbf16>, vector<64x32xf32> -> vector<64x32xf32>
    %190 = arith.truncf %189 : vector<64x32xf32> to vector<64x32xbf16>
    %cst_72 = arith.constant dense<0.000000e+00> : vector<64x32xf32>
    %191 = tpu.matmul %185, %190, %cst_72 {dimension_numbers = #tpu.dot_dimension_numbers<[1], [0], [0], [1], [0, 0, 1, 1], [], []>} : vector<64x64xbf16>, vector<64x32xbf16>, vector<64x32xf32> -> vector<64x32xf32>
    %192 = vector.broadcast %12 : vector<1x32xf32> to vector<64x32xf32>
    %193 = arith.addf %191, %192 : vector<64x32xf32>
    %cst_73 = arith.constant 0.000000e+00 : f32
    %194 = vector.broadcast %cst_73 : f32 to vector<64x32xf32>
    %195 = arith.maximumf %193, %194 : vector<64x32xf32>
    %196 = arith.truncf %195 : vector<64x32xf32> to vector<64x32xbf16>
    %cst_74 = arith.constant dense<0.000000e+00> : vector<64x32xf32>
    %197 = tpu.matmul %196, %187, %cst_74 {dimension_numbers = #tpu.dot_dimension_numbers<[1], [0], [0], [1], [0, 0, 1, 1], [], []>} : vector<64x32xbf16>, vector<32x32xbf16>, vector<64x32xf32> -> vector<64x32xf32>
    %198 = arith.truncf %197 : vector<64x32xf32> to vector<64x32xbf16>
    %cst_75 = arith.constant dense<0.000000e+00> : vector<64x32xf32>
    %199 = tpu.matmul %185, %198, %cst_75 {dimension_numbers = #tpu.dot_dimension_numbers<[1], [0], [0], [1], [0, 0, 1, 1], [], []>} : vector<64x64xbf16>, vector<64x32xbf16>, vector<64x32xf32> -> vector<64x32xf32>
    %200 = vector.broadcast %12 : vector<1x32xf32> to vector<64x32xf32>
    %201 = arith.addf %199, %200 : vector<64x32xf32>
    %202 = arith.truncf %201 : vector<64x32xf32> to vector<64x32xbf16>
    %c0_76 = arith.constant 0 : index
    %c0_77 = arith.constant 0 : index
    %203 = vector.load %arg6[%c0_76, %c0_77] : memref<32x10xbf16, #tpu.memory_space<vmem>>, vector<32x10xbf16>
    %cst_78 = arith.constant dense<0.000000e+00> : vector<64x10xf32>
    %204 = tpu.matmul %202, %203, %cst_78 {dimension_numbers = #tpu.dot_dimension_numbers<[1], [0], [0], [1], [0, 0, 1, 1], [], []>} : vector<64x32xbf16>, vector<32x10xbf16>, vector<64x10xf32> -> vector<64x10xf32>
    %205 = vector.broadcast %13 : vector<1x10xf32> to vector<64x10xf32>
    %206 = arith.addf %204, %205 : vector<64x10xf32>
    %cst_79 = arith.constant dense<0xFF800000> : vector<64xf32>
    %207 = vector.multi_reduction <maximumf>, %206, %cst_79 [1] : vector<64x10xf32> to vector<64xf32>
    %208 = vector.shape_cast %207 : vector<64xf32> to vector<64x1xf32>
    %209 = vector.broadcast %208 : vector<64x1xf32> to vector<64x10xf32>
    %210 = arith.subf %206, %209 : vector<64x10xf32>
    %211 = math.exp %210 : vector<64x10xf32>
    %cst_80 = arith.constant dense<0.000000e+00> : vector<64xf32>
    %212 = vector.multi_reduction <add>, %211, %cst_80 [1] : vector<64x10xf32> to vector<64xf32>
    %213 = vector.shape_cast %212 : vector<64xf32> to vector<64x1xf32>
    %214 = math.log %213 : vector<64x1xf32>
    %215 = arith.addf %214, %208 : vector<64x1xf32>
    %216 = vector.broadcast %215 : vector<64x1xf32> to vector<64x10xf32>
    %217 = arith.subf %206, %216 : vector<64x10xf32>
    %c0_81 = arith.constant 0 : index
    %c0_82 = arith.constant 0 : index
    %218 = vector.load %arg9[%c0_81, %c0_82] : memref<64x10xf32, #tpu.memory_space<vmem>>, vector<64x10xf32>
    tpu.vector_store %arg9[%c0_81, %c0_82], %217 {strides = array<i32>} : memref<64x10xf32, #tpu.memory_space<vmem>>, vector<64x10xf32>,
    return
  }
}

</mosaic_0001>

<llo_original>
// kernel: model1_forward.1
$region0: #{model1_forward.1}
  #allocation0 [shape = 'u32[]', space=smem, size = 0x4, offset = 0x4, fixed_abs, tag = 'smem constant byte address 0x4 - core index']
  #allocation1 [shape = 'u32[144,128]{1,0:T(1,128)}', space=vmem, size = 0x12000, scoped, tag = 'internal scratch']
  %s0 = inlined_call_operand.vmem [shape: bf16[64,144], index: 0, kind: input, shape index: {}]
  %s1 = inlined_call_operand.vmem [shape: bf16[144,32], index: 1, kind: input, shape index: {}]
  %s2 = inlined_call_operand.vmem [shape: bf16[5,32,32], index: 2, kind: input, shape index: {}]
  %s3 = inlined_call_operand.vmem [shape: bf16[32,2048], index: 3, kind: input, shape index: {}]
  %s4 = inlined_call_operand.vmem [shape: bf16[32,2048], index: 4, kind: input, shape index: {}]
  %s5 = inlined_call_operand.vmem [shape: f32[1,2048], index: 5, kind: input, shape index: {}]
  %s6 = inlined_call_operand.vmem [shape: bf16[32,10], index: 6, kind: input, shape index: {}]
  %s7 = inlined_call_operand.vmem [shape: bf16[64,64], index: 7, kind: input, shape index: {}]
  %s8 = inlined_call_operand.vmem [shape: f32[16,32], index: 8, kind: input, shape index: {}]
  %s9 = inlined_call_operand.vmem [shape: f32[64,10], index: 9, kind: output, shape index: {}]
  %s10 = sld [smem:[#allocation0]]
  $region46: #{model1_forward.1} parent=0
    _
  %s12 = ssub.s32 1, %s10
  %s13 = scalar_select 0, %s12, %s10
  // Predicated region
  $region2: #{model1_forward.1} parent=0 // pred_check
    _
  $region3: #{model1_forward.1} parent=0 // pred_check_branch
    %15 = sbr.rel (0) target = $region5
  $region4: #{model1_forward.1} parent=0 // pred_region
    _
  $region5: #{model1_forward.1} parent=0 // pred_fallthru
    _
  // Predicated region
  $region6: #{model1_forward.1} parent=0 // pred_check
    _
  $region7: #{model1_forward.1} parent=0 // pred_check_branch
    %17 = sbr.rel (0) target = $region9
  $region8: #{model1_forward.1} parent=0 // pred_region
    _
  $region9: #{model1_forward.1} parent=0 // pred_fallthru
    _
  // Predicated region
  $region10: #{model1_forward.1} parent=0 // pred_check
    _
  $region11: #{model1_forward.1} parent=0 // pred_check_branch
    %19 = sbr.rel (0) target = $region13
  $region12: #{model1_forward.1} parent=0 // pred_region
    _
  $region13: #{model1_forward.1} parent=0 // pred_fallthru
    _
  // Predicated region
  $region14: #{model1_forward.1} parent=0 // pred_check
    _
  $region15: #{model1_forward.1} parent=0 // pred_check_branch
    %21 = sbr.rel (0) target = $region17
  $region16: #{model1_forward.1} parent=0 // pred_region
    _
  $region17: #{model1_forward.1} parent=0 // pred_fallthru
    _
  // Predicated region
  $region18: #{model1_forward.1} parent=0 // pred_check
    _
  $region19: #{model1_forward.1} parent=0 // pred_check_branch
    %23 = sbr.rel (0) target = $region21
  $region20: #{model1_forward.1} parent=0 // pred_region
    _
  $region21: #{model1_forward.1} parent=0 // pred_fallthru
    _
  // Predicated region
  $region22: #{model1_forward.1} parent=0 // pred_check
    _
  $region23: #{model1_forward.1} parent=0 // pred_check_branch
    %25 = sbr.rel (0) target = $region25
  $region24: #{model1_forward.1} parent=0 // pred_region
    _
  $region25: #{model1_forward.1} parent=0 // pred_fallthru
    _
  // Predicated region
  $region26: #{model1_forward.1} parent=0 // pred_check
    _
  $region27: #{model1_forward.1} parent=0 // pred_check_branch
    %27 = sbr.rel (0) target = $region29
  $region28: #{model1_forward.1} parent=0 // pred_region
    _
  $region29: #{model1_forward.1} parent=0 // pred_fallthru
    _
  // Predicated region
  $region30: #{model1_forward.1} parent=0 // pred_check
    _
  $region31: #{model1_forward.1} parent=0 // pred_check_branch
    %29 = sbr.rel (0) target = $region33
  $region32: #{model1_forward.1} parent=0 // pred_region
    _
  $region33: #{model1_forward.1} parent=0 // pred_fallthru
    _
  // Predicated region
  $region34: #{model1_forward.1} parent=0 // pred_check
    _
  $region35: #{model1_forward.1} parent=0 // pred_check_branch
    %31 = sbr.rel (0) target = $region37
  $region36: #{model1_forward.1} parent=0 // pred_region
    _
  $region37: #{model1_forward.1} parent=0 // pred_fallthru
    _
  %v33 = vld [vmem:[%s8] sm:$0xff]
  %v34 = vld [vmem:[%s8 + $0x8] sm:$0xff]
  %v35 = vld [vmem:[%s0] sm:$0xff]
  %v36 = vld [vmem:[%s0 + $0x8] sm:$0xff]
  %v37 = vld [vmem:[%s0 + $0x10] sm:$0xff]
  %v38 = vld [vmem:[%s0 + $0x18] sm:$0xff]
  %v39 = vld [vmem:[%s0 + $0x20] sm:$0xff]
  %v40 = vld [vmem:[%s0 + $0x28] sm:$0xff]
  %v41 = vld [vmem:[%s0 + $0x30] sm:$0xff]
  %v42 = vld [vmem:[%s0 + $0x38] sm:$0xff]
  %v43 = vld [vmem:[%s1] sm:$0xf]
  %v44 = vld [vmem:[%s1 + $0x4] sm:$0xf]
  %v45 = vld [vmem:[%s1 + $0x8] sm:$0xf]
  %v46 = vld [vmem:[%s1 + $0xc] sm:$0xf]
  %v47 = vld [vmem:[%s1 + $0x10] sm:$0xf]
  %v48 = vld [vmem:[%s1 + $0x14] sm:$0xf]
  %v49 = vld [vmem:[%s1 + $0x18] sm:$0xf]
  %v50 = vld [vmem:[%s1 + $0x1c] sm:$0xf]
  %v51 = vld [vmem:[%s1 + $0x20] sm:$0xf]
  %v52 = vld [vmem:[%s1 + $0x24] sm:$0xf]
  %v53 = vld [vmem:[%s1 + $0x28] sm:$0xf]
  %v54 = vld [vmem:[%s1 + $0x2c] sm:$0xf]
  %v55 = vld [vmem:[%s1 + $0x30] sm:$0xf]
  %v56 = vld [vmem:[%s1 + $0x34] sm:$0xf]
  %v57 = vld [vmem:[%s1 + $0x38] sm:$0xf]
  %v58 = vld [vmem:[%s1 + $0x3c] sm:$0xf]
  %v59 = vld [vmem:[%s1 + $0x40] sm:$0xf]
  %v60 = vld [vmem:[%s1 + $0x44] sm:$0xf]
  %v61 = vlaneseq
  %v62 = vshrl.u32 %v61, 7
  %v63 = vsub.s32 4, %v62
  %v64 = vrot.slane %v33, %v63
  %v73 = vunpack.c.l.b16 %v35
  %v74 = vunpack.c.h.b16 %v35
  %v75 = vunpack.c.l.b16 %v36
  %v76 = vunpack.c.h.b16 %v36
  %v77 = vunpack.c.l.b16 %v37
  %v78 = vunpack.c.h.b16 %v37
  %v79 = vunpack.c.l.b16 %v38
  %v80 = vunpack.c.h.b16 %v38
  %v81 = vunpack.c.l.b16 %v39
  %v82 = vunpack.c.h.b16 %v39
  %v83 = vunpack.c.l.b16 %v40
  %v84 = vunpack.c.h.b16 %v40
  %v85 = vunpack.c.l.b16 %v41
  %v86 = vunpack.c.h.b16 %v41
  %v87 = vunpack.c.l.b16 %v42
  %v88 = vunpack.c.h.b16 %v42
  %v89 = vpack.c.b16 %v75, %v73
  %v90 = vpack.c.b16 %v76, %v74
  %v91 = vpack.c.b16 %v79, %v77
  %v92 = vpack.c.b16 %v80, %v78
  %v93 = vpack.c.b16 %v83, %v81
  %v94 = vpack.c.b16 %v84, %v82
  %v95 = vpack.c.b16 %v87, %v85
  %v96 = vpack.c.b16 %v88, %v86
  %v119 = vunpack.c.l.b16 %v43
  %v120 = vunpack.c.l.b16 %v44
  %v121 = vunpack.c.l.b16 %v45
  %v122 = vunpack.c.l.b16 %v46
  %v123 = vunpack.c.l.b16 %v47
  %v124 = vunpack.c.l.b16 %v48
  %v125 = vunpack.c.l.b16 %v49
  %v126 = vunpack.c.l.b16 %v50
  %v127 = vunpack.c.l.b16 %v51
  %v128 = vunpack.c.l.b16 %v52
  %v129 = vunpack.c.l.b16 %v53
  %v130 = vunpack.c.l.b16 %v54
  %v131 = vunpack.c.l.b16 %v55
  %v132 = vunpack.c.l.b16 %v56
  %v133 = vunpack.c.l.b16 %v57
  %v134 = vunpack.c.l.b16 %v58
  %v135 = vunpack.c.l.b16 %v59
  %v136 = vunpack.c.l.b16 %v60
  %v137 = vpack.c.b16 %v120, %v119
  %v138 = vpack.c.b16 %v122, %v121
  %v139 = vpack.c.b16 %v124, %v123
  %v140 = vpack.c.b16 %v126, %v125
  %v141 = vpack.c.b16 %v128, %v127
  %v142 = vpack.c.b16 %v130, %v129
  %v143 = vpack.c.b16 %v132, %v131
  %v144 = vpack.c.b16 %v134, %v133
  %v145 = vpack.c.b16 %v136, %v135
  %vm155 = vcmask 130048
  %v157 = vsel %vm155, %v90, 0
  %v160 = vsel %vm155, %v92, 0
  %v163 = vsel %vm155, %v94, 0
  %v166 = vsel %vm155, %v96, 0
  %168 = vmatprep.subr.bf16.mxu0 0
  %169 = vmatpush1.bf16.msra.mxu0 %v137
  %170 = vmatprep.subr.bf16.mxu0 0
  %171 = vmatpush1.bf16.msra.mxu0 %v138
  %172 = vmatprep.subr.bf16.mxu0 0
  %173 = vmatpush1.bf16.msra.mxu0 %v139
  %174 = vmatprep.subr.bf16.mxu0 0
  %175 = vmatpush1.bf16.msra.mxu0 %v140
  %176 = vmatprep.subr.bf16.mxu0 0
  %177 = vmatpush1.bf16.msra.mxu0 %v141
  %178 = vmatprep.subr.bf16.mxu0 0
  %179 = vmatpush1.bf16.msra.mxu0 %v142
  %180 = vmatprep.subr.bf16.mxu0 0
  %181 = vmatpush1.bf16.msra.mxu0 %v143
  %182 = vmatprep.subr.bf16.mxu0 0
  %183 = vmatpush1.bf16.msra.mxu0 %v144
  %184 = vmatprep.subr.bf16.mxu0 0
  %185 = vmatpush1.bf16.msra.mxu0 %v145
  %186 = vmatprep.subr.bf16.mxu0 0
  %187 = vmatpush1.bf16.msra.mxu0 0
  %188 = vmatprep.subr.bf16.mxu0 0
  %189 = vmatpush1.bf16.msra.mxu0 0
  %190 = vmatprep.subr.bf16.mxu0 0
  %191 = vmatpush1.bf16.msra.mxu0 0
  %192 = vmatprep.subr.bf16.mxu0 0
  %193 = vmatpush1.bf16.msra.mxu0 0
  %194 = vmatprep.subr.bf16.mxu0 0
  %195 = vmatpush1.bf16.msra.mxu0 0
  %196 = vmatprep.subr.bf16.mxu0 0
  %197 = vmatpush1.bf16.msra.mxu0 0
  %198 = vmatprep.subr.bf16.mxu0 0
  %199 = vmatpush1.bf16.msra.mxu0 0
  %200 = vmatprep.mubr.bf16.mxu0 %v157
  %201 = vmatmul.mubr.bf16.gmra.mrb[0].mxu0 %v89
  %v202 = vpop.f32.mrb[0].mxu0
  %v203 = vadd.f32 %v64, %v202
  %v204 = vpop.f32.mrb[0].mxu0
  %v205 = vpop.f32.mrb[0].mxu0
  %v206 = vadd.f32 %v64, %v205
  %v207 = vpop.f32.mrb[0].mxu0
  %208 = vmatprep.mubr.bf16.mxu0 %v160
  %209 = vmatmul.mubr.bf16.gmra.mrb[0].mxu0 %v91
  %v210 = vpop.f32.mrb[0].mxu0
  %v211 = vadd.f32 %v64, %v210
  %v212 = vpop.f32.mrb[0].mxu0
  %v213 = vpop.f32.mrb[0].mxu0
  %v214 = vadd.f32 %v64, %v213
  %v215 = vpop.f32.mrb[0].mxu0
  %216 = vmatprep.mubr.bf16.mxu0 %v163
  %217 = vmatmul.mubr.bf16.gmra.mrb[0].mxu0 %v93
  %v218 = vpop.f32.mrb[0].mxu0
  %v219 = vadd.f32 %v64, %v218
  %v220 = vpop.f32.mrb[0].mxu0
  %v221 = vpop.f32.mrb[0].mxu0
  %v222 = vadd.f32 %v64, %v221
  %v223 = vpop.f32.mrb[0].mxu0
  %224 = vmatprep.mubr.bf16.mxu0 %v166
  %225 = vmatmul.mubr.bf16.gmra.mrb[0].mxu0 %v95
  %v226 = vpop.f32.mrb[0].mxu0
  %v227 = vadd.f32 %v64, %v226
  %v228 = vpop.f32.mrb[0].mxu0
  %v229 = vpop.f32.mrb[0].mxu0
  %v230 = vadd.f32 %v64, %v229
  %v231 = vpop.f32.mrb[0].mxu0
  %232 = vdwg.mxu0
  %v233 = vpack.c.bf16 %v206, %v203
  %v234 = vpack.c.bf16 %v214, %v211
  %v235 = vpack.c.bf16 %v222, %v219
  %v236 = vpack.c.bf16 %v230, %v227
  %v237 = vld [vmem:[%s2] sm:$0xf]
  %v238 = vld [vmem:[%s2 + $0x4] sm:$0xf]
  %v239 = vld [vmem:[%s2 + $0x8] sm:$0xf]
  %v240 = vld [vmem:[%s2 + $0xc] sm:$0xf]
  %v241 = vlaneseq
  %v242 = vshrl.u32 %v241, 7
  %v243 = vsub.s32 5, %v242
  %v244 = vrot.slane %v33, %v243
  %v249 = vunpack.c.l.b16 %v237
  %v250 = vunpack.c.l.b16 %v238
  %v251 = vunpack.c.l.b16 %v239
  %v252 = vunpack.c.l.b16 %v240
  %v253 = vpack.c.b16 %v250, %v249
  %v254 = vpack.c.b16 %v252, %v251
  %vm257 = vcmask 261120
  %v259 = vsel %vm257, %v233, 0
  %v262 = vsel %vm257, %v234, 0
  %v265 = vsel %vm257, %v235, 0
  %v268 = vsel %vm257, %v236, 0
  %270 = vmatprep.subr.bf16.mxu0 0
  %271 = vmatpush1.bf16.msra.mxu0 %v253
  %272 = vmatprep.subr.bf16.mxu0 0
  %273 = vmatpush1.bf16.msra.mxu0 %v254
  %274 = vmatprep.subr.bf16.mxu0 0
  %275 = vmatpush1.bf16.msra.mxu0 0
  %276 = vmatprep.subr.bf16.mxu0 0
  %277 = vmatpush1.bf16.msra.mxu0 0
  %278 = vmatprep.subr.bf16.mxu0 0
  %279 = vmatpush1.bf16.msra.mxu0 0
  %280 = vmatprep.subr.bf16.mxu0 0
  %281 = vmatpush1.bf16.msra.mxu0 0
  %282 = vmatprep.subr.bf16.mxu0 0
  %283 = vmatpush1.bf16.msra.mxu0 0
  %284 = vmatprep.subr.bf16.mxu0 0
  %285 = vmatpush1.bf16.msra.mxu0 0
  %286 = vmatprep.subr.bf16.mxu0 0
  %287 = vmatpush1.bf16.msra.mxu0 0
  %288 = vmatprep.subr.bf16.mxu0 0
  %289 = vmatpush1.bf16.msra.mxu0 0
  %290 = vmatprep.subr.bf16.mxu0 0
  %291 = vmatpush1.bf16.msra.mxu0 0
  %292 = vmatprep.subr.bf16.mxu0 0
  %293 = vmatpush1.bf16.msra.mxu0 0
  %294 = vmatprep.subr.bf16.mxu0 0
  %295 = vmatpush1.bf16.msra.mxu0 0
  %296 = vmatprep.subr.bf16.mxu0 0
  %297 = vmatpush1.bf16.msra.mxu0 0
  %298 = vmatprep.subr.bf16.mxu0 0
  %299 = vmatpush1.bf16.msra.mxu0 0
  %300 = vmatprep.subr.bf16.mxu0 0
  %301 = vmatpush1.bf16.msra.mxu0 0
  %302 = vmatprep.mubr.bf16.mxu0 0
  %303 = vmatmul.mubr.bf16.gmra.mrb[0].mxu0 %v259
  %v304 = vpop.f32.mrb[0].mxu0
  %v305 = vadd.f32 %v244, %v304
  %v306 = vpop.f32.mrb[0].mxu0
  %v307 = vpop.f32.mrb[0].mxu0
  %v308 = vadd.f32 %v244, %v307
  %v309 = vpop.f32.mrb[0].mxu0
  %310 = vmatprep.mubr.bf16.mxu0 0
  %311 = vmatmul.mubr.bf16.gmra.mrb[0].mxu0 %v262
  %v312 = vpop.f32.mrb[0].mxu0
  %v313 = vadd.f32 %v244, %v312
  %v314 = vpop.f32.mrb[0].mxu0
  %v315 = vpop.f32.mrb[0].mxu0
  %v316 = vadd.f32 %v244, %v315
  %v317 = vpop.f32.mrb[0].mxu0
  %318 = vmatprep.mubr.bf16.mxu0 0
  %319 = vmatmul.mubr.bf16.gmra.mrb[0].mxu0 %v265
  %v320 = vpop.f32.mrb[0].mxu0
  %v321 = vadd.f32 %v244, %v320
  %v322 = vpop.f32.mrb[0].mxu0
  %v323 = vpop.f32.mrb[0].mxu0
  %v324 = vadd.f32 %v244, %v323
  %v325 = vpop.f32.mrb[0].mxu0
  %326 = vmatprep.mubr.bf16.mxu0 0
  %327 = vmatmul.mubr.bf16.gmra.mrb[0].mxu0 %v268
  %v328 = vpop.f32.mrb[0].mxu0
  %v329 = vadd.f32 %v244, %v328
  %v330 = vpop.f32.mrb[0].mxu0
  %v331 = vpop.f32.mrb[0].mxu0
  %v332 = vadd.f32 %v244, %v331
  %v333 = vpop.f32.mrb[0].mxu0
  %334 = vdwg.mxu0
  %s335 = scalar_lea.vmem %s2, 16
  %v336 = vld [vmem:[%s335] sm:$0xf]
  %v337 = vld [vmem:[%s335 + $0x4] sm:$0xf]
  %v338 = vld [vmem:[%s335 + $0x8] sm:$0xf]
  %v339 = vld [vmem:[%s335 + $0xc] sm:$0xf]
  %v340 = vlaneseq
  %v341 = vshrl.u32 %v340, 7
  %v342 = vsub.s32 6, %v341
  %v343 = vrot.slane %v33, %v342
  %v348 = vunpack.c.l.b16 %v336
  %v349 = vunpack.c.l.b16 %v337
  %v350 = vunpack.c.l.b16 %v338
  %v351 = vunpack.c.l.b16 %v339
  %v352 = vpack.c.b16 %v349, %v348
  %v353 = vpack.c.b16 %v351, %v350
  %356 = vmatprep.subr.bf16.mxu0 0
  %357 = vmatpush1.bf16.msra.mxu0 %v352
  %358 = vmatprep.subr.bf16.mxu0 0
  %359 = vmatpush1.bf16.msra.mxu0 %v353
  %360 = vmatprep.subr.bf16.mxu0 0
  %361 = vmatpush1.bf16.msra.mxu0 0
  %362 = vmatprep.subr.bf16.mxu0 0
  %363 = vmatpush1.bf16.msra.mxu0 0
  %364 = vmatprep.subr.bf16.mxu0 0
  %365 = vmatpush1.bf16.msra.mxu0 0
  %366 = vmatprep.subr.bf16.mxu0 0
  %367 = vmatpush1.bf16.msra.mxu0 0
  %368 = vmatprep.subr.bf16.mxu0 0
  %369 = vmatpush1.bf16.msra.mxu0 0
  %370 = vmatprep.subr.bf16.mxu0 0
  %371 = vmatpush1.bf16.msra.mxu0 0
  %372 = vmatprep.subr.bf16.mxu0 0
  %373 = vmatpush1.bf16.msra.mxu0 0
  %374 = vmatprep.subr.bf16.mxu0 0
  %375 = vmatpush1.bf16.msra.mxu0 0
  %376 = vmatprep.subr.bf16.mxu0 0
  %377 = vmatpush1.bf16.msra.mxu0 0
  %378 = vmatprep.subr.bf16.mxu0 0
  %379 = vmatpush1.bf16.msra.mxu0 0
  %380 = vmatprep.subr.bf16.mxu0 0
  %381 = vmatpush1.bf16.msra.mxu0 0
  %382 = vmatprep.subr.bf16.mxu0 0
  %383 = vmatpush1.bf16.msra.mxu0 0
  %384 = vmatprep.subr.bf16.mxu0 0
  %385 = vmatpush1.bf16.msra.mxu0 0
  %386 = vmatprep.subr.bf16.mxu0 0
  %387 = vmatpush1.bf16.msra.mxu0 0
  %388 = vmatprep.mubr.bf16.mxu0 0
  %389 = vmatmul.mubr.bf16.gmra.mrb[0].mxu0 %v259
  %v390 = vpop.f32.mrb[0].mxu0
  %v391 = vadd.f32 %v343, %v390
  %v392 = vpop.f32.mrb[0].mxu0
  %v393 = vpop.f32.mrb[0].mxu0
  %v394 = vadd.f32 %v343, %v393
  %v395 = vpop.f32.mrb[0].mxu0
  %396 = vmatprep.mubr.bf16.mxu0 0
  %397 = vmatmul.mubr.bf16.gmra.mrb[0].mxu0 %v262
  %v398 = vpop.f32.mrb[0].mxu0
  %v399 = vadd.f32 %v343, %v398
  %v400 = vpop.f32.mrb[0].mxu0
  %v401 = vpop.f32.mrb[0].mxu0
  %v402 = vadd.f32 %v343, %v401
  %v403 = vpop.f32.mrb[0].mxu0
  %404 = vmatprep.mubr.bf16.mxu0 0
  %405 = vmatmul.mubr.bf16.gmra.mrb[0].mxu0 %v265
  %v406 = vpop.f32.mrb[0].mxu0
  %v407 = vadd.f32 %v343, %v406
  %v408 = vpop.f32.mrb[0].mxu0
  %v409 = vpop.f32.mrb[0].mxu0
  %v410 = vadd.f32 %v343, %v409
  %v411 = vpop.f32.mrb[0].mxu0
  %412 = vmatprep.mubr.bf16.mxu0 0
  %413 = vmatmul.mubr.bf16.gmra.mrb[0].mxu0 %v268
  %v414 = vpop.f32.mrb[0].mxu0
  %v415 = vadd.f32 %v343, %v414
  %v416 = vpop.f32.mrb[0].mxu0
  %v417 = vpop.f32.mrb[0].mxu0
  %v418 = vadd.f32 %v343, %v417
  %v419 = vpop.f32.mrb[0].mxu0
  %420 = vdwg.mxu0
  %s421 = scalar_lea.vmem %s2, 32
  %v422 = vld [vmem:[%s421] sm:$0xf]
  %v423 = vld [vmem:[%s421 + $0x4] sm:$0xf]
  %v424 = vld [vmem:[%s421 + $0x8] sm:$0xf]
  %v425 = vld [vmem:[%s421 + $0xc] sm:$0xf]
  %v426 = vlaneseq
  %v427 = vshrl.u32 %v426, 7
  %v428 = vsub.s32 7, %v427
  %v429 = vrot.slane %v33, %v428
  %v434 = vunpack.c.l.b16 %v422
  %v435 = vunpack.c.l.b16 %v423
  %v436 = vunpack.c.l.b16 %v424
  %v437 = vunpack.c.l.b16 %v425
  %v438 = vpack.c.b16 %v435, %v434
  %v439 = vpack.c.b16 %v437, %v436
  %442 = vmatprep.subr.bf16.mxu0 0
  %443 = vmatpush1.bf16.msra.mxu0 %v438
  %444 = vmatprep.subr.bf16.mxu0 0
  %445 = vmatpush1.bf16.msra.mxu0 %v439
  %446 = vmatprep.subr.bf16.mxu0 0
  %447 = vmatpush1.bf16.msra.mxu0 0
  %448 = vmatprep.subr.bf16.mxu0 0
  %449 = vmatpush1.bf16.msra.mxu0 0
  %450 = vmatprep.subr.bf16.mxu0 0
  %451 = vmatpush1.bf16.msra.mxu0 0
  %452 = vmatprep.subr.bf16.mxu0 0
  %453 = vmatpush1.bf16.msra.mxu0 0
  %454 = vmatprep.subr.bf16.mxu0 0
  %455 = vmatpush1.bf16.msra.mxu0 0
  %456 = vmatprep.subr.bf16.mxu0 0
  %457 = vmatpush1.bf16.msra.mxu0 0
  %458 = vmatprep.subr.bf16.mxu0 0
  %459 = vmatpush1.bf16.msra.mxu0 0
  %460 = vmatprep.subr.bf16.mxu0 0
  %461 = vmatpush1.bf16.msra.mxu0 0
  %462 = vmatprep.subr.bf16.mxu0 0
  %463 = vmatpush1.bf16.msra.mxu0 0
  %464 = vmatprep.subr.bf16.mxu0 0
  %465 = vmatpush1.bf16.msra.mxu0 0
  %466 = vmatprep.subr.bf16.mxu0 0
  %467 = vmatpush1.bf16.msra.mxu0 0
  %468 = vmatprep.subr.bf16.mxu0 0
  %469 = vmatpush1.bf16.msra.mxu0 0
  %470 = vmatprep.subr.bf16.mxu0 0
  %471 = vmatpush1.bf16.msra.mxu0 0
  %472 = vmatprep.subr.bf16.mxu0 0
  %473 = vmatpush1.bf16.msra.mxu0 0
  %474 = vmatprep.mubr.bf16.mxu0 0
  %475 = vmatmul.mubr.bf16.gmra.mrb[0].mxu0 %v259
  %v476 = vpop.f32.mrb[0].mxu0
  %v477 = vadd.f32 %v429, %v476
  %v478 = vpop.f32.mrb[0].mxu0
  %v479 = vpop.f32.mrb[0].mxu0
  %v480 = vadd.f32 %v429, %v479
  %v481 = vpop.f32.mrb[0].mxu0
  %482 = vmatprep.mubr.bf16.mxu0 0
  %483 = vmatmul.mubr.bf16.gmra.mrb[0].mxu0 %v262
  %v484 = vpop.f32.mrb[0].mxu0
  %v485 = vadd.f32 %v429, %v484
  %v486 = vpop.f32.mrb[0].mxu0
  %v487 = vpop.f32.mrb[0].mxu0
  %v488 = vadd.f32 %v429, %v487
  %v489 = vpop.f32.mrb[0].mxu0
  %490 = vmatprep.mubr.bf16.mxu0 0
  %491 = vmatmul.mubr.bf16.gmra.mrb[0].mxu0 %v265
  %v492 = vpop.f32.mrb[0].mxu0
  %v493 = vadd.f32 %v429, %v492
  %v494 = vpop.f32.mrb[0].mxu0
  %v495 = vpop.f32.mrb[0].mxu0
  %v496 = vadd.f32 %v429, %v495
  %v497 = vpop.f32.mrb[0].mxu0
  %498 = vmatprep.mubr.bf16.mxu0 0
  %499 = vmatmul.mubr.bf16.gmra.mrb[0].mxu0 %v268
  %v500 = vpop.f32.mrb[0].mxu0
  %v501 = vadd.f32 %v429, %v500
  %v502 = vpop.f32.mrb[0].mxu0
  %v503 = vpop.f32.mrb[0].mxu0
  %v504 = vadd.f32 %v429, %v503
  %v505 = vpop.f32.mrb[0].mxu0
  %506 = vdwg.mxu0
  %v507 = vmul.f32 %v305, 0.35355338
  %v508 = vmul.f32 %v308, 0.35355338
  %v509 = vmul.f32 %v313, 0.35355338
  %v510 = vmul.f32 %v316, 0.35355338
  %v511 = vmul.f32 %v321, 0.35355338
  %v512 = vmul.f32 %v324, 0.35355338
  %v513 = vmul.f32 %v329, 0.35355338
  %v514 = vmul.f32 %v332, 0.35355338
  %v515 = vmul.f32 %v507, %v391
  %v516 = vmul.f32 %v508, %v394
  %v517 = vmul.f32 %v509, %v399
  %v518 = vmul.f32 %v510, %v402
  %v519 = vmul.f32 %v507, %v407
  %v520 = vmul.f32 %v508, %v410
  %v521 = vmul.f32 %v509, %v415
  %v522 = vmul.f32 %v510, %v418
  %v523 = vmul.f32 %v511, %v391
  %v524 = vmul.f32 %v512, %v394
  %v525 = vmul.f32 %v513, %v399
  %v526 = vmul.f32 %v514, %v402
  %v527 = vmul.f32 %v511, %v407
  %v528 = vmul.f32 %v512, %v410
  %v529 = vmul.f32 %v513, %v415
  %v530 = vmul.f32 %v514, %v418
  %v532 = vsel %vm257, %v515, 0
  %v535 = vsel %vm257, %v516, 0
  %v538 = vsel %vm257, %v517, 0
  %v541 = vsel %vm257, %v518, 0
  %v544 = vsel %vm257, %v519, 0
  %v547 = vsel %vm257, %v520, 0
  %v550 = vsel %vm257, %v521, 0
  %v553 = vsel %vm257, %v522, 0
  %v556 = vsel %vm257, %v523, 0
  %v559 = vsel %vm257, %v524, 0
  %v562 = vsel %vm257, %v525, 0
  %v565 = vsel %vm257, %v526, 0
  %v568 = vsel %vm257, %v527, 0
  %v571 = vsel %vm257, %v528, 0
  %v574 = vsel %vm257, %v529, 0
  %v577 = vsel %vm257, %v530, 0
  %v580 = vsel %vm257, %v33, 0
  %582 = vmatprep.subr.mxu0 0.0
  %583 = vmatpush1.xpose.msra.mxu0 %v580
  %584 = vmatprep.subr.mxu0 0.0
  %585 = vmatpush1.xpose.msra.mxu0 0.0
  %586 = vmatprep.subr.mxu0 0.0
  %587 = vmatpush1.xpose.msra.mxu0 0.0
  %588 = vmatprep.subr.mxu0 0.0
  %589 = vmatpush1.xpose.msra.mxu0 0.0
  %590 = vmatprep.subr.mxu0 0.0
  %591 = vmatpush1.xpose.msra.mxu0 0.0
  %592 = vmatprep.subr.mxu0 0.0
  %593 = vmatpush1.xpose.msra.mxu0 0.0
  %594 = vmatprep.subr.mxu0 0.0
  %595 = vmatpush1.xpose.msra.mxu0 0.0
  %596 = vmatprep.subr.mxu0 0.0
  %597 = vmatpush1.xpose.msra.mxu0 0.0
  %598 = vmatprep.subr.mxu0 0.0
  %599 = vmatpush1.xpose.msra.mxu0 0.0
  %600 = vmatprep.subr.mxu0 0.0
  %601 = vmatpush1.xpose.msra.mxu0 0.0
  %602 = vmatprep.subr.mxu0 0.0
  %603 = vmatpush1.xpose.msra.mxu0 0.0
  %604 = vmatprep.subr.mxu0 0.0
  %605 = vmatpush1.xpose.msra.mxu0 0.0
  %606 = vmatprep.subr.mxu0 0.0
  %607 = vmatpush1.xpose.msra.mxu0 0.0
  %608 = vmatprep.subr.mxu0 0.0
  %609 = vmatpush1.xpose.msra.mxu0 0.0
  %610 = vmatprep.subr.mxu0 0.0
  %611 = vmatpush1.xpose.msra.mxu0 0.0
  %612 = vmatprep.subr.mxu0 0.0
  %613 = vmatpush1.xpose.msra.mxu0 0.0
  %614 = vmatprep.subr.mxu0 0.0
  %615 = vmatpush1.xpose.msra.mxu0 0.0
  %616 = vmatprep.subr.mxu0 0.0
  %617 = vmatpush1.xpose.msra.mxu0 0.0
  %618 = vmatprep.subr.mxu0 0.0
  %619 = vmatpush1.xpose.msra.mxu0 0.0
  %620 = vmatprep.subr.mxu0 0.0
  %621 = vmatpush1.xpose.msra.mxu0 0.0
  %622 = vmatprep.subr.mxu0 0.0
  %623 = vmatpush1.xpose.msra.mxu0 0.0
  %624 = vmatprep.subr.mxu0 0.0
  %625 = vmatpush1.xpose.msra.mxu0 0.0
  %626 = vmatprep.subr.mxu0 0.0
  %627 = vmatpush1.xpose.msra.mxu0 0.0
  %628 = vmatprep.subr.mxu0 0.0
  %629 = vmatpush1.xpose.msra.mxu0 0.0
  %630 = vmatprep.subr.mxu0 0.0
  %631 = vmatpush1.xpose.msra.mxu0 0.0
  %632 = vmatprep.subr.mxu0 0.0
  %633 = vmatpush1.xpose.msra.mxu0 0.0
  %634 = vmatprep.subr.mxu0 0.0
  %635 = vmatpush1.xpose.msra.mxu0 0.0
  %636 = vmatprep.subr.mxu0 0.0
  %637 = vmatpush1.xpose.msra.mxu0 0.0
  %638 = vmatprep.subr.mxu0 0.0
  %639 = vmatpush1.xpose.msra.mxu0 0.0
  %640 = vmatprep.subr.mxu0 0.0
  %641 = vmatpush1.xpose.msra.mxu0 0.0
  %642 = vmatprep.subr.mxu0 0.0
  %643 = vmatpush1.xpose.msra.mxu0 0.0
  %644 = vmatprep.subr.mxu0 0.0
  %645 = vmatpush1.xpose.msra.mxu0 0.0
  %646 = vmatprep.mubr.f32.mxu0 0.0
  %647 = vmatmul.mubr.f32.gmra.mrb[0].mxu0 %v532
  %v648 = vpop.f32.mrb[0].mxu0
  %v649 = vadd.f32 0.0, %v648
  %v650 = vpop.f32.mrb[0].mxu0
  %651 = vmatprep.mubr.f32.mxu0 0.0
  %652 = vmatmul.mubr.f32.gmra.mrb[0].mxu0 %v535
  %v653 = vpop.f32.mrb[0].mxu0
  %v654 = vadd.f32 0.0, %v653
  %v655 = vpop.f32.mrb[0].mxu0
  %656 = vmatprep.mubr.f32.mxu0 0.0
  %657 = vmatmul.mubr.f32.gmra.mrb[0].mxu0 %v538
  %v658 = vpop.f32.mrb[0].mxu0
  %v659 = vadd.f32 0.0, %v658
  %v660 = vpop.f32.mrb[0].mxu0
  %661 = vmatprep.mubr.f32.mxu0 0.0
  %662 = vmatmul.mubr.f32.gmra.mrb[0].mxu0 %v541
  %v663 = vpop.f32.mrb[0].mxu0
  %v664 = vadd.f32 0.0, %v663
  %v665 = vpop.f32.mrb[0].mxu0
  %666 = vmatprep.mubr.f32.mxu0 0.0
  %667 = vmatmul.mubr.f32.gmra.mrb[0].mxu0 %v544
  %v668 = vpop.f32.mrb[0].mxu0
  %v669 = vadd.f32 0.0, %v668
  %v670 = vpop.f32.mrb[0].mxu0
  %671 = vmatprep.mubr.f32.mxu0 0.0
  %672 = vmatmul.mubr.f32.gmra.mrb[0].mxu0 %v547
  %v673 = vpop.f32.mrb[0].mxu0
  %v674 = vadd.f32 0.0, %v673
  %v675 = vpop.f32.mrb[0].mxu0
  %676 = vmatprep.mubr.f32.mxu0 0.0
  %677 = vmatmul.mubr.f32.gmra.mrb[0].mxu0 %v550
  %v678 = vpop.f32.mrb[0].mxu0
  %v679 = vadd.f32 0.0, %v678
  %v680 = vpop.f32.mrb[0].mxu0
  %681 = vmatprep.mubr.f32.mxu0 0.0
  %682 = vmatmul.mubr.f32.gmra.mrb[0].mxu0 %v553
  %v683 = vpop.f32.mrb[0].mxu0
  %v684 = vadd.f32 0.0, %v683
  %v685 = vpop.f32.mrb[0].mxu0
  %686 = vmatprep.mubr.f32.mxu0 0.0
  %687 = vmatmul.mubr.f32.gmra.mrb[0].mxu0 %v556
  %v688 = vpop.f32.mrb[0].mxu0
  %v689 = vadd.f32 0.0, %v688
  %v690 = vpop.f32.mrb[0].mxu0
  %691 = vmatprep.mubr.f32.mxu0 0.0
  %692 = vmatmul.mubr.f32.gmra.mrb[0].mxu0 %v559
  %v693 = vpop.f32.mrb[0].mxu0
  %v694 = vadd.f32 0.0, %v693
  %v695 = vpop.f32.mrb[0].mxu0
  %696 = vmatprep.mubr.f32.mxu0 0.0
  %697 = vmatmul.mubr.f32.gmra.mrb[0].mxu0 %v562
  %v698 = vpop.f32.mrb[0].mxu0
  %v699 = vadd.f32 0.0, %v698
  %v700 = vpop.f32.mrb[0].mxu0
  %701 = vmatprep.mubr.f32.mxu0 0.0
  %702 = vmatmul.mubr.f32.gmra.mrb[0].mxu0 %v565
  %v703 = vpop.f32.mrb[0].mxu0
  %v704 = vadd.f32 0.0, %v703
  %v705 = vpop.f32.mrb[0].mxu0
  %706 = vmatprep.mubr.f32.mxu0 0.0
  %707 = vmatmul.mubr.f32.gmra.mrb[0].mxu0 %v568
  %v708 = vpop.f32.mrb[0].mxu0
  %v709 = vadd.f32 0.0, %v708
  %v710 = vpop.f32.mrb[0].mxu0
  %711 = vmatprep.mubr.f32.mxu0 0.0
  %712 = vmatmul.mubr.f32.gmra.mrb[0].mxu0 %v571
  %v713 = vpop.f32.mrb[0].mxu0
  %v714 = vadd.f32 0.0, %v713
  %v715 = vpop.f32.mrb[0].mxu0
  %716 = vmatprep.mubr.f32.mxu0 0.0
  %717 = vmatmul.mubr.f32.gmra.mrb[0].mxu0 %v574
  %v718 = vpop.f32.mrb[0].mxu0
  %v719 = vadd.f32 0.0, %v718
  %v720 = vpop.f32.mrb[0].mxu0
  %721 = vmatprep.mubr.f32.mxu0 0.0
  %722 = vmatmul.mubr.f32.gmra.mrb[0].mxu0 %v577
  %v723 = vpop.f32.mrb[0].mxu0
  %v724 = vadd.f32 0.0, %v723
  %v725 = vpop.f32.mrb[0].mxu0
  %726 = vdwg.mxu0
  %v727 = vmax.f32 %v649, %v669
  %v728 = vmax.f32 %v654, %v674
  %v729 = vmax.f32 %v659, %v679
  %v730 = vmax.f32 %v664, %v684
  %v731 = vsub.f32 %v649, %v727
  %v732 = vsub.f32 %v654, %v728
  %v733 = vsub.f32 %v659, %v729
  %v734 = vsub.f32 %v664, %v730
  %v735 = vmul.f32 %v731, 1.442695
  %v736 = vpow.pop %v735
  %v737 = vmul.f32 %v732, 1.442695
  %v738 = vpow.pop %v737
  %v739 = vmul.f32 %v733, 1.442695
  %v740 = vpow.pop %v739
  %v741 = vmul.f32 %v734, 1.442695
  %v742 = vpow.pop %v741
  %v743 = vsub.f32 %v669, %v727
  %v744 = vsub.f32 %v674, %v728
  %v745 = vsub.f32 %v679, %v729
  %v746 = vsub.f32 %v684, %v730
  %v747 = vmul.f32 %v743, 1.442695
  %v748 = vpow.pop %v747
  %v749 = vmul.f32 %v744, 1.442695
  %v750 = vpow.pop %v749
  %v751 = vmul.f32 %v745, 1.442695
  %v752 = vpow.pop %v751
  %v753 = vmul.f32 %v746, 1.442695
  %v754 = vpow.pop %v753
  %v755 = vadd.f32 %v736, %v748
  %v756 = vadd.f32 %v738, %v750
  %v757 = vadd.f32 %v740, %v752
  %v758 = vadd.f32 %v742, %v754
  %v759 = vrcp.pop %v755
  %v760 = vmul.f32 1.0, %v759
  %v761 = vrcp.pop %v756
  %v762 = vmul.f32 1.0, %v761
  %v763 = vrcp.pop %v757
  %v764 = vmul.f32 1.0, %v763
  %v765 = vrcp.pop %v758
  %v766 = vmul.f32 1.0, %v765
  %v767 = vmul.f32 %v736, %v760
  %v768 = vmul.f32 %v738, %v762
  %v769 = vmul.f32 %v740, %v764
  %v770 = vmul.f32 %v742, %v766
  %v771 = vmul.f32 %v748, %v760
  %v772 = vmul.f32 %v750, %v762
  %v773 = vmul.f32 %v752, %v764
  %v774 = vmul.f32 %v754, %v766
  %v775 = vmax.f32 %v689, %v709
  %v776 = vmax.f32 %v694, %v714
  %v777 = vmax.f32 %v699, %v719
  %v778 = vmax.f32 %v704, %v724
  %v779 = vsub.f32 %v689, %v775
  %v780 = vsub.f32 %v694, %v776
  %v781 = vsub.f32 %v699, %v777
  %v782 = vsub.f32 %v704, %v778
  %v783 = vmul.f32 %v779, 1.442695
  %v784 = vpow.pop %v783
  %v785 = vmul.f32 %v780, 1.442695
  %v786 = vpow.pop %v785
  %v787 = vmul.f32 %v781, 1.442695
  %v788 = vpow.pop %v787
  %v789 = vmul.f32 %v782, 1.442695
  %v790 = vpow.pop %v789
  %v791 = vsub.f32 %v709, %v775
  %v792 = vsub.f32 %v714, %v776
  %v793 = vsub.f32 %v719, %v777
  %v794 = vsub.f32 %v724, %v778
  %v795 = vmul.f32 %v791, 1.442695
  %v796 = vpow.pop %v795
  %v797 = vmul.f32 %v792, 1.442695
  %v798 = vpow.pop %v797
  %v799 = vmul.f32 %v793, 1.442695
  %v800 = vpow.pop %v799
  %v801 = vmul.f32 %v794, 1.442695
  %v802 = vpow.pop %v801
  %v803 = vadd.f32 %v784, %v796
  %v804 = vadd.f32 %v786, %v798
  %v805 = vadd.f32 %v788, %v800
  %v806 = vadd.f32 %v790, %v802
  %v807 = vrcp.pop %v803
  %v808 = vmul.f32 1.0, %v807
  %v809 = vrcp.pop %v804
  %v810 = vmul.f32 1.0, %v809
  %v811 = vrcp.pop %v805
  %v812 = vmul.f32 1.0, %v811
  %v813 = vrcp.pop %v806
  %v814 = vmul.f32 1.0, %v813
  %v815 = vmul.f32 %v784, %v808
  %v816 = vmul.f32 %v786, %v810
  %v817 = vmul.f32 %v788, %v812
  %v818 = vmul.f32 %v790, %v814
  %v819 = vmul.f32 %v796, %v808
  %v820 = vmul.f32 %v798, %v810
  %v821 = vmul.f32 %v800, %v812
  %v822 = vmul.f32 %v802, %v814
  %vm823 = vcmask 31744
  %v825 = vsel %vm823, %v767, 0
  %v828 = vsel %vm823, %v768, 0
  %v831 = vsel %vm823, %v769, 0
  %v834 = vsel %vm823, %v770, 0
  %v837 = vsel %vm823, %v771, 0
  %v840 = vsel %vm823, %v772, 0
  %v843 = vsel %vm823, %v773, 0
  %v846 = vsel %vm823, %v774, 0
  %v849 = vsel %vm823, %v815, 0
  %v852 = vsel %vm823, %v816, 0
  %v855 = vsel %vm823, %v817, 0
  %v858 = vsel %vm823, %v818, 0
  %v861 = vsel %vm823, %v819, 0
  %v864 = vsel %vm823, %v820, 0
  %v867 = vsel %vm823, %v821, 0
  %v870 = vsel %vm823, %v822, 0
  %vm872 = vcmask 1043456
  %v873 = vsel %vm872, %v33, 0
  %875 = vmatprep.subr.mxu0 0.0
  %876 = vmatpush1.msra.mxu0 %v873
  %877 = vmatprep.subr.mxu0 0.0
  %878 = vmatpush1.msra.mxu0 0.0
  %879 = vmatprep.subr.mxu0 0.0
  %880 = vmatpush1.msra.mxu0 0.0
  %881 = vmatprep.subr.mxu0 0.0
  %882 = vmatpush1.msra.mxu0 0.0
  %883 = vmatprep.subr.mxu0 0.0
  %884 = vmatpush1.msra.mxu0 0.0
  %885 = vmatprep.subr.mxu0 0.0
  %886 = vmatpush1.msra.mxu0 0.0
  %887 = vmatprep.subr.mxu0 0.0
  %888 = vmatpush1.msra.mxu0 0.0
  %889 = vmatprep.subr.mxu0 0.0
  %890 = vmatpush1.msra.mxu0 0.0
  %891 = vmatprep.subr.mxu0 0.0
  %892 = vmatpush1.msra.mxu0 0.0
  %893 = vmatprep.subr.mxu0 0.0
  %894 = vmatpush1.msra.mxu0 0.0
  %895 = vmatprep.subr.mxu0 0.0
  %896 = vmatpush1.msra.mxu0 0.0
  %897 = vmatprep.subr.mxu0 0.0
  %898 = vmatpush1.msra.mxu0 0.0
  %899 = vmatprep.subr.mxu0 0.0
  %900 = vmatpush1.msra.mxu0 0.0
  %901 = vmatprep.subr.mxu0 0.0
  %902 = vmatpush1.msra.mxu0 0.0
  %903 = vmatprep.subr.mxu0 0.0
  %904 = vmatpush1.msra.mxu0 0.0
  %905 = vmatprep.subr.mxu0 0.0
  %906 = vmatpush1.msra.mxu0 0.0
  %907 = vmatprep.subr.mxu0 0.0
  %908 = vmatpush1.msra.mxu0 0.0
  %909 = vmatprep.subr.mxu0 0.0
  %910 = vmatpush1.msra.mxu0 0.0
  %911 = vmatprep.subr.mxu0 0.0
  %912 = vmatpush1.msra.mxu0 0.0
  %913 = vmatprep.subr.mxu0 0.0
  %914 = vmatpush1.msra.mxu0 0.0
  %915 = vmatprep.subr.mxu0 0.0
  %916 = vmatpush1.msra.mxu0 0.0
  %917 = vmatprep.subr.mxu0 0.0
  %918 = vmatpush1.msra.mxu0 0.0
  %919 = vmatprep.subr.mxu0 0.0
  %920 = vmatpush1.msra.mxu0 0.0
  %921 = vmatprep.subr.mxu0 0.0
  %922 = vmatpush1.msra.mxu0 0.0
  %923 = vmatprep.subr.mxu0 0.0
  %924 = vmatpush1.msra.mxu0 0.0
  %925 = vmatprep.subr.mxu0 0.0
  %926 = vmatpush1.msra.mxu0 0.0
  %927 = vmatprep.subr.mxu0 0.0
  %928 = vmatpush1.msra.mxu0 0.0
  %929 = vmatprep.subr.mxu0 0.0
  %930 = vmatpush1.msra.mxu0 0.0
  %931 = vmatprep.subr.mxu0 0.0
  %932 = vmatpush1.msra.mxu0 0.0
  %933 = vmatprep.subr.mxu0 0.0
  %934 = vmatpush1.msra.mxu0 0.0
  %935 = vmatprep.subr.mxu0 0.0
  %936 = vmatpush1.msra.mxu0 0.0
  %937 = vmatprep.subr.mxu0 0.0
  %938 = vmatpush1.msra.mxu0 0.0
  %939 = vmatprep.mubr.f32.mxu0 0.0
  %940 = vmatmul.mubr.f32.gmra.mrb[0].mxu0 %v825
  %v941 = vpop.f32.mrb[0].mxu0
  %v942 = vadd.f32 0.0, %v941
  %v943 = vpop.f32.mrb[0].mxu0
  %944 = vmatprep.mubr.f32.mxu0 0.0
  %945 = vmatmul.mubr.f32.gmra.mrb[0].mxu0 %v828
  %v946 = vpop.f32.mrb[0].mxu0
  %v947 = vadd.f32 0.0, %v946
  %v948 = vpop.f32.mrb[0].mxu0
  %949 = vmatprep.mubr.f32.mxu0 0.0
  %950 = vmatmul.mubr.f32.gmra.mrb[0].mxu0 %v831
  %v951 = vpop.f32.mrb[0].mxu0
  %v952 = vadd.f32 0.0, %v951
  %v953 = vpop.f32.mrb[0].mxu0
  %954 = vmatprep.mubr.f32.mxu0 0.0
  %955 = vmatmul.mubr.f32.gmra.mrb[0].mxu0 %v834
  %v956 = vpop.f32.mrb[0].mxu0
  %v957 = vadd.f32 0.0, %v956
  %v958 = vpop.f32.mrb[0].mxu0
  %959 = vmatprep.mubr.f32.mxu0 0.0
  %960 = vmatmul.mubr.f32.gmra.mrb[0].mxu0 %v837
  %v961 = vpop.f32.mrb[0].mxu0
  %v962 = vadd.f32 0.0, %v961
  %v963 = vpop.f32.mrb[0].mxu0
  %964 = vmatprep.mubr.f32.mxu0 0.0
  %965 = vmatmul.mubr.f32.gmra.mrb[0].mxu0 %v840
  %v966 = vpop.f32.mrb[0].mxu0
  %v967 = vadd.f32 0.0, %v966
  %v968 = vpop.f32.mrb[0].mxu0
  %969 = vmatprep.mubr.f32.mxu0 0.0
  %970 = vmatmul.mubr.f32.gmra.mrb[0].mxu0 %v843
  %v971 = vpop.f32.mrb[0].mxu0
  %v972 = vadd.f32 0.0, %v971
  %v973 = vpop.f32.mrb[0].mxu0
  %974 = vmatprep.mubr.f32.mxu0 0.0
  %975 = vmatmul.mubr.f32.gmra.mrb[0].mxu0 %v846
  %v976 = vpop.f32.mrb[0].mxu0
  %v977 = vadd.f32 0.0, %v976
  %v978 = vpop.f32.mrb[0].mxu0
  %979 = vmatprep.mubr.f32.mxu0 0.0
  %980 = vmatmul.mubr.f32.gmra.mrb[0].mxu0 %v849
  %v981 = vpop.f32.mrb[0].mxu0
  %v982 = vadd.f32 0.0, %v981
  %v983 = vpop.f32.mrb[0].mxu0
  %984 = vmatprep.mubr.f32.mxu0 0.0
  %985 = vmatmul.mubr.f32.gmra.mrb[0].mxu0 %v852
  %v986 = vpop.f32.mrb[0].mxu0
  %v987 = vadd.f32 0.0, %v986
  %v988 = vpop.f32.mrb[0].mxu0
  %989 = vmatprep.mubr.f32.mxu0 0.0
  %990 = vmatmul.mubr.f32.gmra.mrb[0].mxu0 %v855
  %v991 = vpop.f32.mrb[0].mxu0
  %v992 = vadd.f32 0.0, %v991
  %v993 = vpop.f32.mrb[0].mxu0
  %994 = vmatprep.mubr.f32.mxu0 0.0
  %995 = vmatmul.mubr.f32.gmra.mrb[0].mxu0 %v858
  %v996 = vpop.f32.mrb[0].mxu0
  %v997 = vadd.f32 0.0, %v996
  %v998 = vpop.f32.mrb[0].mxu0
  %999 = vmatprep.mubr.f32.mxu0 0.0
  %1000 = vmatmul.mubr.f32.gmra.mrb[0].mxu0 %v861
  %v1001 = vpop.f32.mrb[0].mxu0
  %v1002 = vadd.f32 0.0, %v1001
  %v1003 = vpop.f32.mrb[0].mxu0
  %1004 = vmatprep.mubr.f32.mxu0 0.0
  %1005 = vmatmul.mubr.f32.gmra.mrb[0].mxu0 %v864
  %v1006 = vpop.f32.mrb[0].mxu0
  %v1007 = vadd.f32 0.0, %v1006
  %v1008 = vpop.f32.mrb[0].mxu0
  %1009 = vmatprep.mubr.f32.mxu0 0.0
  %1010 = vmatmul.mubr.f32.gmra.mrb[0].mxu0 %v867
  %v1011 = vpop.f32.mrb[0].mxu0
  %v1012 = vadd.f32 0.0, %v1011
  %v1013 = vpop.f32.mrb[0].mxu0
  %1014 = vmatprep.mubr.f32.mxu0 0.0
  %1015 = vmatmul.mubr.f32.gmra.mrb[0].mxu0 %v870
  %v1016 = vpop.f32.mrb[0].mxu0
  %v1017 = vadd.f32 0.0, %v1016
  %v1018 = vpop.f32.mrb[0].mxu0
  %1019 = vdwg.mxu0
  %v1020 = vmul.f32 %v942, %v477
  %v1021 = vmul.f32 %v947, %v480
  %v1022 = vmul.f32 %v952, %v485
  %v1023 = vmul.f32 %v957, %v488
  %v1024 = vmul.f32 %v962, %v493
  %v1025 = vmul.f32 %v967, %v496
  %v1026 = vmul.f32 %v972, %v501
  %v1027 = vmul.f32 %v977, %v504
  %v1028 = vmul.f32 %v982, %v477
  %v1029 = vmul.f32 %v987, %v480
  %v1030 = vmul.f32 %v992, %v485
  %v1031 = vmul.f32 %v997, %v488
  %v1032 = vmul.f32 %v1002, %v493
  %v1033 = vmul.f32 %v1007, %v496
  %v1034 = vmul.f32 %v1012, %v501
  %v1035 = vmul.f32 %v1017, %v504
  %v1036 = vadd.f32 %v1020, %v1024
  %v1037 = vadd.f32 %v1021, %v1025
  %v1038 = vadd.f32 %v1022, %v1026
  %v1039 = vadd.f32 %v1023, %v1027
  %v1040 = vadd.f32 %v1028, %v1032
  %v1041 = vadd.f32 %v1029, %v1033
  %v1042 = vadd.f32 %v1030, %v1034
  %v1043 = vadd.f32 %v1031, %v1035
  %v1044 = vpack.c.bf16 %v1037, %v1036
  %v1045 = vpack.c.bf16 %v1039, %v1038
  %v1046 = vpack.c.bf16 %v1041, %v1040
  %v1047 = vpack.c.bf16 %v1043, %v1042
  %s1048 = scalar_lea.vmem %s2, 48
  %v1049 = vld [vmem:[%s1048] sm:$0xf]
  %v1050 = vld [vmem:[%s1048 + $0x4] sm:$0xf]
  %v1051 = vld [vmem:[%s1048 + $0x8] sm:$0xf]
  %v1052 = vld [vmem:[%s1048 + $0xc] sm:$0xf]
  %v1053 = vlaneseq
  %v1054 = vshrl.u32 %v1053, 7
  %v1055 = vsub.s32 0, %v1054
  %v1056 = vrot.slane %v34, %v1055
  %v1061 = vunpack.c.l.b16 %v1049
  %v1062 = vunpack.c.l.b16 %v1050
  %v1063 = vunpack.c.l.b16 %v1051
  %v1064 = vunpack.c.l.b16 %v1052
  %v1065 = vpack.c.b16 %v1062, %v1061
  %v1066 = vpack.c.b16 %v1064, %v1063
  %v1070 = vsel %vm257, %v1044, 0
  %v1073 = vsel %vm257, %v1045, 0
  %v1076 = vsel %vm257, %v1046, 0
  %v1079 = vsel %vm257, %v1047, 0
  %1081 = vmatprep.subr.bf16.mxu0 0
  %1082 = vmatpush1.bf16.msra.mxu0 %v1065
  %1083 = vmatprep.subr.bf16.mxu0 0
  %1084 = vmatpush1.bf16.msra.mxu0 %v1066
  %1085 = vmatprep.subr.bf16.mxu0 0
  %1086 = vmatpush1.bf16.msra.mxu0 0
  %1087 = vmatprep.subr.bf16.mxu0 0
  %1088 = vmatpush1.bf16.msra.mxu0 0
  %1089 = vmatprep.subr.bf16.mxu0 0
  %1090 = vmatpush1.bf16.msra.mxu0 0
  %1091 = vmatprep.subr.bf16.mxu0 0
  %1092 = vmatpush1.bf16.msra.mxu0 0
  %1093 = vmatprep.subr.bf16.mxu0 0
  %1094 = vmatpush1.bf16.msra.mxu0 0
  %1095 = vmatprep.subr.bf16.mxu0 0
  %1096 = vmatpush1.bf16.msra.mxu0 0
  %1097 = vmatprep.subr.bf16.mxu0 0
  %1098 = vmatpush1.bf16.msra.mxu0 0
  %1099 = vmatprep.subr.bf16.mxu0 0
  %1100 = vmatpush1.bf16.msra.mxu0 0
  %1101 = vmatprep.subr.bf16.mxu0 0
  %1102 = vmatpush1.bf16.msra.mxu0 0
  %1103 = vmatprep.subr.bf16.mxu0 0
  %1104 = vmatpush1.bf16.msra.mxu0 0
  %1105 = vmatprep.subr.bf16.mxu0 0
  %1106 = vmatpush1.bf16.msra.mxu0 0
  %1107 = vmatprep.subr.bf16.mxu0 0
  %1108 = vmatpush1.bf16.msra.mxu0 0
  %1109 = vmatprep.subr.bf16.mxu0 0
  %1110 = vmatpush1.bf16.msra.mxu0 0
  %1111 = vmatprep.subr.bf16.mxu0 0
  %1112 = vmatpush1.bf16.msra.mxu0 0
  %1113 = vmatprep.mubr.bf16.mxu0 0
  %1114 = vmatmul.mubr.bf16.gmra.mrb[0].mxu0 %v1070
  %v1115 = vpop.f32.mrb[0].mxu0
  %v1116 = vadd.f32 %v1056, %v1115
  %v1117 = vpop.f32.mrb[0].mxu0
  %v1118 = vpop.f32.mrb[0].mxu0
  %v1119 = vadd.f32 %v1056, %v1118
  %v1120 = vpop.f32.mrb[0].mxu0
  %1121 = vmatprep.mubr.bf16.mxu0 0
  %1122 = vmatmul.mubr.bf16.gmra.mrb[0].mxu0 %v1073
  %v1123 = vpop.f32.mrb[0].mxu0
  %v1124 = vadd.f32 %v1056, %v1123
  %v1125 = vpop.f32.mrb[0].mxu0
  %v1126 = vpop.f32.mrb[0].mxu0
  %v1127 = vadd.f32 %v1056, %v1126
  %v1128 = vpop.f32.mrb[0].mxu0
  %1129 = vmatprep.mubr.bf16.mxu0 0
  %1130 = vmatmul.mubr.bf16.gmra.mrb[0].mxu0 %v1076
  %v1131 = vpop.f32.mrb[0].mxu0
  %v1132 = vadd.f32 %v1056, %v1131
  %v1133 = vpop.f32.mrb[0].mxu0
  %v1134 = vpop.f32.mrb[0].mxu0
  %v1135 = vadd.f32 %v1056, %v1134
  %v1136 = vpop.f32.mrb[0].mxu0
  %1137 = vmatprep.mubr.bf16.mxu0 0
  %1138 = vmatmul.mubr.bf16.gmra.mrb[0].mxu0 %v1079
  %v1139 = vpop.f32.mrb[0].mxu0
  %v1140 = vadd.f32 %v1056, %v1139
  %v1141 = vpop.f32.mrb[0].mxu0
  %v1142 = vpop.f32.mrb[0].mxu0
  %v1143 = vadd.f32 %v1056, %v1142
  %v1144 = vpop.f32.mrb[0].mxu0
  %1145 = vdwg.mxu0
  %v1146 = vadd.f32 %v203, %v1116
  %v1147 = vadd.f32 %v206, %v1119
  %v1148 = vadd.f32 %v211, %v1124
  %v1149 = vadd.f32 %v214, %v1127
  %v1150 = vadd.f32 %v219, %v1132
  %v1151 = vadd.f32 %v222, %v1135
  %v1152 = vadd.f32 %v227, %v1140
  %v1153 = vadd.f32 %v230, %v1143
  %v1154 = vsel %vm257, %v1146, 0.0
  %1155 = vadd.xlane.f32.xlu0 %v1154
  %v1156 = vpop.xlane.xlu0 %1155
  %v1157 = vsel %vm257, %v1147, 0.0
  %1158 = vadd.xlane.f32.xlu0 %v1157
  %v1159 = vpop.xlane.xlu0 %1158
  %v1160 = vsel %vm257, %v1148, 0.0
  %1161 = vadd.xlane.f32.xlu0 %v1160
  %v1162 = vpop.xlane.xlu0 %1161
  %v1163 = vsel %vm257, %v1149, 0.0
  %1164 = vadd.xlane.f32.xlu0 %v1163
  %v1165 = vpop.xlane.xlu0 %1164
  %v1166 = vsel %vm257, %v1150, 0.0
  %1167 = vadd.xlane.f32.xlu0 %v1166
  %v1168 = vpop.xlane.xlu0 %1167
  %v1169 = vsel %vm257, %v1151, 0.0
  %1170 = vadd.xlane.f32.xlu0 %v1169
  %v1171 = vpop.xlane.xlu0 %1170
  %v1172 = vsel %vm257, %v1152, 0.0
  %1173 = vadd.xlane.f32.xlu0 %v1172
  %v1174 = vpop.xlane.xlu0 %1173
  %v1175 = vsel %vm257, %v1153, 0.0
  %1176 = vadd.xlane.f32.xlu0 %v1175
  %v1177 = vpop.xlane.xlu0 %1176
  %v1178 = vrcp.pop 32.0
  %v1179 = vmul.f32 %v1156, %v1178
  %v1180 = vmul.f32 %v1159, %v1178
  %v1181 = vmul.f32 %v1162, %v1178
  %v1182 = vmul.f32 %v1165, %v1178
  %v1183 = vmul.f32 %v1168, %v1178
  %v1184 = vmul.f32 %v1171, %v1178
  %v1185 = vmul.f32 %v1174, %v1178
  %v1186 = vmul.f32 %v1177, %v1178
  %v1187 = vsub.f32 %v1146, %v1179
  %v1188 = vsub.f32 %v1147, %v1180
  %v1189 = vsub.f32 %v1148, %v1181
  %v1190 = vsub.f32 %v1149, %v1182
  %v1191 = vsub.f32 %v1150, %v1183
  %v1192 = vsub.f32 %v1151, %v1184
  %v1193 = vsub.f32 %v1152, %v1185
  %v1194 = vsub.f32 %v1153, %v1186
  %v1195 = vmul.f32 %v1187, %v1187
  %v1196 = vmul.f32 %v1188, %v1188
  %v1197 = vmul.f32 %v1189, %v1189
  %v1198 = vmul.f32 %v1190, %v1190
  %v1199 = vmul.f32 %v1191, %v1191
  %v1200 = vmul.f32 %v1192, %v1192
  %v1201 = vmul.f32 %v1193, %v1193
  %v1202 = vmul.f32 %v1194, %v1194
  %v1203 = vsel %vm257, %v1195, 0.0
  %1204 = vadd.xlane.f32.xlu0 %v1203
  %v1205 = vpop.xlane.xlu0 %1204
  %v1206 = vsel %vm257, %v1196, 0.0
  %1207 = vadd.xlane.f32.xlu0 %v1206
  %v1208 = vpop.xlane.xlu0 %1207
  %v1209 = vsel %vm257, %v1197, 0.0
  %1210 = vadd.xlane.f32.xlu0 %v1209
  %v1211 = vpop.xlane.xlu0 %1210
  %v1212 = vsel %vm257, %v1198, 0.0
  %1213 = vadd.xlane.f32.xlu0 %v1212
  %v1214 = vpop.xlane.xlu0 %1213
  %v1215 = vsel %vm257, %v1199, 0.0
  %1216 = vadd.xlane.f32.xlu0 %v1215
  %v1217 = vpop.xlane.xlu0 %1216
  %v1218 = vsel %vm257, %v1200, 0.0
  %1219 = vadd.xlane.f32.xlu0 %v1218
  %v1220 = vpop.xlane.xlu0 %1219
  %v1221 = vsel %vm257, %v1201, 0.0
  %1222 = vadd.xlane.f32.xlu0 %v1221
  %v1223 = vpop.xlane.xlu0 %1222
  %v1224 = vsel %vm257, %v1202, 0.0
  %1225 = vadd.xlane.f32.xlu0 %v1224
  %v1226 = vpop.xlane.xlu0 %1225
  %v1227 = vmul.f32 %v1205, %v1178
  %v1228 = vmul.f32 %v1208, %v1178
  %v1229 = vmul.f32 %v1211, %v1178
  %v1230 = vmul.f32 %v1214, %v1178
  %v1231 = vmul.f32 %v1217, %v1178
  %v1232 = vmul.f32 %v1220, %v1178
  %v1233 = vmul.f32 %v1223, %v1178
  %v1234 = vmul.f32 %v1226, %v1178
  %v1235 = vadd.f32 %v1227, 1e-05
  %v1236 = vadd.f32 %v1228, 1e-05
  %v1237 = vadd.f32 %v1229, 1e-05
  %v1238 = vadd.f32 %v1230, 1e-05
  %v1239 = vadd.f32 %v1231, 1e-05
  %v1240 = vadd.f32 %v1232, 1e-05
  %v1241 = vadd.f32 %v1233, 1e-05
  %v1242 = vadd.f32 %v1234, 1e-05
  %v1243 = vrsqrt.pop %v1235
  %v1244 = vrsqrt.pop %v1236
  %v1245 = vrsqrt.pop %v1237
  %v1246 = vrsqrt.pop %v1238
  %v1247 = vrsqrt.pop %v1239
  %v1248 = vrsqrt.pop %v1240
  %v1249 = vrsqrt.pop %v1241
  %v1250 = vrsqrt.pop %v1242
  %v1251 = vmul.f32 %v1187, %v1243
  %v1252 = vmul.f32 %v1188, %v1244
  %v1253 = vmul.f32 %v1189, %v1245
  %v1254 = vmul.f32 %v1190, %v1246
  %v1255 = vmul.f32 %v1191, %v1247
  %v1256 = vmul.f32 %v1192, %v1248
  %v1257 = vmul.f32 %v1193, %v1249
  %v1258 = vmul.f32 %v1194, %v1250
  %v1259 = vlaneseq
  %v1260 = vshrl.u32 %v1259, 7
  %v1261 = vsub.s32 1, %v1260
  %v1262 = vrot.slane %v34, %v1261
  %v1263 = vmul.f32 %v1251, %v1262
  %v1264 = vmul.f32 %v1252, %v1262
  %v1265 = vmul.f32 %v1253, %v1262
  %v1266 = vmul.f32 %v1254, %v1262
  %v1267 = vmul.f32 %v1255, %v1262
  %v1268 = vmul.f32 %v1256, %v1262
  %v1269 = vmul.f32 %v1257, %v1262
  %v1270 = vmul.f32 %v1258, %v1262
  %v1271 = vlaneseq
  %v1272 = vshrl.u32 %v1271, 7
  %v1273 = vsub.s32 2, %v1272
  %v1274 = vrot.slane %v34, %v1273
  %v1275 = vadd.f32 %v1263, %v1274
  %v1276 = vadd.f32 %v1264, %v1274
  %v1277 = vadd.f32 %v1265, %v1274
  %v1278 = vadd.f32 %v1266, %v1274
  %v1279 = vadd.f32 %v1267, %v1274
  %v1280 = vadd.f32 %v1268, %v1274
  %v1281 = vadd.f32 %v1269, %v1274
  %v1282 = vadd.f32 %v1270, %v1274
  %v1283 = vpack.c.bf16 %v1276, %v1275
  %v1284 = vpack.c.bf16 %v1278, %v1277
  %v1285 = vpack.c.bf16 %v1280, %v1279
  %v1286 = vpack.c.bf16 %v1282, %v1281
  %v1287 = vld [vmem:[%s3] sm:$0xff]
  %v1288 = vld [vmem:[%s3 + $0x8] sm:$0xff]
  %v1289 = vld [vmem:[%s3 + $0x40] sm:$0xff]
  %v1290 = vld [vmem:[%s3 + $0x48] sm:$0xff]
  %v1291 = vld [vmem:[%s3 + $0x80] sm:$0xff]
  %v1292 = vld [vmem:[%s3 + $0x88] sm:$0xff]
  %v1293 = vld [vmem:[%s3 + $0xc0] sm:$0xff]
  %v1294 = vld [vmem:[%s3 + $0xc8] sm:$0xff]
  %v1295 = vld [vmem:[%s5] sm:$0xf]
  %v1297 = vlaneseq
  %v1298 = vshrl.u32 %v1297, 7
  %v1299 = vsub.s32 0, %v1298
  %v1300 = vrot.slane %v1295, %v1299
  %v1301 = vlaneseq
  %v1302 = vshrl.u32 %v1301, 7
  %v1303 = vsub.s32 1, %v1302
  %v1304 = vrot.slane %v1295, %v1303
  %v1305 = vlaneseq
  %v1306 = vshrl.u32 %v1305, 7
  %v1307 = vsub.s32 2, %v1306
  %v1308 = vrot.slane %v1295, %v1307
  %v1309 = vlaneseq
  %v1310 = vshrl.u32 %v1309, 7
  %v1311 = vsub.s32 3, %v1310
  %v1312 = vrot.slane %v1295, %v1311
  %v1325 = vunpack.c.l.b16 %v1287
  %v1326 = vunpack.c.h.b16 %v1287
  %v1327 = vunpack.c.l.b16 %v1288
  %v1328 = vunpack.c.h.b16 %v1288
  %v1329 = vunpack.c.l.b16 %v1289
  %v1330 = vunpack.c.h.b16 %v1289
  %v1331 = vunpack.c.l.b16 %v1290
  %v1332 = vunpack.c.h.b16 %v1290
  %v1333 = vunpack.c.l.b16 %v1291
  %v1334 = vunpack.c.h.b16 %v1291
  %v1335 = vunpack.c.l.b16 %v1292
  %v1336 = vunpack.c.h.b16 %v1292
  %v1337 = vunpack.c.l.b16 %v1293
  %v1338 = vunpack.c.h.b16 %v1293
  %v1339 = vunpack.c.l.b16 %v1294
  %v1340 = vunpack.c.h.b16 %v1294
  %v1341 = vpack.c.b16 %v1329, %v1325
  %v1342 = vpack.c.b16 %v1330, %v1326
  %v1343 = vpack.c.b16 %v1331, %v1327
  %v1344 = vpack.c.b16 %v1332, %v1328
  %v1345 = vpack.c.b16 %v1337, %v1333
  %v1346 = vpack.c.b16 %v1338, %v1334
  %v1347 = vpack.c.b16 %v1339, %v1335
  %v1348 = vpack.c.b16 %v1340, %v1336
  %v1358 = vsel %vm257, %v1283, 0
  %v1361 = vsel %vm257, %v1284, 0
  %v1364 = vsel %vm257, %v1285, 0
  %v1367 = vsel %vm257, %v1286, 0
  %1369 = vmatprep.subr.bf16.mxu0 %v1342
  %1370 = vmatpush1.bf16.msra.mxu0 %v1341
  %1371 = vmatprep.subr.bf16.mxu0 %v1346
  %1372 = vmatpush1.bf16.msra.mxu0 %v1345
  %1373 = vmatprep.subr.bf16.mxu0 0
  %1374 = vmatpush1.bf16.msra.mxu0 0
  %1375 = vmatprep.subr.bf16.mxu0 0
  %1376 = vmatpush1.bf16.msra.mxu0 0
  %1377 = vmatprep.subr.bf16.mxu0 0
  %1378 = vmatpush1.bf16.msra.mxu0 0
  %1379 = vmatprep.subr.bf16.mxu0 0
  %1380 = vmatpush1.bf16.msra.mxu0 0
  %1381 = vmatprep.subr.bf16.mxu0 0
  %1382 = vmatpush1.bf16.msra.mxu0 0
  %1383 = vmatprep.subr.bf16.mxu0 0
  %1384 = vmatpush1.bf16.msra.mxu0 0
  %1385 = vmatprep.subr.bf16.mxu0 0
  %1386 = vmatpush1.bf16.msra.mxu0 0
  %1387 = vmatprep.subr.bf16.mxu0 0
  %1388 = vmatpush1.bf16.msra.mxu0 0
  %1389 = vmatprep.subr.bf16.mxu0 0
  %1390 = vmatpush1.bf16.msra.mxu0 0
  %1391 = vmatprep.subr.bf16.mxu0 0
  %1392 = vmatpush1.bf16.msra.mxu0 0
  %1393 = vmatprep.subr.bf16.mxu0 0
  %1394 = vmatpush1.bf16.msra.mxu0 0
  %1395 = vmatprep.subr.bf16.mxu0 0
  %1396 = vmatpush1.bf16.msra.mxu0 0
  %1397 = vmatprep.subr.bf16.mxu0 0
  %1398 = vmatpush1.bf16.msra.mxu0 0
  %1399 = vmatprep.subr.bf16.mxu0 0
  %1400 = vmatpush1.bf16.msra.mxu0 0
  %1401 = vmatprep.mubr.bf16.mxu0 0
  %1402 = vmatmul.mubr.bf16.gmra.mrb[0].mxu0 %v1358
  %v1403 = vpop.f32.mrb[0].mxu0
  %v1404 = vadd.f32 %v1300, %v1403
  %v1405 = vpop.f32.mrb[0].mxu0
  %v1406 = vadd.f32 %v1304, %v1405
  %v1407 = vpop.f32.mrb[0].mxu0
  %v1408 = vadd.f32 %v1300, %v1407
  %v1409 = vpop.f32.mrb[0].mxu0
  %v1410 = vadd.f32 %v1304, %v1409
  %1411 = vmatprep.mubr.bf16.mxu0 0
  %1412 = vmatmul.mubr.bf16.gmra.mrb[0].mxu0 %v1361
  %v1413 = vpop.f32.mrb[0].mxu0
  %v1414 = vadd.f32 %v1300, %v1413
  %v1415 = vpop.f32.mrb[0].mxu0
  %v1416 = vadd.f32 %v1304, %v1415
  %v1417 = vpop.f32.mrb[0].mxu0
  %v1418 = vadd.f32 %v1300, %v1417
  %v1419 = vpop.f32.mrb[0].mxu0
  %v1420 = vadd.f32 %v1304, %v1419
  %1421 = vmatprep.mubr.bf16.mxu0 0
  %1422 = vmatmul.mubr.bf16.gmra.mrb[0].mxu0 %v1364
  %v1423 = vpop.f32.mrb[0].mxu0
  %v1424 = vadd.f32 %v1300, %v1423
  %v1425 = vpop.f32.mrb[0].mxu0
  %v1426 = vadd.f32 %v1304, %v1425
  %v1427 = vpop.f32.mrb[0].mxu0
  %v1428 = vadd.f32 %v1300, %v1427
  %v1429 = vpop.f32.mrb[0].mxu0
  %v1430 = vadd.f32 %v1304, %v1429
  %1431 = vmatprep.mubr.bf16.mxu0 0
  %1432 = vmatmul.mubr.bf16.gmra.mrb[0].mxu0 %v1367
  %v1433 = vpop.f32.mrb[0].mxu0
  %v1434 = vadd.f32 %v1300, %v1433
  %v1435 = vpop.f32.mrb[0].mxu0
  %v1436 = vadd.f32 %v1304, %v1435
  %v1437 = vpop.f32.mrb[0].mxu0
  %v1438 = vadd.f32 %v1300, %v1437
  %v1439 = vpop.f32.mrb[0].mxu0
  %v1440 = vadd.f32 %v1304, %v1439
  %1441 = vdwg.mxu0
  %1442 = vmatprep.subr.bf16.mxu0 %v1344
  %1443 = vmatpush1.bf16.msra.mxu0 %v1343
  %1444 = vmatprep.subr.bf16.mxu0 %v1348
  %1445 = vmatpush1.bf16.msra.mxu0 %v1347
  %1446 = vmatprep.subr.bf16.mxu0 0
  %1447 = vmatpush1.bf16.msra.mxu0 0
  %1448 = vmatprep.subr.bf16.mxu0 0
  %1449 = vmatpush1.bf16.msra.mxu0 0
  %1450 = vmatprep.subr.bf16.mxu0 0
  %1451 = vmatpush1.bf16.msra.mxu0 0
  %1452 = vmatprep.subr.bf16.mxu0 0
  %1453 = vmatpush1.bf16.msra.mxu0 0
  %1454 = vmatprep.subr.bf16.mxu0 0
  %1455 = vmatpush1.bf16.msra.mxu0 0
  %1456 = vmatprep.subr.bf16.mxu0 0
  %1457 = vmatpush1.bf16.msra.mxu0 0
  %1458 = vmatprep.subr.bf16.mxu0 0
  %1459 = vmatpush1.bf16.msra.mxu0 0
  %1460 = vmatprep.subr.bf16.mxu0 0
  %1461 = vmatpush1.bf16.msra.mxu0 0
  %1462 = vmatprep.subr.bf16.mxu0 0
  %1463 = vmatpush1.bf16.msra.mxu0 0
  %1464 = vmatprep.subr.bf16.mxu0 0
  %1465 = vmatpush1.bf16.msra.mxu0 0
  %1466 = vmatprep.subr.bf16.mxu0 0
  %1467 = vmatpush1.bf16.msra.mxu0 0
  %1468 = vmatprep.subr.bf16.mxu0 0
  %1469 = vmatpush1.bf16.msra.mxu0 0
  %1470 = vmatprep.subr.bf16.mxu0 0
  %1471 = vmatpush1.bf16.msra.mxu0 0
  %1472 = vmatprep.subr.bf16.mxu0 0
  %1473 = vmatpush1.bf16.msra.mxu0 0
  %1474 = vmatprep.mubr.bf16.mxu0 0
  %1475 = vmatmul.mubr.bf16.gmra.mrb[0].mxu0 %v1358
  %v1476 = vpop.f32.mrb[0].mxu0
  %v1477 = vadd.f32 %v1308, %v1476
  %v1478 = vpop.f32.mrb[0].mxu0
  %v1479 = vadd.f32 %v1312, %v1478
  %v1480 = vpop.f32.mrb[0].mxu0
  %v1481 = vadd.f32 %v1308, %v1480
  %v1482 = vpop.f32.mrb[0].mxu0
  %v1483 = vadd.f32 %v1312, %v1482
  %1484 = vmatprep.mubr.bf16.mxu0 0
  %1485 = vmatmul.mubr.bf16.gmra.mrb[0].mxu0 %v1361
  %v1486 = vpop.f32.mrb[0].mxu0
  %v1487 = vadd.f32 %v1308, %v1486
  %v1488 = vpop.f32.mrb[0].mxu0
  %v1489 = vadd.f32 %v1312, %v1488
  %v1490 = vpop.f32.mrb[0].mxu0
  %v1491 = vadd.f32 %v1308, %v1490
  %v1492 = vpop.f32.mrb[0].mxu0
  %v1493 = vadd.f32 %v1312, %v1492
  %1494 = vmatprep.mubr.bf16.mxu0 0
  %1495 = vmatmul.mubr.bf16.gmra.mrb[0].mxu0 %v1364
  %v1496 = vpop.f32.mrb[0].mxu0
  %v1497 = vadd.f32 %v1308, %v1496
  %v1498 = vpop.f32.mrb[0].mxu0
  %v1499 = vadd.f32 %v1312, %v1498
  %v1500 = vpop.f32.mrb[0].mxu0
  %v1501 = vadd.f32 %v1308, %v1500
  %v1502 = vpop.f32.mrb[0].mxu0
  %v1503 = vadd.f32 %v1312, %v1502
  %1504 = vmatprep.mubr.bf16.mxu0 0
  %1505 = vmatmul.mubr.bf16.gmra.mrb[0].mxu0 %v1367
  %v1506 = vpop.f32.mrb[0].mxu0
  %v1507 = vadd.f32 %v1308, %v1506
  %v1508 = vpop.f32.mrb[0].mxu0
  %v1509 = vadd.f32 %v1312, %v1508
  %v1510 = vpop.f32.mrb[0].mxu0
  %v1511 = vadd.f32 %v1308, %v1510
  %v1512 = vpop.f32.mrb[0].mxu0
  %v1513 = vadd.f32 %v1312, %v1512
  %1514 = vdwg.mxu0
  %v1515 = vmax.f32 %v1404, 0.0
  %v1516 = vmax.f32 %v1406, 0.0
  %v1517 = vmax.f32 %v1477, 0.0
  %v1518 = vmax.f32 %v1479, 0.0
  %v1519 = vmax.f32 %v1408, 0.0
  %v1520 = vmax.f32 %v1410, 0.0
  %v1521 = vmax.f32 %v1481, 0.0
  %v1522 = vmax.f32 %v1483, 0.0
  %v1523 = vmax.f32 %v1414, 0.0
  %v1524 = vmax.f32 %v1416, 0.0
  %v1525 = vmax.f32 %v1487, 0.0
  %v1526 = vmax.f32 %v1489, 0.0
  %v1527 = vmax.f32 %v1418, 0.0
  %v1528 = vmax.f32 %v1420, 0.0
  %v1529 = vmax.f32 %v1491, 0.0
  %v1530 = vmax.f32 %v1493, 0.0
  %v1531 = vmax.f32 %v1424, 0.0
  %v1532 = vmax.f32 %v1426, 0.0
  %v1533 = vmax.f32 %v1497, 0.0
  %v1534 = vmax.f32 %v1499, 0.0
  %v1535 = vmax.f32 %v1428, 0.0
  %v1536 = vmax.f32 %v1430, 0.0
  %v1537 = vmax.f32 %v1501, 0.0
  %v1538 = vmax.f32 %v1503, 0.0
  %v1539 = vmax.f32 %v1434, 0.0
  %v1540 = vmax.f32 %v1436, 0.0
  %v1541 = vmax.f32 %v1507, 0.0
  %v1542 = vmax.f32 %v1509, 0.0
  %v1543 = vmax.f32 %v1438, 0.0
  %v1544 = vmax.f32 %v1440, 0.0
  %v1545 = vmax.f32 %v1511, 0.0
  %v1546 = vmax.f32 %v1513, 0.0
  %v1547 = vpack.c.bf16 %v1519, %v1515
  %v1548 = vpack.c.bf16 %v1520, %v1516
  %v1549 = vpack.c.bf16 %v1521, %v1517
  %v1550 = vpack.c.bf16 %v1522, %v1518
  %v1551 = vpack.c.bf16 %v1527, %v1523
  %v1552 = vpack.c.bf16 %v1528, %v1524
  %v1553 = vpack.c.bf16 %v1529, %v1525
  %v1554 = vpack.c.bf16 %v1530, %v1526
  %v1555 = vpack.c.bf16 %v1535, %v1531
  %v1556 = vpack.c.bf16 %v1536, %v1532
  %v1557 = vpack.c.bf16 %v1537, %v1533
  %v1558 = vpack.c.bf16 %v1538, %v1534
  %v1559 = vpack.c.bf16 %v1543, %v1539
  %v1560 = vpack.c.bf16 %v1544, %v1540
  %v1561 = vpack.c.bf16 %v1545, %v1541
  %v1562 = vpack.c.bf16 %v1546, %v1542
  %v1563 = vld [vmem:[%s4] sm:$0xff]
  %v1564 = vld [vmem:[%s4 + $0x8] sm:$0xff]
  %v1565 = vld [vmem:[%s4 + $0x40] sm:$0xff]
  %v1566 = vld [vmem:[%s4 + $0x48] sm:$0xff]
  %v1567 = vld [vmem:[%s4 + $0x80] sm:$0xff]
  %v1568 = vld [vmem:[%s4 + $0x88] sm:$0xff]
  %v1569 = vld [vmem:[%s4 + $0xc0] sm:$0xff]
  %v1570 = vld [vmem:[%s4 + $0xc8] sm:$0xff]
  %v1571 = vld [vmem:[%s3 + $0x10] sm:$0xff]
  %v1572 = vld [vmem:[%s3 + $0x18] sm:$0xff]
  %v1573 = vld [vmem:[%s3 + $0x50] sm:$0xff]
  %v1574 = vld [vmem:[%s3 + $0x58] sm:$0xff]
  %v1575 = vld [vmem:[%s3 + $0x90] sm:$0xff]
  %v1576 = vld [vmem:[%s3 + $0x98] sm:$0xff]
  %v1577 = vld [vmem:[%s3 + $0xd0] sm:$0xff]
  %v1578 = vld [vmem:[%s3 + $0xd8] sm:$0xff]
  %v1579 = vld [vmem:[%s5 + $0x4] sm:$0xf]
  %v1581 = vlaneseq
  %v1582 = vshrl.u32 %v1581, 7
  %v1583 = vsub.s32 0, %v1582
  %v1584 = vrot.slane %v1579, %v1583
  %v1585 = vlaneseq
  %v1586 = vshrl.u32 %v1585, 7
  %v1587 = vsub.s32 1, %v1586
  %v1588 = vrot.slane %v1579, %v1587
  %v1589 = vlaneseq
  %v1590 = vshrl.u32 %v1589, 7
  %v1591 = vsub.s32 2, %v1590
  %v1592 = vrot.slane %v1579, %v1591
  %v1593 = vlaneseq
  %v1594 = vshrl.u32 %v1593, 7
  %v1595 = vsub.s32 3, %v1594
  %v1596 = vrot.slane %v1579, %v1595
  %v1609 = vunpack.c.l.b16 %v1571
  %v1610 = vunpack.c.h.b16 %v1571
  %v1611 = vunpack.c.l.b16 %v1572
  %v1612 = vunpack.c.h.b16 %v1572
  %v1613 = vunpack.c.l.b16 %v1573
  %v1614 = vunpack.c.h.b16 %v1573
  %v1615 = vunpack.c.l.b16 %v1574
  %v1616 = vunpack.c.h.b16 %v1574
  %v1617 = vunpack.c.l.b16 %v1575
  %v1618 = vunpack.c.h.b16 %v1575
  %v1619 = vunpack.c.l.b16 %v1576
  %v1620 = vunpack.c.h.b16 %v1576
  %v1621 = vunpack.c.l.b16 %v1577
  %v1622 = vunpack.c.h.b16 %v1577
  %v1623 = vunpack.c.l.b16 %v1578
  %v1624 = vunpack.c.h.b16 %v1578
  %v1625 = vpack.c.b16 %v1613, %v1609
  %v1626 = vpack.c.b16 %v1614, %v1610
  %v1627 = vpack.c.b16 %v1615, %v1611
  %v1628 = vpack.c.b16 %v1616, %v1612
  %v1629 = vpack.c.b16 %v1621, %v1617
  %v1630 = vpack.c.b16 %v1622, %v1618
  %v1631 = vpack.c.b16 %v1623, %v1619
  %v1632 = vpack.c.b16 %v1624, %v1620
  %1641 = vmatprep.subr.bf16.mxu0 %v1626
  %1642 = vmatpush1.bf16.msra.mxu0 %v1625
  %1643 = vmatprep.subr.bf16.mxu0 %v1630
  %1644 = vmatpush1.bf16.msra.mxu0 %v1629
  %1645 = vmatprep.subr.bf16.mxu0 0
  %1646 = vmatpush1.bf16.msra.mxu0 0
  %1647 = vmatprep.subr.bf16.mxu0 0
  %1648 = vmatpush1.bf16.msra.mxu0 0
  %1649 = vmatprep.subr.bf16.mxu0 0
  %1650 = vmatpush1.bf16.msra.mxu0 0
  %1651 = vmatprep.subr.bf16.mxu0 0
  %1652 = vmatpush1.bf16.msra.mxu0 0
  %1653 = vmatprep.subr.bf16.mxu0 0
  %1654 = vmatpush1.bf16.msra.mxu0 0
  %1655 = vmatprep.subr.bf16.mxu0 0
  %1656 = vmatpush1.bf16.msra.mxu0 0
  %1657 = vmatprep.subr.bf16.mxu0 0
  %1658 = vmatpush1.bf16.msra.mxu0 0
  %1659 = vmatprep.subr.bf16.mxu0 0
  %1660 = vmatpush1.bf16.msra.mxu0 0
  %1661 = vmatprep.subr.bf16.mxu0 0
  %1662 = vmatpush1.bf16.msra.mxu0 0
  %1663 = vmatprep.subr.bf16.mxu0 0
  %1664 = vmatpush1.bf16.msra.mxu0 0
  %1665 = vmatprep.subr.bf16.mxu0 0
  %1666 = vmatpush1.bf16.msra.mxu0 0
  %1667 = vmatprep.subr.bf16.mxu0 0
  %1668 = vmatpush1.bf16.msra.mxu0 0
  %1669 = vmatprep.subr.bf16.mxu0 0
  %1670 = vmatpush1.bf16.msra.mxu0 0
  %1671 = vmatprep.subr.bf16.mxu0 0
  %1672 = vmatpush1.bf16.msra.mxu0 0
  %1673 = vmatprep.mubr.bf16.mxu0 0
  %1674 = vmatmul.mubr.bf16.gmra.mrb[0].mxu0 %v1358
  %v1675 = vpop.f32.mrb[0].mxu0
  %v1676 = vadd.f32 %v1584, %v1675
  %v1677 = vpop.f32.mrb[0].mxu0
  %v1678 = vadd.f32 %v1588, %v1677
  %v1679 = vpop.f32.mrb[0].mxu0
  %v1680 = vadd.f32 %v1584, %v1679
  %v1681 = vpop.f32.mrb[0].mxu0
  %v1682 = vadd.f32 %v1588, %v1681
  %1683 = vmatprep.mubr.bf16.mxu0 0
  %1684 = vmatmul.mubr.bf16.gmra.mrb[0].mxu0 %v1361
  %v1685 = vpop.f32.mrb[0].mxu0
  %v1686 = vadd.f32 %v1584, %v1685
  %v1687 = vpop.f32.mrb[0].mxu0
  %v1688 = vadd.f32 %v1588, %v1687
  %v1689 = vpop.f32.mrb[0].mxu0
  %v1690 = vadd.f32 %v1584, %v1689
  %v1691 = vpop.f32.mrb[0].mxu0
  %v1692 = vadd.f32 %v1588, %v1691
  %1693 = vmatprep.mubr.bf16.mxu0 0
  %1694 = vmatmul.mubr.bf16.gmra.mrb[0].mxu0 %v1364
  %v1695 = vpop.f32.mrb[0].mxu0
  %v1696 = vadd.f32 %v1584, %v1695
  %v1697 = vpop.f32.mrb[0].mxu0
  %v1698 = vadd.f32 %v1588, %v1697
  %v1699 = vpop.f32.mrb[0].mxu0
  %v1700 = vadd.f32 %v1584, %v1699
  %v1701 = vpop.f32.mrb[0].mxu0
  %v1702 = vadd.f32 %v1588, %v1701
  %1703 = vmatprep.mubr.bf16.mxu0 0
  %1704 = vmatmul.mubr.bf16.gmra.mrb[0].mxu0 %v1367
  %v1705 = vpop.f32.mrb[0].mxu0
  %v1706 = vadd.f32 %v1584, %v1705
  %v1707 = vpop.f32.mrb[0].mxu0
  %v1708 = vadd.f32 %v1588, %v1707
  %v1709 = vpop.f32.mrb[0].mxu0
  %v1710 = vadd.f32 %v1584, %v1709
  %v1711 = vpop.f32.mrb[0].mxu0
  %v1712 = vadd.f32 %v1588, %v1711
  %1713 = vdwg.mxu0
  %1714 = vmatprep.subr.bf16.mxu0 %v1628
  %1715 = vmatpush1.bf16.msra.mxu0 %v1627
  %1716 = vmatprep.subr.bf16.mxu0 %v1632
  %1717 = vmatpush1.bf16.msra.mxu0 %v1631
  %1718 = vmatprep.subr.bf16.mxu0 0
  %1719 = vmatpush1.bf16.msra.mxu0 0
  %1720 = vmatprep.subr.bf16.mxu0 0
  %1721 = vmatpush1.bf16.msra.mxu0 0
  %1722 = vmatprep.subr.bf16.mxu0 0
  %1723 = vmatpush1.bf16.msra.mxu0 0
  %1724 = vmatprep.subr.bf16.mxu0 0
  %1725 = vmatpush1.bf16.msra.mxu0 0
  %1726 = vmatprep.subr.bf16.mxu0 0
  %1727 = vmatpush1.bf16.msra.mxu0 0
  %1728 = vmatprep.subr.bf16.mxu0 0
  %1729 = vmatpush1.bf16.msra.mxu0 0
  %1730 = vmatprep.subr.bf16.mxu0 0
  %1731 = vmatpush1.bf16.msra.mxu0 0
  %1732 = vmatprep.subr.bf16.mxu0 0
  %1733 = vmatpush1.bf16.msra.mxu0 0
  %1734 = vmatprep.subr.bf16.mxu0 0
  %1735 = vmatpush1.bf16.msra.mxu0 0
  %1736 = vmatprep.subr.bf16.mxu0 0
  %1737 = vmatpush1.bf16.msra.mxu0 0
  %1738 = vmatprep.subr.bf16.mxu0 0
  %1739 = vmatpush1.bf16.msra.mxu0 0
  %1740 = vmatprep.subr.bf16.mxu0 0
  %1741 = vmatpush1.bf16.msra.mxu0 0
  %1742 = vmatprep.subr.bf16.mxu0 0
  %1743 = vmatpush1.bf16.msra.mxu0 0
  %1744 = vmatprep.subr.bf16.mxu0 0
  %1745 = vmatpush1.bf16.msra.mxu0 0
  %1746 = vmatprep.mubr.bf16.mxu0 0
  %1747 = vmatmul.mubr.bf16.gmra.mrb[0].mxu0 %v1358
  %v1748 = vpop.f32.mrb[0].mxu0
  %v1749 = vadd.f32 %v1592, %v1748
  %v1750 = vpop.f32.mrb[0].mxu0
  %v1751 = vadd.f32 %v1596, %v1750
  %v1752 = vpop.f32.mrb[0].mxu0
  %v1753 = vadd.f32 %v1592, %v1752
  %v1754 = vpop.f32.mrb[0].mxu0
  %v1755 = vadd.f32 %v1596, %v1754
  %1756 = vmatprep.mubr.bf16.mxu0 0
  %1757 = vmatmul.mubr.bf16.gmra.mrb[0].mxu0 %v1361
  %v1758 = vpop.f32.mrb[0].mxu0
  %v1759 = vadd.f32 %v1592, %v1758
  %v1760 = vpop.f32.mrb[0].mxu0
  %v1761 = vadd.f32 %v1596, %v1760
  %v1762 = vpop.f32.mrb[0].mxu0
  %v1763 = vadd.f32 %v1592, %v1762
  %v1764 = vpop.f32.mrb[0].mxu0
  %v1765 = vadd.f32 %v1596, %v1764
  %1766 = vmatprep.mubr.bf16.mxu0 0
  %1767 = vmatmul.mubr.bf16.gmra.mrb[0].mxu0 %v1364
  %v1768 = vpop.f32.mrb[0].mxu0
  %v1769 = vadd.f32 %v1592, %v1768
  %v1770 = vpop.f32.mrb[0].mxu0
  %v1771 = vadd.f32 %v1596, %v1770
  %v1772 = vpop.f32.mrb[0].mxu0
  %v1773 = vadd.f32 %v1592, %v1772
  %v1774 = vpop.f32.mrb[0].mxu0
  %v1775 = vadd.f32 %v1596, %v1774
  %1776 = vmatprep.mubr.bf16.mxu0 0
  %1777 = vmatmul.mubr.bf16.gmra.mrb[0].mxu0 %v1367
  %v1778 = vpop.f32.mrb[0].mxu0
  %v1779 = vadd.f32 %v1592, %v1778
  %v1780 = vpop.f32.mrb[0].mxu0
  %v1781 = vadd.f32 %v1596, %v1780
  %v1782 = vpop.f32.mrb[0].mxu0
  %v1783 = vadd.f32 %v1592, %v1782
  %v1784 = vpop.f32.mrb[0].mxu0
  %v1785 = vadd.f32 %v1596, %v1784
  %1786 = vdwg.mxu0
  %v1787 = vmax.f32 %v1676, 0.0
  %v1788 = vmax.f32 %v1678, 0.0
  %v1789 = vmax.f32 %v1749, 0.0
  %v1790 = vmax.f32 %v1751, 0.0
  %v1791 = vmax.f32 %v1680, 0.0
  %v1792 = vmax.f32 %v1682, 0.0
  %v1793 = vmax.f32 %v1753, 0.0
  %v1794 = vmax.f32 %v1755, 0.0
  %v1795 = vmax.f32 %v1686, 0.0
  %v1796 = vmax.f32 %v1688, 0.0
  %v1797 = vmax.f32 %v1759, 0.0
  %v1798 = vmax.f32 %v1761, 0.0
  %v1799 = vmax.f32 %v1690, 0.0
  %v1800 = vmax.f32 %v1692, 0.0
  %v1801 = vmax.f32 %v1763, 0.0
  %v1802 = vmax.f32 %v1765, 0.0
  %v1803 = vmax.f32 %v1696, 0.0
  %v1804 = vmax.f32 %v1698, 0.0
  %v1805 = vmax.f32 %v1769, 0.0
  %v1806 = vmax.f32 %v1771, 0.0
  %v1807 = vmax.f32 %v1700, 0.0
  %v1808 = vmax.f32 %v1702, 0.0
  %v1809 = vmax.f32 %v1773, 0.0
  %v1810 = vmax.f32 %v1775, 0.0
  %v1811 = vmax.f32 %v1706, 0.0
  %v1812 = vmax.f32 %v1708, 0.0
  %v1813 = vmax.f32 %v1779, 0.0
  %v1814 = vmax.f32 %v1781, 0.0
  %v1815 = vmax.f32 %v1710, 0.0
  %v1816 = vmax.f32 %v1712, 0.0
  %v1817 = vmax.f32 %v1783, 0.0
  %v1818 = vmax.f32 %v1785, 0.0
  %v1819 = vpack.c.bf16 %v1791, %v1787
  %v1820 = vpack.c.bf16 %v1792, %v1788
  %v1821 = vpack.c.bf16 %v1793, %v1789
  %v1822 = vpack.c.bf16 %v1794, %v1790
  %v1823 = vpack.c.bf16 %v1799, %v1795
  %v1824 = vpack.c.bf16 %v1800, %v1796
  %v1825 = vpack.c.bf16 %v1801, %v1797
  %v1826 = vpack.c.bf16 %v1802, %v1798
  %v1827 = vpack.c.bf16 %v1807, %v1803
  %v1828 = vpack.c.bf16 %v1808, %v1804
  %v1829 = vpack.c.bf16 %v1809, %v1805
  %v1830 = vpack.c.bf16 %v1810, %v1806
  %v1831 = vpack.c.bf16 %v1815, %v1811
  %v1832 = vpack.c.bf16 %v1816, %v1812
  %v1833 = vpack.c.bf16 %v1817, %v1813
  %v1834 = vpack.c.bf16 %v1818, %v1814
  %v1835 = vld [vmem:[%s4 + $0x10] sm:$0xff]
  %v1836 = vld [vmem:[%s4 + $0x18] sm:$0xff]
  %v1837 = vld [vmem:[%s4 + $0x50] sm:$0xff]
  %v1838 = vld [vmem:[%s4 + $0x58] sm:$0xff]
  %v1839 = vld [vmem:[%s4 + $0x90] sm:$0xff]
  %v1840 = vld [vmem:[%s4 + $0x98] sm:$0xff]
  %v1841 = vld [vmem:[%s4 + $0xd0] sm:$0xff]
  %v1842 = vld [vmem:[%s4 + $0xd8] sm:$0xff]
  %v1851 = vunpack.c.l.b16 %v1835
  %v1852 = vunpack.c.h.b16 %v1835
  %v1853 = vunpack.c.l.b16 %v1836
  %v1854 = vunpack.c.h.b16 %v1836
  %v1855 = vunpack.c.l.b16 %v1837
  %v1856 = vunpack.c.h.b16 %v1837
  %v1857 = vunpack.c.l.b16 %v1838
  %v1858 = vunpack.c.h.b16 %v1838
  %v1859 = vunpack.c.l.b16 %v1839
  %v1860 = vunpack.c.h.b16 %v1839
  %v1861 = vunpack.c.l.b16 %v1840
  %v1862 = vunpack.c.h.b16 %v1840
  %v1863 = vunpack.c.l.b16 %v1841
  %v1864 = vunpack.c.h.b16 %v1841
  %v1865 = vunpack.c.l.b16 %v1842
  %v1866 = vunpack.c.h.b16 %v1842
  %v1867 = vpack.c.b16 %v1855, %v1851
  %v1868 = vpack.c.b16 %v1856, %v1852
  %v1869 = vpack.c.b16 %v1857, %v1853
  %v1870 = vpack.c.b16 %v1858, %v1854
  %v1871 = vpack.c.b16 %v1863, %v1859
  %v1872 = vpack.c.b16 %v1864, %v1860
  %v1873 = vpack.c.b16 %v1865, %v1861
  %v1874 = vpack.c.b16 %v1866, %v1862
  %1883 = vmatprep.subr.bf16.mxu0 %v1868
  %1884 = vmatpush1.bf16.xpose.msra.mxu0 %v1867
  %1885 = vmatprep.subr.bf16.mxu0 %v1872
  %1886 = vmatpush1.bf16.xpose.msra.mxu0 %v1871
  %1887 = vmatprep.subr.bf16.mxu0 0
  %1888 = vmatpush1.bf16.xpose.msra.mxu0 0
  %1889 = vmatprep.subr.bf16.mxu0 0
  %1890 = vmatpush1.bf16.xpose.msra.mxu0 0
  %1891 = vmatprep.subr.bf16.mxu0 0
  %1892 = vmatpush1.bf16.xpose.msra.mxu0 0
  %1893 = vmatprep.subr.bf16.mxu0 0
  %1894 = vmatpush1.bf16.xpose.msra.mxu0 0
  %1895 = vmatprep.subr.bf16.mxu0 0
  %1896 = vmatpush1.bf16.xpose.msra.mxu0 0
  %1897 = vmatprep.subr.bf16.mxu0 0
  %1898 = vmatpush1.bf16.xpose.msra.mxu0 0
  %1899 = vmatprep.subr.bf16.mxu0 0
  %1900 = vmatpush1.bf16.xpose.msra.mxu0 0
  %1901 = vmatprep.subr.bf16.mxu0 0
  %1902 = vmatpush1.bf16.xpose.msra.mxu0 0
  %1903 = vmatprep.subr.bf16.mxu0 0
  %1904 = vmatpush1.bf16.xpose.msra.mxu0 0
  %1905 = vmatprep.subr.bf16.mxu0 0
  %1906 = vmatpush1.bf16.xpose.msra.mxu0 0
  %1907 = vmatprep.subr.bf16.mxu0 0
  %1908 = vmatpush1.bf16.xpose.msra.mxu0 0
  %1909 = vmatprep.subr.bf16.mxu0 0
  %1910 = vmatpush1.bf16.xpose.msra.mxu0 0
  %1911 = vmatprep.subr.bf16.mxu0 0
  %1912 = vmatpush1.bf16.xpose.msra.mxu0 0
  %1913 = vmatprep.subr.bf16.mxu0 0
  %1914 = vmatpush1.bf16.xpose.msra.mxu0 0
  %1915 = vmatprep.mubr.bf16.mxu0 %v1820
  %1916 = vmatmul.mubr.bf16.gmra.mrb[0].mxu0 %v1819
  %v1917 = vpop.f32.mrb[0].mxu0
  %v1918 = vadd.f32 0.0, %v1917
  %v1919 = vpop.f32.mrb[0].mxu0
  %v1920 = vpop.f32.mrb[0].mxu0
  %v1921 = vadd.f32 0.0, %v1920
  %v1922 = vpop.f32.mrb[0].mxu0
  %1923 = vmatprep.mubr.bf16.mxu0 %v1824
  %1924 = vmatmul.mubr.bf16.gmra.mrb[0].mxu0 %v1823
  %v1925 = vpop.f32.mrb[0].mxu0
  %v1926 = vadd.f32 0.0, %v1925
  %v1927 = vpop.f32.mrb[0].mxu0
  %v1928 = vpop.f32.mrb[0].mxu0
  %v1929 = vadd.f32 0.0, %v1928
  %v1930 = vpop.f32.mrb[0].mxu0
  %1931 = vmatprep.mubr.bf16.mxu0 %v1828
  %1932 = vmatmul.mubr.bf16.gmra.mrb[0].mxu0 %v1827
  %v1933 = vpop.f32.mrb[0].mxu0
  %v1934 = vadd.f32 0.0, %v1933
  %v1935 = vpop.f32.mrb[0].mxu0
  %v1936 = vpop.f32.mrb[0].mxu0
  %v1937 = vadd.f32 0.0, %v1936
  %v1938 = vpop.f32.mrb[0].mxu0
  %1939 = vmatprep.mubr.bf16.mxu0 %v1832
  %1940 = vmatmul.mubr.bf16.gmra.mrb[0].mxu0 %v1831
  %v1941 = vpop.f32.mrb[0].mxu0
  %v1942 = vadd.f32 0.0, %v1941
  %v1943 = vpop.f32.mrb[0].mxu0
  %v1944 = vpop.f32.mrb[0].mxu0
  %v1945 = vadd.f32 0.0, %v1944
  %v1946 = vpop.f32.mrb[0].mxu0
  %1947 = vdwg.mxu0
  %1948 = vmatprep.subr.bf16.mxu0 %v1870
  %1949 = vmatpush1.bf16.xpose.msra.mxu0 %v1869
  %1950 = vmatprep.subr.bf16.mxu0 %v1874
  %1951 = vmatpush1.bf16.xpose.msra.mxu0 %v1873
  %1952 = vmatprep.subr.bf16.mxu0 0
  %1953 = vmatpush1.bf16.xpose.msra.mxu0 0
  %1954 = vmatprep.subr.bf16.mxu0 0
  %1955 = vmatpush1.bf16.xpose.msra.mxu0 0
  %1956 = vmatprep.subr.bf16.mxu0 0
  %1957 = vmatpush1.bf16.xpose.msra.mxu0 0
  %1958 = vmatprep.subr.bf16.mxu0 0
  %1959 = vmatpush1.bf16.xpose.msra.mxu0 0
  %1960 = vmatprep.subr.bf16.mxu0 0
  %1961 = vmatpush1.bf16.xpose.msra.mxu0 0
  %1962 = vmatprep.subr.bf16.mxu0 0
  %1963 = vmatpush1.bf16.xpose.msra.mxu0 0
  %1964 = vmatprep.subr.bf16.mxu0 0
  %1965 = vmatpush1.bf16.xpose.msra.mxu0 0
  %1966 = vmatprep.subr.bf16.mxu0 0
  %1967 = vmatpush1.bf16.xpose.msra.mxu0 0
  %1968 = vmatprep.subr.bf16.mxu0 0
  %1969 = vmatpush1.bf16.xpose.msra.mxu0 0
  %1970 = vmatprep.subr.bf16.mxu0 0
  %1971 = vmatpush1.bf16.xpose.msra.mxu0 0
  %1972 = vmatprep.subr.bf16.mxu0 0
  %1973 = vmatpush1.bf16.xpose.msra.mxu0 0
  %1974 = vmatprep.subr.bf16.mxu0 0
  %1975 = vmatpush1.bf16.xpose.msra.mxu0 0
  %1976 = vmatprep.subr.bf16.mxu0 0
  %1977 = vmatpush1.bf16.xpose.msra.mxu0 0
  %1978 = vmatprep.subr.bf16.mxu0 0
  %1979 = vmatpush1.bf16.xpose.msra.mxu0 0
  %1980 = vmatprep.mubr.bf16.mxu0 %v1822
  %1981 = vmatmul.mubr.bf16.gmra.mrb[0].mxu0 %v1821
  %v1982 = vpop.f32.mrb[0].mxu0
  %v1983 = vadd.f32 %v1918, %v1982
  %v1984 = vpop.f32.mrb[0].mxu0
  %v1985 = vpop.f32.mrb[0].mxu0
  %v1986 = vadd.f32 %v1921, %v1985
  %v1987 = vpop.f32.mrb[0].mxu0
  %1988 = vmatprep.mubr.bf16.mxu0 %v1826
  %1989 = vmatmul.mubr.bf16.gmra.mrb[0].mxu0 %v1825
  %v1990 = vpop.f32.mrb[0].mxu0
  %v1991 = vadd.f32 %v1926, %v1990
  %v1992 = vpop.f32.mrb[0].mxu0
  %v1993 = vpop.f32.mrb[0].mxu0
  %v1994 = vadd.f32 %v1929, %v1993
  %v1995 = vpop.f32.mrb[0].mxu0
  %1996 = vmatprep.mubr.bf16.mxu0 %v1830
  %1997 = vmatmul.mubr.bf16.gmra.mrb[0].mxu0 %v1829
  %v1998 = vpop.f32.mrb[0].mxu0
  %v1999 = vadd.f32 %v1934, %v1998
  %v2000 = vpop.f32.mrb[0].mxu0
  %v2001 = vpop.f32.mrb[0].mxu0
  %v2002 = vadd.f32 %v1937, %v2001
  %v2003 = vpop.f32.mrb[0].mxu0
  %2004 = vmatprep.mubr.bf16.mxu0 %v1834
  %2005 = vmatmul.mubr.bf16.gmra.mrb[0].mxu0 %v1833
  %v2006 = vpop.f32.mrb[0].mxu0
  %v2007 = vadd.f32 %v1942, %v2006
  %v2008 = vpop.f32.mrb[0].mxu0
  %v2009 = vpop.f32.mrb[0].mxu0
  %v2010 = vadd.f32 %v1945, %v2009
  %v2011 = vpop.f32.mrb[0].mxu0
  %2012 = vdwg.mxu0
  %v2021 = vunpack.c.l.b16 %v1563
  %v2022 = vunpack.c.h.b16 %v1563
  %v2023 = vunpack.c.l.b16 %v1564
  %v2024 = vunpack.c.h.b16 %v1564
  %v2025 = vunpack.c.l.b16 %v1565
  %v2026 = vunpack.c.h.b16 %v1565
  %v2027 = vunpack.c.l.b16 %v1566
  %v2028 = vunpack.c.h.b16 %v1566
  %v2029 = vunpack.c.l.b16 %v1567
  %v2030 = vunpack.c.h.b16 %v1567
  %v2031 = vunpack.c.l.b16 %v1568
  %v2032 = vunpack.c.h.b16 %v1568
  %v2033 = vunpack.c.l.b16 %v1569
  %v2034 = vunpack.c.h.b16 %v1569
  %v2035 = vunpack.c.l.b16 %v1570
  %v2036 = vunpack.c.h.b16 %v1570
  %v2037 = vpack.c.b16 %v2025, %v2021
  %v2038 = vpack.c.b16 %v2026, %v2022
  %v2039 = vpack.c.b16 %v2027, %v2023
  %v2040 = vpack.c.b16 %v2028, %v2024
  %v2041 = vpack.c.b16 %v2033, %v2029
  %v2042 = vpack.c.b16 %v2034, %v2030
  %v2043 = vpack.c.b16 %v2035, %v2031
  %v2044 = vpack.c.b16 %v2036, %v2032
  %2053 = vmatprep.subr.bf16.mxu0 %v2038
  %2054 = vmatpush1.bf16.xpose.msra.mxu0 %v2037
  %2055 = vmatprep.subr.bf16.mxu0 %v2042
  %2056 = vmatpush1.bf16.xpose.msra.mxu0 %v2041
  %2057 = vmatprep.subr.bf16.mxu0 0
  %2058 = vmatpush1.bf16.xpose.msra.mxu0 0
  %2059 = vmatprep.subr.bf16.mxu0 0
  %2060 = vmatpush1.bf16.xpose.msra.mxu0 0
  %2061 = vmatprep.subr.bf16.mxu0 0
  %2062 = vmatpush1.bf16.xpose.msra.mxu0 0
  %2063 = vmatprep.subr.bf16.mxu0 0
  %2064 = vmatpush1.bf16.xpose.msra.mxu0 0
  %2065 = vmatprep.subr.bf16.mxu0 0
  %2066 = vmatpush1.bf16.xpose.msra.mxu0 0
  %2067 = vmatprep.subr.bf16.mxu0 0
  %2068 = vmatpush1.bf16.xpose.msra.mxu0 0
  %2069 = vmatprep.subr.bf16.mxu0 0
  %2070 = vmatpush1.bf16.xpose.msra.mxu0 0
  %2071 = vmatprep.subr.bf16.mxu0 0
  %2072 = vmatpush1.bf16.xpose.msra.mxu0 0
  %2073 = vmatprep.subr.bf16.mxu0 0
  %2074 = vmatpush1.bf16.xpose.msra.mxu0 0
  %2075 = vmatprep.subr.bf16.mxu0 0
  %2076 = vmatpush1.bf16.xpose.msra.mxu0 0
  %2077 = vmatprep.subr.bf16.mxu0 0
  %2078 = vmatpush1.bf16.xpose.msra.mxu0 0
  %2079 = vmatprep.subr.bf16.mxu0 0
  %2080 = vmatpush1.bf16.xpose.msra.mxu0 0
  %2081 = vmatprep.subr.bf16.mxu0 0
  %2082 = vmatpush1.bf16.xpose.msra.mxu0 0
  %2083 = vmatprep.subr.bf16.mxu0 0
  %2084 = vmatpush1.bf16.xpose.msra.mxu0 0
  %2085 = vmatprep.mubr.bf16.mxu0 %v1548
  %2086 = vmatmul.mubr.bf16.gmra.mrb[0].mxu0 %v1547
  %v2087 = vpop.f32.mrb[0].mxu0
  %v2088 = vadd.f32 %v1983, %v2087
  %v2089 = vpop.f32.mrb[0].mxu0
  %v2090 = vpop.f32.mrb[0].mxu0
  %v2091 = vadd.f32 %v1986, %v2090
  %v2092 = vpop.f32.mrb[0].mxu0
  %2093 = vmatprep.mubr.bf16.mxu0 %v1552
  %2094 = vmatmul.mubr.bf16.gmra.mrb[0].mxu0 %v1551
  %v2095 = vpop.f32.mrb[0].mxu0
  %v2096 = vadd.f32 %v1991, %v2095
  %v2097 = vpop.f32.mrb[0].mxu0
  %v2098 = vpop.f32.mrb[0].mxu0
  %v2099 = vadd.f32 %v1994, %v2098
  %v2100 = vpop.f32.mrb[0].mxu0
  %2101 = vmatprep.mubr.bf16.mxu0 %v1556
  %2102 = vmatmul.mubr.bf16.gmra.mrb[0].mxu0 %v1555
  %v2103 = vpop.f32.mrb[0].mxu0
  %v2104 = vadd.f32 %v1999, %v2103
  %v2105 = vpop.f32.mrb[0].mxu0
  %v2106 = vpop.f32.mrb[0].mxu0
  %v2107 = vadd.f32 %v2002, %v2106
  %v2108 = vpop.f32.mrb[0].mxu0
  %2109 = vmatprep.mubr.bf16.mxu0 %v1560
  %2110 = vmatmul.mubr.bf16.gmra.mrb[0].mxu0 %v1559
  %v2111 = vpop.f32.mrb[0].mxu0
  %v2112 = vadd.f32 %v2007, %v2111
  %v2113 = vpop.f32.mrb[0].mxu0
  %v2114 = vpop.f32.mrb[0].mxu0
  %v2115 = vadd.f32 %v2010, %v2114
  %v2116 = vpop.f32.mrb[0].mxu0
  %2117 = vdwg.mxu0
  %2118 = vmatprep.subr.bf16.mxu0 %v2040
  %2119 = vmatpush1.bf16.xpose.msra.mxu0 %v2039
  %2120 = vmatprep.subr.bf16.mxu0 %v2044
  %2121 = vmatpush1.bf16.xpose.msra.mxu0 %v2043
  %2122 = vmatprep.subr.bf16.mxu0 0
  %2123 = vmatpush1.bf16.xpose.msra.mxu0 0
  %2124 = vmatprep.subr.bf16.mxu0 0
  %2125 = vmatpush1.bf16.xpose.msra.mxu0 0
  %2126 = vmatprep.subr.bf16.mxu0 0
  %2127 = vmatpush1.bf16.xpose.msra.mxu0 0
  %2128 = vmatprep.subr.bf16.mxu0 0
  %2129 = vmatpush1.bf16.xpose.msra.mxu0 0
  %2130 = vmatprep.subr.bf16.mxu0 0
  %2131 = vmatpush1.bf16.xpose.msra.mxu0 0
  %2132 = vmatprep.subr.bf16.mxu0 0
  %2133 = vmatpush1.bf16.xpose.msra.mxu0 0
  %2134 = vmatprep.subr.bf16.mxu0 0
  %2135 = vmatpush1.bf16.xpose.msra.mxu0 0
  %2136 = vmatprep.subr.bf16.mxu0 0
  %2137 = vmatpush1.bf16.xpose.msra.mxu0 0
  %2138 = vmatprep.subr.bf16.mxu0 0
  %2139 = vmatpush1.bf16.xpose.msra.mxu0 0
  %2140 = vmatprep.subr.bf16.mxu0 0
  %2141 = vmatpush1.bf16.xpose.msra.mxu0 0
  %2142 = vmatprep.subr.bf16.mxu0 0
  %2143 = vmatpush1.bf16.xpose.msra.mxu0 0
  %2144 = vmatprep.subr.bf16.mxu0 0
  %2145 = vmatpush1.bf16.xpose.msra.mxu0 0
  %2146 = vmatprep.subr.bf16.mxu0 0
  %2147 = vmatpush1.bf16.xpose.msra.mxu0 0
  %2148 = vmatprep.subr.bf16.mxu0 0
  %2149 = vmatpush1.bf16.xpose.msra.mxu0 0
  %2150 = vmatprep.mubr.bf16.mxu0 %v1550
  %2151 = vmatmul.mubr.bf16.gmra.mrb[0].mxu0 %v1549
  %v2152 = vpop.f32.mrb[0].mxu0
  %v2153 = vadd.f32 %v2088, %v2152
  %v2154 = vpop.f32.mrb[0].mxu0
  %v2155 = vpop.f32.mrb[0].mxu0
  %v2156 = vadd.f32 %v2091, %v2155
  %v2157 = vpop.f32.mrb[0].mxu0
  %2158 = vmatprep.mubr.bf16.mxu0 %v1554
  %2159 = vmatmul.mubr.bf16.gmra.mrb[0].mxu0 %v1553
  %v2160 = vpop.f32.mrb[0].mxu0
  %v2161 = vadd.f32 %v2096, %v2160
  %v2162 = vpop.f32.mrb[0].mxu0
  %v2163 = vpop.f32.mrb[0].mxu0
  %v2164 = vadd.f32 %v2099, %v2163
  %v2165 = vpop.f32.mrb[0].mxu0
  %2166 = vmatprep.mubr.bf16.mxu0 %v1558
  %2167 = vmatmul.mubr.bf16.gmra.mrb[0].mxu0 %v1557
  %v2168 = vpop.f32.mrb[0].mxu0
  %v2169 = vadd.f32 %v2104, %v2168
  %v2170 = vpop.f32.mrb[0].mxu0
  %v2171 = vpop.f32.mrb[0].mxu0
  %v2172 = vadd.f32 %v2107, %v2171
  %v2173 = vpop.f32.mrb[0].mxu0
  %2174 = vmatprep.mubr.bf16.mxu0 %v1562
  %2175 = vmatmul.mubr.bf16.gmra.mrb[0].mxu0 %v1561
  %v2176 = vpop.f32.mrb[0].mxu0
  %v2177 = vadd.f32 %v2112, %v2176
  %v2178 = vpop.f32.mrb[0].mxu0
  %v2179 = vpop.f32.mrb[0].mxu0
  %v2180 = vadd.f32 %v2115, %v2179
  %v2181 = vpop.f32.mrb[0].mxu0
  %2182 = vdwg.mxu0
  %v2183 = vld [vmem:[%s3 + $0x20] sm:$0xff]
  %v2184 = vld [vmem:[%s3 + $0x28] sm:$0xff]
  %v2185 = vld [vmem:[%s3 + $0x60] sm:$0xff]
  %v2186 = vld [vmem:[%s3 + $0x68] sm:$0xff]
  %v2187 = vld [vmem:[%s3 + $0xa0] sm:$0xff]
  %v2188 = vld [vmem:[%s3 + $0xa8] sm:$0xff]
  %v2189 = vld [vmem:[%s3 + $0xe0] sm:$0xff]
  %v2190 = vld [vmem:[%s3 + $0xe8] sm:$0xff]
  %v2191 = vld [vmem:[%s5 + $0x8] sm:$0xf]
  %v2193 = vlaneseq
  %v2194 = vshrl.u32 %v2193, 7
  %v2195 = vsub.s32 0, %v2194
  %v2196 = vrot.slane %v2191, %v2195
  %v2197 = vlaneseq
  %v2198 = vshrl.u32 %v2197, 7
  %v2199 = vsub.s32 1, %v2198
  %v2200 = vrot.slane %v2191, %v2199
  %v2201 = vlaneseq
  %v2202 = vshrl.u32 %v2201, 7
  %v2203 = vsub.s32 2, %v2202
  %v2204 = vrot.slane %v2191, %v2203
  %v2205 = vlaneseq
  %v2206 = vshrl.u32 %v2205, 7
  %v2207 = vsub.s32 3, %v2206
  %v2208 = vrot.slane %v2191, %v2207
  %v2221 = vunpack.c.l.b16 %v2183
  %v2222 = vunpack.c.h.b16 %v2183
  %v2223 = vunpack.c.l.b16 %v2184
  %v2224 = vunpack.c.h.b16 %v2184
  %v2225 = vunpack.c.l.b16 %v2185
  %v2226 = vunpack.c.h.b16 %v2185
  %v2227 = vunpack.c.l.b16 %v2186
  %v2228 = vunpack.c.h.b16 %v2186
  %v2229 = vunpack.c.l.b16 %v2187
  %v2230 = vunpack.c.h.b16 %v2187
  %v2231 = vunpack.c.l.b16 %v2188
  %v2232 = vunpack.c.h.b16 %v2188
  %v2233 = vunpack.c.l.b16 %v2189
  %v2234 = vunpack.c.h.b16 %v2189
  %v2235 = vunpack.c.l.b16 %v2190
  %v2236 = vunpack.c.h.b16 %v2190
  %v2237 = vpack.c.b16 %v2225, %v2221
  %v2238 = vpack.c.b16 %v2226, %v2222
  %v2239 = vpack.c.b16 %v2227, %v2223
  %v2240 = vpack.c.b16 %v2228, %v2224
  %v2241 = vpack.c.b16 %v2233, %v2229
  %v2242 = vpack.c.b16 %v2234, %v2230
  %v2243 = vpack.c.b16 %v2235, %v2231
  %v2244 = vpack.c.b16 %v2236, %v2232
  %2253 = vmatprep.subr.bf16.mxu0 %v2238
  %2254 = vmatpush1.bf16.msra.mxu0 %v2237
  %2255 = vmatprep.subr.bf16.mxu0 %v2242
  %2256 = vmatpush1.bf16.msra.mxu0 %v2241
  %2257 = vmatprep.subr.bf16.mxu0 0
  %2258 = vmatpush1.bf16.msra.mxu0 0
  %2259 = vmatprep.subr.bf16.mxu0 0
  %2260 = vmatpush1.bf16.msra.mxu0 0
  %2261 = vmatprep.subr.bf16.mxu0 0
  %2262 = vmatpush1.bf16.msra.mxu0 0
  %2263 = vmatprep.subr.bf16.mxu0 0
  %2264 = vmatpush1.bf16.msra.mxu0 0
  %2265 = vmatprep.subr.bf16.mxu0 0
  %2266 = vmatpush1.bf16.msra.mxu0 0
  %2267 = vmatprep.subr.bf16.mxu0 0
  %2268 = vmatpush1.bf16.msra.mxu0 0
  %2269 = vmatprep.subr.bf16.mxu0 0
  %2270 = vmatpush1.bf16.msra.mxu0 0
  %2271 = vmatprep.subr.bf16.mxu0 0
  %2272 = vmatpush1.bf16.msra.mxu0 0
  %2273 = vmatprep.subr.bf16.mxu0 0
  %2274 = vmatpush1.bf16.msra.mxu0 0
  %2275 = vmatprep.subr.bf16.mxu0 0
  %2276 = vmatpush1.bf16.msra.mxu0 0
  %2277 = vmatprep.subr.bf16.mxu0 0
  %2278 = vmatpush1.bf16.msra.mxu0 0
  %2279 = vmatprep.subr.bf16.mxu0 0
  %2280 = vmatpush1.bf16.msra.mxu0 0
  %2281 = vmatprep.subr.bf16.mxu0 0
  %2282 = vmatpush1.bf16.msra.mxu0 0
  %2283 = vmatprep.subr.bf16.mxu0 0
  %2284 = vmatpush1.bf16.msra.mxu0 0
  %2285 = vmatprep.mubr.bf16.mxu0 0
  %2286 = vmatmul.mubr.bf16.gmra.mrb[0].mxu0 %v1358
  %v2287 = vpop.f32.mrb[0].mxu0
  %v2288 = vadd.f32 %v2196, %v2287
  %v2289 = vpop.f32.mrb[0].mxu0
  %v2290 = vadd.f32 %v2200, %v2289
  %v2291 = vpop.f32.mrb[0].mxu0
  %v2292 = vadd.f32 %v2196, %v2291
  %v2293 = vpop.f32.mrb[0].mxu0
  %v2294 = vadd.f32 %v2200, %v2293
  %2295 = vmatprep.mubr.bf16.mxu0 0
  %2296 = vmatmul.mubr.bf16.gmra.mrb[0].mxu0 %v1361
  %v2297 = vpop.f32.mrb[0].mxu0
  %v2298 = vadd.f32 %v2196, %v2297
  %v2299 = vpop.f32.mrb[0].mxu0
  %v2300 = vadd.f32 %v2200, %v2299
  %v2301 = vpop.f32.mrb[0].mxu0
  %v2302 = vadd.f32 %v2196, %v2301
  %v2303 = vpop.f32.mrb[0].mxu0
  %v2304 = vadd.f32 %v2200, %v2303
  %2305 = vmatprep.mubr.bf16.mxu0 0
  %2306 = vmatmul.mubr.bf16.gmra.mrb[0].mxu0 %v1364
  %v2307 = vpop.f32.mrb[0].mxu0
  %v2308 = vadd.f32 %v2196, %v2307
  %v2309 = vpop.f32.mrb[0].mxu0
  %v2310 = vadd.f32 %v2200, %v2309
  %v2311 = vpop.f32.mrb[0].mxu0
  %v2312 = vadd.f32 %v2196, %v2311
  %v2313 = vpop.f32.mrb[0].mxu0
  %v2314 = vadd.f32 %v2200, %v2313
  %2315 = vmatprep.mubr.bf16.mxu0 0
  %2316 = vmatmul.mubr.bf16.gmra.mrb[0].mxu0 %v1367
  %v2317 = vpop.f32.mrb[0].mxu0
  %v2318 = vadd.f32 %v2196, %v2317
  %v2319 = vpop.f32.mrb[0].mxu0
  %v2320 = vadd.f32 %v2200, %v2319
  %v2321 = vpop.f32.mrb[0].mxu0
  %v2322 = vadd.f32 %v2196, %v2321
  %v2323 = vpop.f32.mrb[0].mxu0
  %v2324 = vadd.f32 %v2200, %v2323
  %2325 = vdwg.mxu0
  %2326 = vmatprep.subr.bf16.mxu0 %v2240
  %2327 = vmatpush1.bf16.msra.mxu0 %v2239
  %2328 = vmatprep.subr.bf16.mxu0 %v2244
  %2329 = vmatpush1.bf16.msra.mxu0 %v2243
  %2330 = vmatprep.subr.bf16.mxu0 0
  %2331 = vmatpush1.bf16.msra.mxu0 0
  %2332 = vmatprep.subr.bf16.mxu0 0
  %2333 = vmatpush1.bf16.msra.mxu0 0
  %2334 = vmatprep.subr.bf16.mxu0 0
  %2335 = vmatpush1.bf16.msra.mxu0 0
  %2336 = vmatprep.subr.bf16.mxu0 0
  %2337 = vmatpush1.bf16.msra.mxu0 0
  %2338 = vmatprep.subr.bf16.mxu0 0
  %2339 = vmatpush1.bf16.msra.mxu0 0
  %2340 = vmatprep.subr.bf16.mxu0 0
  %2341 = vmatpush1.bf16.msra.mxu0 0
  %2342 = vmatprep.subr.bf16.mxu0 0
  %2343 = vmatpush1.bf16.msra.mxu0 0
  %2344 = vmatprep.subr.bf16.mxu0 0
  %2345 = vmatpush1.bf16.msra.mxu0 0
  %2346 = vmatprep.subr.bf16.mxu0 0
  %2347 = vmatpush1.bf16.msra.mxu0 0
  %2348 = vmatprep.subr.bf16.mxu0 0
  %2349 = vmatpush1.bf16.msra.mxu0 0
  %2350 = vmatprep.subr.bf16.mxu0 0
  %2351 = vmatpush1.bf16.msra.mxu0 0
  %2352 = vmatprep.subr.bf16.mxu0 0
  %2353 = vmatpush1.bf16.msra.mxu0 0
  %2354 = vmatprep.subr.bf16.mxu0 0
  %2355 = vmatpush1.bf16.msra.mxu0 0
  %2356 = vmatprep.subr.bf16.mxu0 0
  %2357 = vmatpush1.bf16.msra.mxu0 0
  %2358 = vmatprep.mubr.bf16.mxu0 0
  %2359 = vmatmul.mubr.bf16.gmra.mrb[0].mxu0 %v1358
  %v2360 = vpop.f32.mrb[0].mxu0
  %v2361 = vadd.f32 %v2204, %v2360
  %v2362 = vpop.f32.mrb[0].mxu0
  %v2363 = vadd.f32 %v2208, %v2362
  %v2364 = vpop.f32.mrb[0].mxu0
  %v2365 = vadd.f32 %v2204, %v2364
  %v2366 = vpop.f32.mrb[0].mxu0
  %v2367 = vadd.f32 %v2208, %v2366
  %2368 = vmatprep.mubr.bf16.mxu0 0
  %2369 = vmatmul.mubr.bf16.gmra.mrb[0].mxu0 %v1361
  %v2370 = vpop.f32.mrb[0].mxu0
  %v2371 = vadd.f32 %v2204, %v2370
  %v2372 = vpop.f32.mrb[0].mxu0
  %v2373 = vadd.f32 %v2208, %v2372
  %v2374 = vpop.f32.mrb[0].mxu0
  %v2375 = vadd.f32 %v2204, %v2374
  %v2376 = vpop.f32.mrb[0].mxu0
  %v2377 = vadd.f32 %v2208, %v2376
  %2378 = vmatprep.mubr.bf16.mxu0 0
  %2379 = vmatmul.mubr.bf16.gmra.mrb[0].mxu0 %v1364
  %v2380 = vpop.f32.mrb[0].mxu0
  %v2381 = vadd.f32 %v2204, %v2380
  %v2382 = vpop.f32.mrb[0].mxu0
  %v2383 = vadd.f32 %v2208, %v2382
  %v2384 = vpop.f32.mrb[0].mxu0
  %v2385 = vadd.f32 %v2204, %v2384
  %v2386 = vpop.f32.mrb[0].mxu0
  %v2387 = vadd.f32 %v2208, %v2386
  %2388 = vmatprep.mubr.bf16.mxu0 0
  %2389 = vmatmul.mubr.bf16.gmra.mrb[0].mxu0 %v1367
  %v2390 = vpop.f32.mrb[0].mxu0
  %v2391 = vadd.f32 %v2204, %v2390
  %v2392 = vpop.f32.mrb[0].mxu0
  %v2393 = vadd.f32 %v2208, %v2392
  %v2394 = vpop.f32.mrb[0].mxu0
  %v2395 = vadd.f32 %v2204, %v2394
  %v2396 = vpop.f32.mrb[0].mxu0
  %v2397 = vadd.f32 %v2208, %v2396
  %2398 = vdwg.mxu0
  %v2399 = vmax.f32 %v2288, 0.0
  %v2400 = vmax.f32 %v2290, 0.0
  %v2401 = vmax.f32 %v2361, 0.0
  %v2402 = vmax.f32 %v2363, 0.0
  %v2403 = vmax.f32 %v2292, 0.0
  %v2404 = vmax.f32 %v2294, 0.0
  %v2405 = vmax.f32 %v2365, 0.0
  %v2406 = vmax.f32 %v2367, 0.0
  %v2407 = vmax.f32 %v2298, 0.0
  %v2408 = vmax.f32 %v2300, 0.0
  %v2409 = vmax.f32 %v2371, 0.0
  %v2410 = vmax.f32 %v2373, 0.0
  %v2411 = vmax.f32 %v2302, 0.0
  %v2412 = vmax.f32 %v2304, 0.0
  %v2413 = vmax.f32 %v2375, 0.0
  %v2414 = vmax.f32 %v2377, 0.0
  %v2415 = vmax.f32 %v2308, 0.0
  %v2416 = vmax.f32 %v2310, 0.0
  %v2417 = vmax.f32 %v2381, 0.0
  %v2418 = vmax.f32 %v2383, 0.0
  %v2419 = vmax.f32 %v2312, 0.0
  %v2420 = vmax.f32 %v2314, 0.0
  %v2421 = vmax.f32 %v2385, 0.0
  %v2422 = vmax.f32 %v2387, 0.0
  %v2423 = vmax.f32 %v2318, 0.0
  %v2424 = vmax.f32 %v2320, 0.0
  %v2425 = vmax.f32 %v2391, 0.0
  %v2426 = vmax.f32 %v2393, 0.0
  %v2427 = vmax.f32 %v2322, 0.0
  %v2428 = vmax.f32 %v2324, 0.0
  %v2429 = vmax.f32 %v2395, 0.0
  %v2430 = vmax.f32 %v2397, 0.0
  %v2431 = vpack.c.bf16 %v2403, %v2399
  %v2432 = vpack.c.bf16 %v2404, %v2400
  %v2433 = vpack.c.bf16 %v2405, %v2401
  %v2434 = vpack.c.bf16 %v2406, %v2402
  %v2435 = vpack.c.bf16 %v2411, %v2407
  %v2436 = vpack.c.bf16 %v2412, %v2408
  %v2437 = vpack.c.bf16 %v2413, %v2409
  %v2438 = vpack.c.bf16 %v2414, %v2410
  %v2439 = vpack.c.bf16 %v2419, %v2415
  %v2440 = vpack.c.bf16 %v2420, %v2416
  %v2441 = vpack.c.bf16 %v2421, %v2417
  %v2442 = vpack.c.bf16 %v2422, %v2418
  %v2443 = vpack.c.bf16 %v2427, %v2423
  %v2444 = vpack.c.bf16 %v2428, %v2424
  %v2445 = vpack.c.bf16 %v2429, %v2425
  %v2446 = vpack.c.bf16 %v2430, %v2426
  %v2447 = vld [vmem:[%s4 + $0x20] sm:$0xff]
  %v2448 = vld [vmem:[%s4 + $0x28] sm:$0xff]
  %v2449 = vld [vmem:[%s4 + $0x60] sm:$0xff]
  %v2450 = vld [vmem:[%s4 + $0x68] sm:$0xff]
  %v2451 = vld [vmem:[%s4 + $0xa0] sm:$0xff]
  %v2452 = vld [vmem:[%s4 + $0xa8] sm:$0xff]
  %v2453 = vld [vmem:[%s4 + $0xe0] sm:$0xff]
  %v2454 = vld [vmem:[%s4 + $0xe8] sm:$0xff]
  %v2463 = vunpack.c.l.b16 %v2447
  %v2464 = vunpack.c.h.b16 %v2447
  %v2465 = vunpack.c.l.b16 %v2448
  %v2466 = vunpack.c.h.b16 %v2448
  %v2467 = vunpack.c.l.b16 %v2449
  %v2468 = vunpack.c.h.b16 %v2449
  %v2469 = vunpack.c.l.b16 %v2450
  %v2470 = vunpack.c.h.b16 %v2450
  %v2471 = vunpack.c.l.b16 %v2451
  %v2472 = vunpack.c.h.b16 %v2451
  %v2473 = vunpack.c.l.b16 %v2452
  %v2474 = vunpack.c.h.b16 %v2452
  %v2475 = vunpack.c.l.b16 %v2453
  %v2476 = vunpack.c.h.b16 %v2453
  %v2477 = vunpack.c.l.b16 %v2454
  %v2478 = vunpack.c.h.b16 %v2454
  %v2479 = vpack.c.b16 %v2467, %v2463
  %v2480 = vpack.c.b16 %v2468, %v2464
  %v2481 = vpack.c.b16 %v2469, %v2465
  %v2482 = vpack.c.b16 %v2470, %v2466
  %v2483 = vpack.c.b16 %v2475, %v2471
  %v2484 = vpack.c.b16 %v2476, %v2472
  %v2485 = vpack.c.b16 %v2477, %v2473
  %v2486 = vpack.c.b16 %v2478, %v2474
  %2495 = vmatprep.subr.bf16.mxu0 %v2480
  %2496 = vmatpush1.bf16.xpose.msra.mxu0 %v2479
  %2497 = vmatprep.subr.bf16.mxu0 %v2484
  %2498 = vmatpush1.bf16.xpose.msra.mxu0 %v2483
  %2499 = vmatprep.subr.bf16.mxu0 0
  %2500 = vmatpush1.bf16.xpose.msra.mxu0 0
  %2501 = vmatprep.subr.bf16.mxu0 0
  %2502 = vmatpush1.bf16.xpose.msra.mxu0 0
  %2503 = vmatprep.subr.bf16.mxu0 0
  %2504 = vmatpush1.bf16.xpose.msra.mxu0 0
  %2505 = vmatprep.subr.bf16.mxu0 0
  %2506 = vmatpush1.bf16.xpose.msra.mxu0 0
  %2507 = vmatprep.subr.bf16.mxu0 0
  %2508 = vmatpush1.bf16.xpose.msra.mxu0 0
  %2509 = vmatprep.subr.bf16.mxu0 0
  %2510 = vmatpush1.bf16.xpose.msra.mxu0 0
  %2511 = vmatprep.subr.bf16.mxu0 0
  %2512 = vmatpush1.bf16.xpose.msra.mxu0 0
  %2513 = vmatprep.subr.bf16.mxu0 0
  %2514 = vmatpush1.bf16.xpose.msra.mxu0 0
  %2515 = vmatprep.subr.bf16.mxu0 0
  %2516 = vmatpush1.bf16.xpose.msra.mxu0 0
  %2517 = vmatprep.subr.bf16.mxu0 0
  %2518 = vmatpush1.bf16.xpose.msra.mxu0 0
  %2519 = vmatprep.subr.bf16.mxu0 0
  %2520 = vmatpush1.bf16.xpose.msra.mxu0 0
  %2521 = vmatprep.subr.bf16.mxu0 0
  %2522 = vmatpush1.bf16.xpose.msra.mxu0 0
  %2523 = vmatprep.subr.bf16.mxu0 0
  %2524 = vmatpush1.bf16.xpose.msra.mxu0 0
  %2525 = vmatprep.subr.bf16.mxu0 0
  %2526 = vmatpush1.bf16.xpose.msra.mxu0 0
  %2527 = vmatprep.mubr.bf16.mxu0 %v2432
  %2528 = vmatmul.mubr.bf16.gmra.mrb[0].mxu0 %v2431
  %v2529 = vpop.f32.mrb[0].mxu0
  %v2530 = vadd.f32 0.0, %v2529
  %v2531 = vpop.f32.mrb[0].mxu0
  %v2532 = vpop.f32.mrb[0].mxu0
  %v2533 = vadd.f32 0.0, %v2532
  %v2534 = vpop.f32.mrb[0].mxu0
  %2535 = vmatprep.mubr.bf16.mxu0 %v2436
  %2536 = vmatmul.mubr.bf16.gmra.mrb[0].mxu0 %v2435
  %v2537 = vpop.f32.mrb[0].mxu0
  %v2538 = vadd.f32 0.0, %v2537
  %v2539 = vpop.f32.mrb[0].mxu0
  %v2540 = vpop.f32.mrb[0].mxu0
  %v2541 = vadd.f32 0.0, %v2540
  %v2542 = vpop.f32.mrb[0].mxu0
  %2543 = vmatprep.mubr.bf16.mxu0 %v2440
  %2544 = vmatmul.mubr.bf16.gmra.mrb[0].mxu0 %v2439
  %v2545 = vpop.f32.mrb[0].mxu0
  %v2546 = vadd.f32 0.0, %v2545
  %v2547 = vpop.f32.mrb[0].mxu0
  %v2548 = vpop.f32.mrb[0].mxu0
  %v2549 = vadd.f32 0.0, %v2548
  %v2550 = vpop.f32.mrb[0].mxu0
  %2551 = vmatprep.mubr.bf16.mxu0 %v2444
  %2552 = vmatmul.mubr.bf16.gmra.mrb[0].mxu0 %v2443
  %v2553 = vpop.f32.mrb[0].mxu0
  %v2554 = vadd.f32 0.0, %v2553
  %v2555 = vpop.f32.mrb[0].mxu0
  %v2556 = vpop.f32.mrb[0].mxu0
  %v2557 = vadd.f32 0.0, %v2556
  %v2558 = vpop.f32.mrb[0].mxu0
  %2559 = vdwg.mxu0
  %2560 = vmatprep.subr.bf16.mxu0 %v2482
  %2561 = vmatpush1.bf16.xpose.msra.mxu0 %v2481
  %2562 = vmatprep.subr.bf16.mxu0 %v2486
  %2563 = vmatpush1.bf16.xpose.msra.mxu0 %v2485
  %2564 = vmatprep.subr.bf16.mxu0 0
  %2565 = vmatpush1.bf16.xpose.msra.mxu0 0
  %2566 = vmatprep.subr.bf16.mxu0 0
  %2567 = vmatpush1.bf16.xpose.msra.mxu0 0
  %2568 = vmatprep.subr.bf16.mxu0 0
  %2569 = vmatpush1.bf16.xpose.msra.mxu0 0
  %2570 = vmatprep.subr.bf16.mxu0 0
  %2571 = vmatpush1.bf16.xpose.msra.mxu0 0
  %2572 = vmatprep.subr.bf16.mxu0 0
  %2573 = vmatpush1.bf16.xpose.msra.mxu0 0
  %2574 = vmatprep.subr.bf16.mxu0 0
  %2575 = vmatpush1.bf16.xpose.msra.mxu0 0
  %2576 = vmatprep.subr.bf16.mxu0 0
  %2577 = vmatpush1.bf16.xpose.msra.mxu0 0
  %2578 = vmatprep.subr.bf16.mxu0 0
  %2579 = vmatpush1.bf16.xpose.msra.mxu0 0
  %2580 = vmatprep.subr.bf16.mxu0 0
  %2581 = vmatpush1.bf16.xpose.msra.mxu0 0
  %2582 = vmatprep.subr.bf16.mxu0 0
  %2583 = vmatpush1.bf16.xpose.msra.mxu0 0
  %2584 = vmatprep.subr.bf16.mxu0 0
  %2585 = vmatpush1.bf16.xpose.msra.mxu0 0
  %2586 = vmatprep.subr.bf16.mxu0 0
  %2587 = vmatpush1.bf16.xpose.msra.mxu0 0
  %2588 = vmatprep.subr.bf16.mxu0 0
  %2589 = vmatpush1.bf16.xpose.msra.mxu0 0
  %2590 = vmatprep.subr.bf16.mxu0 0
  %2591 = vmatpush1.bf16.xpose.msra.mxu0 0
  %2592 = vmatprep.mubr.bf16.mxu0 %v2434
  %2593 = vmatmul.mubr.bf16.gmra.mrb[0].mxu0 %v2433
  %v2594 = vpop.f32.mrb[0].mxu0
  %v2595 = vadd.f32 %v2530, %v2594
  %v2596 = vpop.f32.mrb[0].mxu0
  %v2597 = vpop.f32.mrb[0].mxu0
  %v2598 = vadd.f32 %v2533, %v2597
  %v2599 = vpop.f32.mrb[0].mxu0
  %2600 = vmatprep.mubr.bf16.mxu0 %v2438
  %2601 = vmatmul.mubr.bf16.gmra.mrb[0].mxu0 %v2437
  %v2602 = vpop.f32.mrb[0].mxu0
  %v2603 = vadd.f32 %v2538, %v2602
  %v2604 = vpop.f32.mrb[0].mxu0
  %v2605 = vpop.f32.mrb[0].mxu0
  %v2606 = vadd.f32 %v2541, %v2605
  %v2607 = vpop.f32.mrb[0].mxu0
  %2608 = vmatprep.mubr.bf16.mxu0 %v2442
  %2609 = vmatmul.mubr.bf16.gmra.mrb[0].mxu0 %v2441
  %v2610 = vpop.f32.mrb[0].mxu0
  %v2611 = vadd.f32 %v2546, %v2610
  %v2612 = vpop.f32.mrb[0].mxu0
  %v2613 = vpop.f32.mrb[0].mxu0
  %v2614 = vadd.f32 %v2549, %v2613
  %v2615 = vpop.f32.mrb[0].mxu0
  %2616 = vmatprep.mubr.bf16.mxu0 %v2446
  %2617 = vmatmul.mubr.bf16.gmra.mrb[0].mxu0 %v2445
  %v2618 = vpop.f32.mrb[0].mxu0
  %v2619 = vadd.f32 %v2554, %v2618
  %v2620 = vpop.f32.mrb[0].mxu0
  %v2621 = vpop.f32.mrb[0].mxu0
  %v2622 = vadd.f32 %v2557, %v2621
  %v2623 = vpop.f32.mrb[0].mxu0
  %2624 = vdwg.mxu0
  %v2625 = vadd.f32 %v2153, %v2595
  %v2626 = vadd.f32 %v2156, %v2598
  %v2627 = vadd.f32 %v2161, %v2603
  %v2628 = vadd.f32 %v2164, %v2606
  %v2629 = vadd.f32 %v2169, %v2611
  %v2630 = vadd.f32 %v2172, %v2614
  %v2631 = vadd.f32 %v2177, %v2619
  %v2632 = vadd.f32 %v2180, %v2622
  %v2633 = vld [vmem:[%s3 + $0x30] sm:$0xff]
  %v2634 = vld [vmem:[%s3 + $0x38] sm:$0xff]
  %v2635 = vld [vmem:[%s3 + $0x70] sm:$0xff]
  %v2636 = vld [vmem:[%s3 + $0x78] sm:$0xff]
  %v2637 = vld [vmem:[%s3 + $0xb0] sm:$0xff]
  %v2638 = vld [vmem:[%s3 + $0xb8] sm:$0xff]
  %v2639 = vld [vmem:[%s3 + $0xf0] sm:$0xff]
  %v2640 = vld [vmem:[%s3 + $0xf8] sm:$0xff]
  %v2641 = vld [vmem:[%s5 + $0xc] sm:$0xf]
  %v2643 = vlaneseq
  %v2644 = vshrl.u32 %v2643, 7
  %v2645 = vsub.s32 0, %v2644
  %v2646 = vrot.slane %v2641, %v2645
  %v2647 = vlaneseq
  %v2648 = vshrl.u32 %v2647, 7
  %v2649 = vsub.s32 1, %v2648
  %v2650 = vrot.slane %v2641, %v2649
  %v2651 = vlaneseq
  %v2652 = vshrl.u32 %v2651, 7
  %v2653 = vsub.s32 2, %v2652
  %v2654 = vrot.slane %v2641, %v2653
  %v2655 = vlaneseq
  %v2656 = vshrl.u32 %v2655, 7
  %v2657 = vsub.s32 3, %v2656
  %v2658 = vrot.slane %v2641, %v2657
  %v2671 = vunpack.c.l.b16 %v2633
  %v2672 = vunpack.c.h.b16 %v2633
  %v2673 = vunpack.c.l.b16 %v2634
  %v2674 = vunpack.c.h.b16 %v2634
  %v2675 = vunpack.c.l.b16 %v2635
  %v2676 = vunpack.c.h.b16 %v2635
  %v2677 = vunpack.c.l.b16 %v2636
  %v2678 = vunpack.c.h.b16 %v2636
  %v2679 = vunpack.c.l.b16 %v2637
  %v2680 = vunpack.c.h.b16 %v2637
  %v2681 = vunpack.c.l.b16 %v2638
  %v2682 = vunpack.c.h.b16 %v2638
  %v2683 = vunpack.c.l.b16 %v2639
  %v2684 = vunpack.c.h.b16 %v2639
  %v2685 = vunpack.c.l.b16 %v2640
  %v2686 = vunpack.c.h.b16 %v2640
  %v2687 = vpack.c.b16 %v2675, %v2671
  %v2688 = vpack.c.b16 %v2676, %v2672
  %v2689 = vpack.c.b16 %v2677, %v2673
  %v2690 = vpack.c.b16 %v2678, %v2674
  %v2691 = vpack.c.b16 %v2683, %v2679
  %v2692 = vpack.c.b16 %v2684, %v2680
  %v2693 = vpack.c.b16 %v2685, %v2681
  %v2694 = vpack.c.b16 %v2686, %v2682
  %2703 = vmatprep.subr.bf16.mxu0 %v2688
  %2704 = vmatpush1.bf16.msra.mxu0 %v2687
  %2705 = vmatprep.subr.bf16.mxu0 %v2692
  %2706 = vmatpush1.bf16.msra.mxu0 %v2691
  %2707 = vmatprep.subr.bf16.mxu0 0
  %2708 = vmatpush1.bf16.msra.mxu0 0
  %2709 = vmatprep.subr.bf16.mxu0 0
  %2710 = vmatpush1.bf16.msra.mxu0 0
  %2711 = vmatprep.subr.bf16.mxu0 0
  %2712 = vmatpush1.bf16.msra.mxu0 0
  %2713 = vmatprep.subr.bf16.mxu0 0
  %2714 = vmatpush1.bf16.msra.mxu0 0
  %2715 = vmatprep.subr.bf16.mxu0 0
  %2716 = vmatpush1.bf16.msra.mxu0 0
  %2717 = vmatprep.subr.bf16.mxu0 0
  %2718 = vmatpush1.bf16.msra.mxu0 0
  %2719 = vmatprep.subr.bf16.mxu0 0
  %2720 = vmatpush1.bf16.msra.mxu0 0
  %2721 = vmatprep.subr.bf16.mxu0 0
  %2722 = vmatpush1.bf16.msra.mxu0 0
  %2723 = vmatprep.subr.bf16.mxu0 0
  %2724 = vmatpush1.bf16.msra.mxu0 0
  %2725 = vmatprep.subr.bf16.mxu0 0
  %2726 = vmatpush1.bf16.msra.mxu0 0
  %2727 = vmatprep.subr.bf16.mxu0 0
  %2728 = vmatpush1.bf16.msra.mxu0 0
  %2729 = vmatprep.subr.bf16.mxu0 0
  %2730 = vmatpush1.bf16.msra.mxu0 0
  %2731 = vmatprep.subr.bf16.mxu0 0
  %2732 = vmatpush1.bf16.msra.mxu0 0
  %2733 = vmatprep.subr.bf16.mxu0 0
  %2734 = vmatpush1.bf16.msra.mxu0 0
  %2735 = vmatprep.mubr.bf16.mxu0 0
  %2736 = vmatmul.mubr.bf16.gmra.mrb[0].mxu0 %v1358
  %v2737 = vpop.f32.mrb[0].mxu0
  %v2738 = vadd.f32 %v2646, %v2737
  %v2739 = vpop.f32.mrb[0].mxu0
  %v2740 = vadd.f32 %v2650, %v2739
  %v2741 = vpop.f32.mrb[0].mxu0
  %v2742 = vadd.f32 %v2646, %v2741
  %v2743 = vpop.f32.mrb[0].mxu0
  %v2744 = vadd.f32 %v2650, %v2743
  %2745 = vmatprep.mubr.bf16.mxu0 0
  %2746 = vmatmul.mubr.bf16.gmra.mrb[0].mxu0 %v1361
  %v2747 = vpop.f32.mrb[0].mxu0
  %v2748 = vadd.f32 %v2646, %v2747
  %v2749 = vpop.f32.mrb[0].mxu0
  %v2750 = vadd.f32 %v2650, %v2749
  %v2751 = vpop.f32.mrb[0].mxu0
  %v2752 = vadd.f32 %v2646, %v2751
  %v2753 = vpop.f32.mrb[0].mxu0
  %v2754 = vadd.f32 %v2650, %v2753
  %2755 = vmatprep.mubr.bf16.mxu0 0
  %2756 = vmatmul.mubr.bf16.gmra.mrb[0].mxu0 %v1364
  %v2757 = vpop.f32.mrb[0].mxu0
  %v2758 = vadd.f32 %v2646, %v2757
  %v2759 = vpop.f32.mrb[0].mxu0
  %v2760 = vadd.f32 %v2650, %v2759
  %v2761 = vpop.f32.mrb[0].mxu0
  %v2762 = vadd.f32 %v2646, %v2761
  %v2763 = vpop.f32.mrb[0].mxu0
  %v2764 = vadd.f32 %v2650, %v2763
  %2765 = vmatprep.mubr.bf16.mxu0 0
  %2766 = vmatmul.mubr.bf16.gmra.mrb[0].mxu0 %v1367
  %v2767 = vpop.f32.mrb[0].mxu0
  %v2768 = vadd.f32 %v2646, %v2767
  %v2769 = vpop.f32.mrb[0].mxu0
  %v2770 = vadd.f32 %v2650, %v2769
  %v2771 = vpop.f32.mrb[0].mxu0
  %v2772 = vadd.f32 %v2646, %v2771
  %v2773 = vpop.f32.mrb[0].mxu0
  %v2774 = vadd.f32 %v2650, %v2773
  %2775 = vdwg.mxu0
  %2776 = vmatprep.subr.bf16.mxu0 %v2690
  %2777 = vmatpush1.bf16.msra.mxu0 %v2689
  %2778 = vmatprep.subr.bf16.mxu0 %v2694
  %2779 = vmatpush1.bf16.msra.mxu0 %v2693
  %2780 = vmatprep.subr.bf16.mxu0 0
  %2781 = vmatpush1.bf16.msra.mxu0 0
  %2782 = vmatprep.subr.bf16.mxu0 0
  %2783 = vmatpush1.bf16.msra.mxu0 0
  %2784 = vmatprep.subr.bf16.mxu0 0
  %2785 = vmatpush1.bf16.msra.mxu0 0
  %2786 = vmatprep.subr.bf16.mxu0 0
  %2787 = vmatpush1.bf16.msra.mxu0 0
  %2788 = vmatprep.subr.bf16.mxu0 0
  %2789 = vmatpush1.bf16.msra.mxu0 0
  %2790 = vmatprep.subr.bf16.mxu0 0
  %2791 = vmatpush1.bf16.msra.mxu0 0
  %2792 = vmatprep.subr.bf16.mxu0 0
  %2793 = vmatpush1.bf16.msra.mxu0 0
  %2794 = vmatprep.subr.bf16.mxu0 0
  %2795 = vmatpush1.bf16.msra.mxu0 0
  %2796 = vmatprep.subr.bf16.mxu0 0
  %2797 = vmatpush1.bf16.msra.mxu0 0
  %2798 = vmatprep.subr.bf16.mxu0 0
  %2799 = vmatpush1.bf16.msra.mxu0 0
  %2800 = vmatprep.subr.bf16.mxu0 0
  %2801 = vmatpush1.bf16.msra.mxu0 0
  %2802 = vmatprep.subr.bf16.mxu0 0
  %2803 = vmatpush1.bf16.msra.mxu0 0
  %2804 = vmatprep.subr.bf16.mxu0 0
  %2805 = vmatpush1.bf16.msra.mxu0 0
  %2806 = vmatprep.subr.bf16.mxu0 0
  %2807 = vmatpush1.bf16.msra.mxu0 0
  %2808 = vmatprep.mubr.bf16.mxu0 0
  %2809 = vmatmul.mubr.bf16.gmra.mrb[0].mxu0 %v1358
  %v2810 = vpop.f32.mrb[0].mxu0
  %v2811 = vadd.f32 %v2654, %v2810
  %v2812 = vpop.f32.mrb[0].mxu0
  %v2813 = vadd.f32 %v2658, %v2812
  %v2814 = vpop.f32.mrb[0].mxu0
  %v2815 = vadd.f32 %v2654, %v2814
  %v2816 = vpop.f32.mrb[0].mxu0
  %v2817 = vadd.f32 %v2658, %v2816
  %2818 = vmatprep.mubr.bf16.mxu0 0
  %2819 = vmatmul.mubr.bf16.gmra.mrb[0].mxu0 %v1361
  %v2820 = vpop.f32.mrb[0].mxu0
  %v2821 = vadd.f32 %v2654, %v2820
  %v2822 = vpop.f32.mrb[0].mxu0
  %v2823 = vadd.f32 %v2658, %v2822
  %v2824 = vpop.f32.mrb[0].mxu0
  %v2825 = vadd.f32 %v2654, %v2824
  %v2826 = vpop.f32.mrb[0].mxu0
  %v2827 = vadd.f32 %v2658, %v2826
  %2828 = vmatprep.mubr.bf16.mxu0 0
  %2829 = vmatmul.mubr.bf16.gmra.mrb[0].mxu0 %v1364
  %v2830 = vpop.f32.mrb[0].mxu0
  %v2831 = vadd.f32 %v2654, %v2830
  %v2832 = vpop.f32.mrb[0].mxu0
  %v2833 = vadd.f32 %v2658, %v2832
  %v2834 = vpop.f32.mrb[0].mxu0
  %v2835 = vadd.f32 %v2654, %v2834
  %v2836 = vpop.f32.mrb[0].mxu0
  %v2837 = vadd.f32 %v2658, %v2836
  %2838 = vmatprep.mubr.bf16.mxu0 0
  %2839 = vmatmul.mubr.bf16.gmra.mrb[0].mxu0 %v1367
  %v2840 = vpop.f32.mrb[0].mxu0
  %v2841 = vadd.f32 %v2654, %v2840
  %v2842 = vpop.f32.mrb[0].mxu0
  %v2843 = vadd.f32 %v2658, %v2842
  %v2844 = vpop.f32.mrb[0].mxu0
  %v2845 = vadd.f32 %v2654, %v2844
  %v2846 = vpop.f32.mrb[0].mxu0
  %v2847 = vadd.f32 %v2658, %v2846
  %2848 = vdwg.mxu0
  %v2849 = vmax.f32 %v2738, 0.0
  %v2850 = vmax.f32 %v2740, 0.0
  %v2851 = vmax.f32 %v2811, 0.0
  %v2852 = vmax.f32 %v2813, 0.0
  %v2853 = vmax.f32 %v2742, 0.0
  %v2854 = vmax.f32 %v2744, 0.0
  %v2855 = vmax.f32 %v2815, 0.0
  %v2856 = vmax.f32 %v2817, 0.0
  %v2857 = vmax.f32 %v2748, 0.0
  %v2858 = vmax.f32 %v2750, 0.0
  %v2859 = vmax.f32 %v2821, 0.0
  %v2860 = vmax.f32 %v2823, 0.0
  %v2861 = vmax.f32 %v2752, 0.0
  %v2862 = vmax.f32 %v2754, 0.0
  %v2863 = vmax.f32 %v2825, 0.0
  %v2864 = vmax.f32 %v2827, 0.0
  %v2865 = vmax.f32 %v2758, 0.0
  %v2866 = vmax.f32 %v2760, 0.0
  %v2867 = vmax.f32 %v2831, 0.0
  %v2868 = vmax.f32 %v2833, 0.0
  %v2869 = vmax.f32 %v2762, 0.0
  %v2870 = vmax.f32 %v2764, 0.0
  %v2871 = vmax.f32 %v2835, 0.0
  %v2872 = vmax.f32 %v2837, 0.0
  %v2873 = vmax.f32 %v2768, 0.0
  %v2874 = vmax.f32 %v2770, 0.0
  %v2875 = vmax.f32 %v2841, 0.0
  %v2876 = vmax.f32 %v2843, 0.0
  %v2877 = vmax.f32 %v2772, 0.0
  %v2878 = vmax.f32 %v2774, 0.0
  %v2879 = vmax.f32 %v2845, 0.0
  %v2880 = vmax.f32 %v2847, 0.0
  %v2881 = vpack.c.bf16 %v2853, %v2849
  %v2882 = vpack.c.bf16 %v2854, %v2850
  %v2883 = vpack.c.bf16 %v2855, %v2851
  %v2884 = vpack.c.bf16 %v2856, %v2852
  %v2885 = vpack.c.bf16 %v2861, %v2857
  %v2886 = vpack.c.bf16 %v2862, %v2858
  %v2887 = vpack.c.bf16 %v2863, %v2859
  %v2888 = vpack.c.bf16 %v2864, %v2860
  %v2889 = vpack.c.bf16 %v2869, %v2865
  %v2890 = vpack.c.bf16 %v2870, %v2866
  %v2891 = vpack.c.bf16 %v2871, %v2867
  %v2892 = vpack.c.bf16 %v2872, %v2868
  %v2893 = vpack.c.bf16 %v2877, %v2873
  %v2894 = vpack.c.bf16 %v2878, %v2874
  %v2895 = vpack.c.bf16 %v2879, %v2875
  %v2896 = vpack.c.bf16 %v2880, %v2876
  %v2897 = vld [vmem:[%s4 + $0x30] sm:$0xff]
  %v2898 = vld [vmem:[%s4 + $0x38] sm:$0xff]
  %v2899 = vld [vmem:[%s4 + $0x70] sm:$0xff]
  %v2900 = vld [vmem:[%s4 + $0x78] sm:$0xff]
  %v2901 = vld [vmem:[%s4 + $0xb0] sm:$0xff]
  %v2902 = vld [vmem:[%s4 + $0xb8] sm:$0xff]
  %v2903 = vld [vmem:[%s4 + $0xf0] sm:$0xff]
  %v2904 = vld [vmem:[%s4 + $0xf8] sm:$0xff]
  %v2913 = vunpack.c.l.b16 %v2897
  %v2914 = vunpack.c.h.b16 %v2897
  %v2915 = vunpack.c.l.b16 %v2898
  %v2916 = vunpack.c.h.b16 %v2898
  %v2917 = vunpack.c.l.b16 %v2899
  %v2918 = vunpack.c.h.b16 %v2899
  %v2919 = vunpack.c.l.b16 %v2900
  %v2920 = vunpack.c.h.b16 %v2900
  %v2921 = vunpack.c.l.b16 %v2901
  %v2922 = vunpack.c.h.b16 %v2901
  %v2923 = vunpack.c.l.b16 %v2902
  %v2924 = vunpack.c.h.b16 %v2902
  %v2925 = vunpack.c.l.b16 %v2903
  %v2926 = vunpack.c.h.b16 %v2903
  %v2927 = vunpack.c.l.b16 %v2904
  %v2928 = vunpack.c.h.b16 %v2904
  %v2929 = vpack.c.b16 %v2917, %v2913
  %v2930 = vpack.c.b16 %v2918, %v2914
  %v2931 = vpack.c.b16 %v2919, %v2915
  %v2932 = vpack.c.b16 %v2920, %v2916
  %v2933 = vpack.c.b16 %v2925, %v2921
  %v2934 = vpack.c.b16 %v2926, %v2922
  %v2935 = vpack.c.b16 %v2927, %v2923
  %v2936 = vpack.c.b16 %v2928, %v2924
  %2945 = vmatprep.subr.bf16.mxu0 %v2930
  %2946 = vmatpush1.bf16.xpose.msra.mxu0 %v2929
  %2947 = vmatprep.subr.bf16.mxu0 %v2934
  %2948 = vmatpush1.bf16.xpose.msra.mxu0 %v2933
  %2949 = vmatprep.subr.bf16.mxu0 0
  %2950 = vmatpush1.bf16.xpose.msra.mxu0 0
  %2951 = vmatprep.subr.bf16.mxu0 0
  %2952 = vmatpush1.bf16.xpose.msra.mxu0 0
  %2953 = vmatprep.subr.bf16.mxu0 0
  %2954 = vmatpush1.bf16.xpose.msra.mxu0 0
  %2955 = vmatprep.subr.bf16.mxu0 0
  %2956 = vmatpush1.bf16.xpose.msra.mxu0 0
  %2957 = vmatprep.subr.bf16.mxu0 0
  %2958 = vmatpush1.bf16.xpose.msra.mxu0 0
  %2959 = vmatprep.subr.bf16.mxu0 0
  %2960 = vmatpush1.bf16.xpose.msra.mxu0 0
  %2961 = vmatprep.subr.bf16.mxu0 0
  %2962 = vmatpush1.bf16.xpose.msra.mxu0 0
  %2963 = vmatprep.subr.bf16.mxu0 0
  %2964 = vmatpush1.bf16.xpose.msra.mxu0 0
  %2965 = vmatprep.subr.bf16.mxu0 0
  %2966 = vmatpush1.bf16.xpose.msra.mxu0 0
  %2967 = vmatprep.subr.bf16.mxu0 0
  %2968 = vmatpush1.bf16.xpose.msra.mxu0 0
  %2969 = vmatprep.subr.bf16.mxu0 0
  %2970 = vmatpush1.bf16.xpose.msra.mxu0 0
  %2971 = vmatprep.subr.bf16.mxu0 0
  %2972 = vmatpush1.bf16.xpose.msra.mxu0 0
  %2973 = vmatprep.subr.bf16.mxu0 0
  %2974 = vmatpush1.bf16.xpose.msra.mxu0 0
  %2975 = vmatprep.subr.bf16.mxu0 0
  %2976 = vmatpush1.bf16.xpose.msra.mxu0 0
  %2977 = vmatprep.mubr.bf16.mxu0 %v2882
  %2978 = vmatmul.mubr.bf16.gmra.mrb[0].mxu0 %v2881
  %v2979 = vpop.f32.mrb[0].mxu0
  %v2980 = vadd.f32 0.0, %v2979
  %v2981 = vpop.f32.mrb[0].mxu0
  %v2982 = vpop.f32.mrb[0].mxu0
  %v2983 = vadd.f32 0.0, %v2982
  %v2984 = vpop.f32.mrb[0].mxu0
  %2985 = vmatprep.mubr.bf16.mxu0 %v2886
  %2986 = vmatmul.mubr.bf16.gmra.mrb[0].mxu0 %v2885
  %v2987 = vpop.f32.mrb[0].mxu0
  %v2988 = vadd.f32 0.0, %v2987
  %v2989 = vpop.f32.mrb[0].mxu0
  %v2990 = vpop.f32.mrb[0].mxu0
  %v2991 = vadd.f32 0.0, %v2990
  %v2992 = vpop.f32.mrb[0].mxu0
  %2993 = vmatprep.mubr.bf16.mxu0 %v2890
  %2994 = vmatmul.mubr.bf16.gmra.mrb[0].mxu0 %v2889
  %v2995 = vpop.f32.mrb[0].mxu0
  %v2996 = vadd.f32 0.0, %v2995
  %v2997 = vpop.f32.mrb[0].mxu0
  %v2998 = vpop.f32.mrb[0].mxu0
  %v2999 = vadd.f32 0.0, %v2998
  %v3000 = vpop.f32.mrb[0].mxu0
  %3001 = vmatprep.mubr.bf16.mxu0 %v2894
  %3002 = vmatmul.mubr.bf16.gmra.mrb[0].mxu0 %v2893
  %v3003 = vpop.f32.mrb[0].mxu0
  %v3004 = vadd.f32 0.0, %v3003
  %v3005 = vpop.f32.mrb[0].mxu0
  %v3006 = vpop.f32.mrb[0].mxu0
  %v3007 = vadd.f32 0.0, %v3006
  %v3008 = vpop.f32.mrb[0].mxu0
  %3009 = vdwg.mxu0
  %3010 = vmatprep.subr.bf16.mxu0 %v2932
  %3011 = vmatpush1.bf16.xpose.msra.mxu0 %v2931
  %3012 = vmatprep.subr.bf16.mxu0 %v2936
  %3013 = vmatpush1.bf16.xpose.msra.mxu0 %v2935
  %3014 = vmatprep.subr.bf16.mxu0 0
  %3015 = vmatpush1.bf16.xpose.msra.mxu0 0
  %3016 = vmatprep.subr.bf16.mxu0 0
  %3017 = vmatpush1.bf16.xpose.msra.mxu0 0
  %3018 = vmatprep.subr.bf16.mxu0 0
  %3019 = vmatpush1.bf16.xpose.msra.mxu0 0
  %3020 = vmatprep.subr.bf16.mxu0 0
  %3021 = vmatpush1.bf16.xpose.msra.mxu0 0
  %3022 = vmatprep.subr.bf16.mxu0 0
  %3023 = vmatpush1.bf16.xpose.msra.mxu0 0
  %3024 = vmatprep.subr.bf16.mxu0 0
  %3025 = vmatpush1.bf16.xpose.msra.mxu0 0
  %3026 = vmatprep.subr.bf16.mxu0 0
  %3027 = vmatpush1.bf16.xpose.msra.mxu0 0
  %3028 = vmatprep.subr.bf16.mxu0 0
  %3029 = vmatpush1.bf16.xpose.msra.mxu0 0
  %3030 = vmatprep.subr.bf16.mxu0 0
  %3031 = vmatpush1.bf16.xpose.msra.mxu0 0
  %3032 = vmatprep.subr.bf16.mxu0 0
  %3033 = vmatpush1.bf16.xpose.msra.mxu0 0
  %3034 = vmatprep.subr.bf16.mxu0 0
  %3035 = vmatpush1.bf16.xpose.msra.mxu0 0
  %3036 = vmatprep.subr.bf16.mxu0 0
  %3037 = vmatpush1.bf16.xpose.msra.mxu0 0
  %3038 = vmatprep.subr.bf16.mxu0 0
  %3039 = vmatpush1.bf16.xpose.msra.mxu0 0
  %3040 = vmatprep.subr.bf16.mxu0 0
  %3041 = vmatpush1.bf16.xpose.msra.mxu0 0
  %3042 = vmatprep.mubr.bf16.mxu0 %v2884
  %3043 = vmatmul.mubr.bf16.gmra.mrb[0].mxu0 %v2883
  %v3044 = vpop.f32.mrb[0].mxu0
  %v3045 = vadd.f32 %v2980, %v3044
  %v3046 = vpop.f32.mrb[0].mxu0
  %v3047 = vpop.f32.mrb[0].mxu0
  %v3048 = vadd.f32 %v2983, %v3047
  %v3049 = vpop.f32.mrb[0].mxu0
  %3050 = vmatprep.mubr.bf16.mxu0 %v2888
  %3051 = vmatmul.mubr.bf16.gmra.mrb[0].mxu0 %v2887
  %v3052 = vpop.f32.mrb[0].mxu0
  %v3053 = vadd.f32 %v2988, %v3052
  %v3054 = vpop.f32.mrb[0].mxu0
  %v3055 = vpop.f32.mrb[0].mxu0
  %v3056 = vadd.f32 %v2991, %v3055
  %v3057 = vpop.f32.mrb[0].mxu0
  %3058 = vmatprep.mubr.bf16.mxu0 %v2892
  %3059 = vmatmul.mubr.bf16.gmra.mrb[0].mxu0 %v2891
  %v3060 = vpop.f32.mrb[0].mxu0
  %v3061 = vadd.f32 %v2996, %v3060
  %v3062 = vpop.f32.mrb[0].mxu0
  %v3063 = vpop.f32.mrb[0].mxu0
  %v3064 = vadd.f32 %v2999, %v3063
  %v3065 = vpop.f32.mrb[0].mxu0
  %3066 = vmatprep.mubr.bf16.mxu0 %v2896
  %3067 = vmatmul.mubr.bf16.gmra.mrb[0].mxu0 %v2895
  %v3068 = vpop.f32.mrb[0].mxu0
  %v3069 = vadd.f32 %v3004, %v3068
  %v3070 = vpop.f32.mrb[0].mxu0
  %v3071 = vpop.f32.mrb[0].mxu0
  %v3072 = vadd.f32 %v3007, %v3071
  %v3073 = vpop.f32.mrb[0].mxu0
  %3074 = vdwg.mxu0
  %v3075 = vadd.f32 %v2625, %v3045
  %v3076 = vadd.f32 %v2626, %v3048
  %v3077 = vadd.f32 %v2627, %v3053
  %v3078 = vadd.f32 %v2628, %v3056
  %v3079 = vadd.f32 %v2629, %v3061
  %v3080 = vadd.f32 %v2630, %v3064
  %v3081 = vadd.f32 %v2631, %v3069
  %v3082 = vadd.f32 %v2632, %v3072
  %v3083 = vlaneseq
  %v3084 = vshrl.u32 %v3083, 7
  %v3085 = vsub.s32 5, %v3084
  %v3086 = vrot.slane %v34, %v3085
  %v3087 = vadd.f32 %v3075, %v3086
  %v3088 = vadd.f32 %v3076, %v3086
  %v3089 = vadd.f32 %v3077, %v3086
  %v3090 = vadd.f32 %v3078, %v3086
  %v3091 = vadd.f32 %v3079, %v3086
  %v3092 = vadd.f32 %v3080, %v3086
  %v3093 = vadd.f32 %v3081, %v3086
  %v3094 = vadd.f32 %v3082, %v3086
  %v3095 = vadd.f32 %v1275, %v3087
  %v3096 = vadd.f32 %v1276, %v3088
  %v3097 = vadd.f32 %v1277, %v3089
  %v3098 = vadd.f32 %v1278, %v3090
  %v3099 = vadd.f32 %v1279, %v3091
  %v3100 = vadd.f32 %v1280, %v3092
  %v3101 = vadd.f32 %v1281, %v3093
  %v3102 = vadd.f32 %v1282, %v3094
  %v3103 = vsel %vm257, %v3095, 0.0
  %3104 = vadd.xlane.f32.xlu0 %v3103
  %v3105 = vpop.xlane.xlu0 %3104
  %v3106 = vsel %vm257, %v3096, 0.0
  %3107 = vadd.xlane.f32.xlu0 %v3106
  %v3108 = vpop.xlane.xlu0 %3107
  %v3109 = vsel %vm257, %v3097, 0.0
  %3110 = vadd.xlane.f32.xlu0 %v3109
  %v3111 = vpop.xlane.xlu0 %3110
  %v3112 = vsel %vm257, %v3098, 0.0
  %3113 = vadd.xlane.f32.xlu0 %v3112
  %v3114 = vpop.xlane.xlu0 %3113
  %v3115 = vsel %vm257, %v3099, 0.0
  %3116 = vadd.xlane.f32.xlu0 %v3115
  %v3117 = vpop.xlane.xlu0 %3116
  %v3118 = vsel %vm257, %v3100, 0.0
  %3119 = vadd.xlane.f32.xlu0 %v3118
  %v3120 = vpop.xlane.xlu0 %3119
  %v3121 = vsel %vm257, %v3101, 0.0
  %3122 = vadd.xlane.f32.xlu0 %v3121
  %v3123 = vpop.xlane.xlu0 %3122
  %v3124 = vsel %vm257, %v3102, 0.0
  %3125 = vadd.xlane.f32.xlu0 %v3124
  %v3126 = vpop.xlane.xlu0 %3125
  %v3127 = vmul.f32 %v3105, %v1178
  %v3128 = vmul.f32 %v3108, %v1178
  %v3129 = vmul.f32 %v3111, %v1178
  %v3130 = vmul.f32 %v3114, %v1178
  %v3131 = vmul.f32 %v3117, %v1178
  %v3132 = vmul.f32 %v3120, %v1178
  %v3133 = vmul.f32 %v3123, %v1178
  %v3134 = vmul.f32 %v3126, %v1178
  %v3135 = vsub.f32 %v3095, %v3127
  %v3136 = vsub.f32 %v3096, %v3128
  %v3137 = vsub.f32 %v3097, %v3129
  %v3138 = vsub.f32 %v3098, %v3130
  %v3139 = vsub.f32 %v3099, %v3131
  %v3140 = vsub.f32 %v3100, %v3132
  %v3141 = vsub.f32 %v3101, %v3133
  %v3142 = vsub.f32 %v3102, %v3134
  %v3143 = vmul.f32 %v3135, %v3135
  %v3144 = vmul.f32 %v3136, %v3136
  %v3145 = vmul.f32 %v3137, %v3137
  %v3146 = vmul.f32 %v3138, %v3138
  %v3147 = vmul.f32 %v3139, %v3139
  %v3148 = vmul.f32 %v3140, %v3140
  %v3149 = vmul.f32 %v3141, %v3141
  %v3150 = vmul.f32 %v3142, %v3142
  %v3151 = vsel %vm257, %v3143, 0.0
  %3152 = vadd.xlane.f32.xlu0 %v3151
  %v3153 = vpop.xlane.xlu0 %3152
  %v3154 = vsel %vm257, %v3144, 0.0
  %3155 = vadd.xlane.f32.xlu0 %v3154
  %v3156 = vpop.xlane.xlu0 %3155
  %v3157 = vsel %vm257, %v3145, 0.0
  %3158 = vadd.xlane.f32.xlu0 %v3157
  %v3159 = vpop.xlane.xlu0 %3158
  %v3160 = vsel %vm257, %v3146, 0.0
  %3161 = vadd.xlane.f32.xlu0 %v3160
  %v3162 = vpop.xlane.xlu0 %3161
  %v3163 = vsel %vm257, %v3147, 0.0
  %3164 = vadd.xlane.f32.xlu0 %v3163
  %v3165 = vpop.xlane.xlu0 %3164
  %v3166 = vsel %vm257, %v3148, 0.0
  %3167 = vadd.xlane.f32.xlu0 %v3166
  %v3168 = vpop.xlane.xlu0 %3167
  %v3169 = vsel %vm257, %v3149, 0.0
  %3170 = vadd.xlane.f32.xlu0 %v3169
  %v3171 = vpop.xlane.xlu0 %3170
  %v3172 = vsel %vm257, %v3150, 0.0
  %3173 = vadd.xlane.f32.xlu0 %v3172
  %v3174 = vpop.xlane.xlu0 %3173
  %v3175 = vmul.f32 %v3153, %v1178
  %v3176 = vmul.f32 %v3156, %v1178
  %v3177 = vmul.f32 %v3159, %v1178
  %v3178 = vmul.f32 %v3162, %v1178
  %v3179 = vmul.f32 %v3165, %v1178
  %v3180 = vmul.f32 %v3168, %v1178
  %v3181 = vmul.f32 %v3171, %v1178
  %v3182 = vmul.f32 %v3174, %v1178
  %v3183 = vadd.f32 %v3175, 1e-05
  %v3184 = vadd.f32 %v3176, 1e-05
  %v3185 = vadd.f32 %v3177, 1e-05
  %v3186 = vadd.f32 %v3178, 1e-05
  %v3187 = vadd.f32 %v3179, 1e-05
  %v3188 = vadd.f32 %v3180, 1e-05
  %v3189 = vadd.f32 %v3181, 1e-05
  %v3190 = vadd.f32 %v3182, 1e-05
  %v3191 = vrsqrt.pop %v3183
  %v3192 = vrsqrt.pop %v3184
  %v3193 = vrsqrt.pop %v3185
  %v3194 = vrsqrt.pop %v3186
  %v3195 = vrsqrt.pop %v3187
  %v3196 = vrsqrt.pop %v3188
  %v3197 = vrsqrt.pop %v3189
  %v3198 = vrsqrt.pop %v3190
  %v3199 = vmul.f32 %v3135, %v3191
  %v3200 = vmul.f32 %v3136, %v3192
  %v3201 = vmul.f32 %v3137, %v3193
  %v3202 = vmul.f32 %v3138, %v3194
  %v3203 = vmul.f32 %v3139, %v3195
  %v3204 = vmul.f32 %v3140, %v3196
  %v3205 = vmul.f32 %v3141, %v3197
  %v3206 = vmul.f32 %v3142, %v3198
  %v3207 = vlaneseq
  %v3208 = vshrl.u32 %v3207, 7
  %v3209 = vsub.s32 3, %v3208
  %v3210 = vrot.slane %v34, %v3209
  %v3211 = vmul.f32 %v3199, %v3210
  %v3212 = vmul.f32 %v3200, %v3210
  %v3213 = vmul.f32 %v3201, %v3210
  %v3214 = vmul.f32 %v3202, %v3210
  %v3215 = vmul.f32 %v3203, %v3210
  %v3216 = vmul.f32 %v3204, %v3210
  %v3217 = vmul.f32 %v3205, %v3210
  %v3218 = vmul.f32 %v3206, %v3210
  %v3219 = vlaneseq
  %v3220 = vshrl.u32 %v3219, 7
  %v3221 = vsub.s32 4, %v3220
  %v3222 = vrot.slane %v34, %v3221
  %v3223 = vadd.f32 %v3211, %v3222
  %v3224 = vadd.f32 %v3212, %v3222
  %v3225 = vadd.f32 %v3213, %v3222
  %v3226 = vadd.f32 %v3214, %v3222
  %v3227 = vadd.f32 %v3215, %v3222
  %v3228 = vadd.f32 %v3216, %v3222
  %v3229 = vadd.f32 %v3217, %v3222
  %v3230 = vadd.f32 %v3218, %v3222
  %3231 = vxpose.xlu0.b32.start [1/16] %v3223, 128
  %3232 = vxpose.xlu0.b32.cont [2/16] %v3224, 128
  %3233 = vxpose.xlu0.b32.cont [3/16] %v3225, 128
  %3234 = vxpose.xlu0.b32.cont [4/16] %v3226, 128
  %3235 = vxpose.xlu0.b32.cont [5/16] 0.0, 128
  %3236 = vxpose.xlu0.b32.cont [6/16] 0.0, 128
  %3237 = vxpose.xlu0.b32.cont [7/16] 0.0, 128
  %3238 = vxpose.xlu0.b32.cont [8/16] 0.0, 128
  %3239 = vxpose.xlu0.b32.cont [9/16] 0.0, 128
  %3240 = vxpose.xlu0.b32.cont [10/16] 0.0, 128
  %3241 = vxpose.xlu0.b32.cont [11/16] 0.0, 128
  %3242 = vxpose.xlu0.b32.cont [12/16] 0.0, 128
  %3243 = vxpose.xlu0.b32.cont [13/16] 0.0, 128
  %3244 = vxpose.xlu0.b32.cont [14/16] 0.0, 128
  %3245 = vxpose.xlu0.b32.cont [15/16] 0.0, 128
  %3246 = vxpose.xlu0.b32.end [16/16] 0.0, 128
  %v3247 = vpop.trf.xlu0
  %v3248 = vpop.trf.xlu0
  %v3249 = vpop.trf.xlu0
  %v3250 = vpop.trf.xlu0
  %v3251 = vpop.trf.xlu0
  %v3252 = vpop.trf.xlu0
  %v3253 = vpop.trf.xlu0
  %v3254 = vpop.trf.xlu0
  %v3255 = vpop.trf.xlu0
  %v3256 = vpop.trf.xlu0
  %v3257 = vpop.trf.xlu0
  %v3258 = vpop.trf.xlu0
  %v3259 = vpop.trf.xlu0
  %v3260 = vpop.trf.xlu0
  %v3261 = vpop.trf.xlu0
  %v3262 = vpop.trf.xlu0
  %3263 = vxpose.xlu0.b32.start [1/16] %v3227, 128
  %3264 = vxpose.xlu0.b32.cont [2/16] %v3228, 128
  %3265 = vxpose.xlu0.b32.cont [3/16] %v3229, 128
  %3266 = vxpose.xlu0.b32.cont [4/16] %v3230, 128
  %3267 = vxpose.xlu0.b32.cont [5/16] 0.0, 128
  %3268 = vxpose.xlu0.b32.cont [6/16] 0.0, 128
  %3269 = vxpose.xlu0.b32.cont [7/16] 0.0, 128
  %3270 = vxpose.xlu0.b32.cont [8/16] 0.0, 128
  %3271 = vxpose.xlu0.b32.cont [9/16] 0.0, 128
  %3272 = vxpose.xlu0.b32.cont [10/16] 0.0, 128
  %3273 = vxpose.xlu0.b32.cont [11/16] 0.0, 128
  %3274 = vxpose.xlu0.b32.cont [12/16] 0.0, 128
  %3275 = vxpose.xlu0.b32.cont [13/16] 0.0, 128
  %3276 = vxpose.xlu0.b32.cont [14/16] 0.0, 128
  %3277 = vxpose.xlu0.b32.cont [15/16] 0.0, 128
  %3278 = vxpose.xlu0.b32.end [16/16] 0.0, 128
  %v3279 = vpop.trf.xlu0
  %v3280 = vpop.trf.xlu0
  %v3281 = vpop.trf.xlu0
  %v3282 = vpop.trf.xlu0
  %v3283 = vpop.trf.xlu0
  %v3284 = vpop.trf.xlu0
  %v3285 = vpop.trf.xlu0
  %v3286 = vpop.trf.xlu0
  %v3287 = vpop.trf.xlu0
  %v3288 = vpop.trf.xlu0
  %v3289 = vpop.trf.xlu0
  %v3290 = vpop.trf.xlu0
  %v3291 = vpop.trf.xlu0
  %v3292 = vpop.trf.xlu0
  %v3293 = vpop.trf.xlu0
  %v3294 = vpop.trf.xlu0
  %v3295 = vld [vmem:[%s7] sm:$0xf]
  %v3296 = vld [vmem:[%s7 + $0x4] sm:$0xf]
  %v3297 = vld [vmem:[%s7 + $0x8] sm:$0xf]
  %v3298 = vld [vmem:[%s7 + $0xc] sm:$0xf]
  %v3299 = vld [vmem:[%s7 + $0x10] sm:$0xf]
  %v3300 = vld [vmem:[%s7 + $0x14] sm:$0xf]
  %v3301 = vld [vmem:[%s7 + $0x18] sm:$0xf]
  %v3302 = vld [vmem:[%s7 + $0x1c] sm:$0xf]
  %s3303 = scalar_lea.vmem %s2, 64
  %v3304 = vld [vmem:[%s3303] sm:$0xf]
  %v3305 = vld [vmem:[%s3303 + $0x4] sm:$0xf]
  %v3306 = vld [vmem:[%s3303 + $0x8] sm:$0xf]
  %v3307 = vld [vmem:[%s3303 + $0xc] sm:$0xf]
  %v3308 = vpack.c.bf16 %v3248, %v3247
  %v3309 = vpack.c.bf16 %v3250, %v3249
  %v3310 = vpack.c.bf16 %v3280, %v3279
  %v3311 = vpack.c.bf16 %v3282, %v3281
  %v3316 = vunpack.c.l.b16 %v3304
  %v3317 = vunpack.c.l.b16 %v3305
  %v3318 = vunpack.c.l.b16 %v3306
  %v3319 = vunpack.c.l.b16 %v3307
  %v3320 = vpack.c.b16 %v3317, %v3316
  %v3321 = vpack.c.b16 %v3319, %v3318
  %v3325 = vsel %vm257, %v3308, 0
  %v3328 = vsel %vm257, %v3309, 0
  %v3331 = vsel %vm257, %v3310, 0
  %v3334 = vsel %vm257, %v3311, 0
  %3336 = vmatprep.subr.bf16.mxu0 0
  %3337 = vmatpush1.bf16.msra.mxu0 %v3320
  %3338 = vmatprep.subr.bf16.mxu0 0
  %3339 = vmatpush1.bf16.msra.mxu0 %v3321
  %3340 = vmatprep.subr.bf16.mxu0 0
  %3341 = vmatpush1.bf16.msra.mxu0 0
  %3342 = vmatprep.subr.bf16.mxu0 0
  %3343 = vmatpush1.bf16.msra.mxu0 0
  %3344 = vmatprep.subr.bf16.mxu0 0
  %3345 = vmatpush1.bf16.msra.mxu0 0
  %3346 = vmatprep.subr.bf16.mxu0 0
  %3347 = vmatpush1.bf16.msra.mxu0 0
  %3348 = vmatprep.subr.bf16.mxu0 0
  %3349 = vmatpush1.bf16.msra.mxu0 0
  %3350 = vmatprep.subr.bf16.mxu0 0
  %3351 = vmatpush1.bf16.msra.mxu0 0
  %3352 = vmatprep.subr.bf16.mxu0 0
  %3353 = vmatpush1.bf16.msra.mxu0 0
  %3354 = vmatprep.subr.bf16.mxu0 0
  %3355 = vmatpush1.bf16.msra.mxu0 0
  %3356 = vmatprep.subr.bf16.mxu0 0
  %3357 = vmatpush1.bf16.msra.mxu0 0
  %3358 = vmatprep.subr.bf16.mxu0 0
  %3359 = vmatpush1.bf16.msra.mxu0 0
  %3360 = vmatprep.subr.bf16.mxu0 0
  %3361 = vmatpush1.bf16.msra.mxu0 0
  %3362 = vmatprep.subr.bf16.mxu0 0
  %3363 = vmatpush1.bf16.msra.mxu0 0
  %3364 = vmatprep.subr.bf16.mxu0 0
  %3365 = vmatpush1.bf16.msra.mxu0 0
  %3366 = vmatprep.subr.bf16.mxu0 0
  %3367 = vmatpush1.bf16.msra.mxu0 0
  %3368 = vmatprep.mubr.bf16.mxu0 0
  %3369 = vmatmul.mubr.bf16.gmra.mrb[0].mxu0 %v3325
  %v3370 = vpop.f32.mrb[0].mxu0
  %v3371 = vadd.f32 0.0, %v3370
  %v3372 = vpop.f32.mrb[0].mxu0
  %v3373 = vpop.f32.mrb[0].mxu0
  %v3374 = vadd.f32 0.0, %v3373
  %v3375 = vpop.f32.mrb[0].mxu0
  %3376 = vmatprep.mubr.bf16.mxu0 0
  %3377 = vmatmul.mubr.bf16.gmra.mrb[0].mxu0 %v3328
  %v3378 = vpop.f32.mrb[0].mxu0
  %v3379 = vadd.f32 0.0, %v3378
  %v3380 = vpop.f32.mrb[0].mxu0
  %v3381 = vpop.f32.mrb[0].mxu0
  %v3382 = vadd.f32 0.0, %v3381
  %v3383 = vpop.f32.mrb[0].mxu0
  %3384 = vmatprep.mubr.bf16.mxu0 0
  %3385 = vmatmul.mubr.bf16.gmra.mrb[0].mxu0 %v3331
  %v3386 = vpop.f32.mrb[0].mxu0
  %v3387 = vadd.f32 0.0, %v3386
  %v3388 = vpop.f32.mrb[0].mxu0
  %v3389 = vpop.f32.mrb[0].mxu0
  %v3390 = vadd.f32 0.0, %v3389
  %v3391 = vpop.f32.mrb[0].mxu0
  %3392 = vmatprep.mubr.bf16.mxu0 0
  %3393 = vmatmul.mubr.bf16.gmra.mrb[0].mxu0 %v3334
  %v3394 = vpop.f32.mrb[0].mxu0
  %v3395 = vadd.f32 0.0, %v3394
  %v3396 = vpop.f32.mrb[0].mxu0
  %v3397 = vpop.f32.mrb[0].mxu0
  %v3398 = vadd.f32 0.0, %v3397
  %v3399 = vpop.f32.mrb[0].mxu0
  %3400 = vdwg.mxu0
  %v3401 = vpack.c.bf16 %v3374, %v3371
  %v3402 = vpack.c.bf16 %v3382, %v3379
  %v3403 = vpack.c.bf16 %v3390, %v3387
  %v3404 = vpack.c.bf16 %v3398, %v3395
  %v3405 = vlaneseq
  %v3406 = vshrl.u32 %v3405, 7
  %v3407 = vsub.s32 6, %v3406
  %v3408 = vrot.slane %v34, %v3407
  %v3417 = vunpack.c.l.b16 %v3295
  %v3418 = vunpack.c.l.b16 %v3296
  %v3419 = vunpack.c.l.b16 %v3297
  %v3420 = vunpack.c.l.b16 %v3298
  %v3421 = vunpack.c.l.b16 %v3299
  %v3422 = vunpack.c.l.b16 %v3300
  %v3423 = vunpack.c.l.b16 %v3301
  %v3424 = vunpack.c.l.b16 %v3302
  %v3425 = vpack.c.b16 %v3418, %v3417
  %v3426 = vpack.c.b16 %v3420, %v3419
  %v3427 = vpack.c.b16 %v3422, %v3421
  %v3428 = vpack.c.b16 %v3424, %v3423
  %vm3429 = vcmask 523264
  %v3431 = vsel %vm3429, %v3425, 0
  %v3434 = vsel %vm3429, %v3426, 0
  %v3437 = vsel %vm3429, %v3427, 0
  %v3440 = vsel %vm3429, %v3428, 0
  %3442 = vmatprep.subr.bf16.mxu0 0
  %3443 = vmatpush1.bf16.msra.mxu0 %v3401
  %3444 = vmatprep.subr.bf16.mxu0 0
  %3445 = vmatpush1.bf16.msra.mxu0 %v3402
  %3446 = vmatprep.subr.bf16.mxu0 0
  %3447 = vmatpush1.bf16.msra.mxu0 %v3403
  %3448 = vmatprep.subr.bf16.mxu0 0
  %3449 = vmatpush1.bf16.msra.mxu0 %v3404
  %3450 = vmatprep.subr.bf16.mxu0 0
  %3451 = vmatpush1.bf16.msra.mxu0 0
  %3452 = vmatprep.subr.bf16.mxu0 0
  %3453 = vmatpush1.bf16.msra.mxu0 0
  %3454 = vmatprep.subr.bf16.mxu0 0
  %3455 = vmatpush1.bf16.msra.mxu0 0
  %3456 = vmatprep.subr.bf16.mxu0 0
  %3457 = vmatpush1.bf16.msra.mxu0 0
  %3458 = vmatprep.subr.bf16.mxu0 0
  %3459 = vmatpush1.bf16.msra.mxu0 0
  %3460 = vmatprep.subr.bf16.mxu0 0
  %3461 = vmatpush1.bf16.msra.mxu0 0
  %3462 = vmatprep.subr.bf16.mxu0 0
  %3463 = vmatpush1.bf16.msra.mxu0 0
  %3464 = vmatprep.subr.bf16.mxu0 0
  %3465 = vmatpush1.bf16.msra.mxu0 0
  %3466 = vmatprep.subr.bf16.mxu0 0
  %3467 = vmatpush1.bf16.msra.mxu0 0
  %3468 = vmatprep.subr.bf16.mxu0 0
  %3469 = vmatpush1.bf16.msra.mxu0 0
  %3470 = vmatprep.subr.bf16.mxu0 0
  %3471 = vmatpush1.bf16.msra.mxu0 0
  %3472 = vmatprep.subr.bf16.mxu0 0
  %3473 = vmatpush1.bf16.msra.mxu0 0
  %3474 = vmatprep.mubr.bf16.mxu0 0
  %3475 = vmatmul.mubr.bf16.gmra.mrb[0].mxu0 %v3431
  %v3476 = vpop.f32.mrb[0].mxu0
  %v3477 = vadd.f32 %v3408, %v3476
  %v3478 = vpop.f32.mrb[0].mxu0
  %v3479 = vpop.f32.mrb[0].mxu0
  %v3480 = vadd.f32 %v3408, %v3479
  %v3481 = vpop.f32.mrb[0].mxu0
  %3482 = vmatprep.mubr.bf16.mxu0 0
  %3483 = vmatmul.mubr.bf16.gmra.mrb[0].mxu0 %v3434
  %v3484 = vpop.f32.mrb[0].mxu0
  %v3485 = vadd.f32 %v3408, %v3484
  %v3486 = vpop.f32.mrb[0].mxu0
  %v3487 = vpop.f32.mrb[0].mxu0
  %v3488 = vadd.f32 %v3408, %v3487
  %v3489 = vpop.f32.mrb[0].mxu0
  %3490 = vmatprep.mubr.bf16.mxu0 0
  %3491 = vmatmul.mubr.bf16.gmra.mrb[0].mxu0 %v3437
  %v3492 = vpop.f32.mrb[0].mxu0
  %v3493 = vadd.f32 %v3408, %v3492
  %v3494 = vpop.f32.mrb[0].mxu0
  %v3495 = vpop.f32.mrb[0].mxu0
  %v3496 = vadd.f32 %v3408, %v3495
  %v3497 = vpop.f32.mrb[0].mxu0
  %3498 = vmatprep.mubr.bf16.mxu0 0
  %3499 = vmatmul.mubr.bf16.gmra.mrb[0].mxu0 %v3440
  %v3500 = vpop.f32.mrb[0].mxu0
  %v3501 = vadd.f32 %v3408, %v3500
  %v3502 = vpop.f32.mrb[0].mxu0
  %v3503 = vpop.f32.mrb[0].mxu0
  %v3504 = vadd.f32 %v3408, %v3503
  %v3505 = vpop.f32.mrb[0].mxu0
  %3506 = vdwg.mxu0
  %v3507 = vmax.f32 %v3477, 0.0
  %v3508 = vmax.f32 %v3480, 0.0
  %v3509 = vmax.f32 %v3485, 0.0
  %v3510 = vmax.f32 %v3488, 0.0
  %v3511 = vmax.f32 %v3493, 0.0
  %v3512 = vmax.f32 %v3496, 0.0
  %v3513 = vmax.f32 %v3501, 0.0
  %v3514 = vmax.f32 %v3504, 0.0
  %v3515 = vpack.c.bf16 %v3508, %v3507
  %v3516 = vpack.c.bf16 %v3510, %v3509
  %v3517 = vpack.c.bf16 %v3512, %v3511
  %v3518 = vpack.c.bf16 %v3514, %v3513
  %v3520 = vsel %vm257, %v3515, 0
  %v3523 = vsel %vm257, %v3516, 0
  %v3526 = vsel %vm257, %v3517, 0
  %v3529 = vsel %vm257, %v3518, 0
  %3531 = vmatprep.subr.bf16.mxu0 0
  %3532 = vmatpush1.bf16.msra.mxu0 %v3320
  %3533 = vmatprep.subr.bf16.mxu0 0
  %3534 = vmatpush1.bf16.msra.mxu0 %v3321
  %3535 = vmatprep.subr.bf16.mxu0 0
  %3536 = vmatpush1.bf16.msra.mxu0 0
  %3537 = vmatprep.subr.bf16.mxu0 0
  %3538 = vmatpush1.bf16.msra.mxu0 0
  %3539 = vmatprep.subr.bf16.mxu0 0
  %3540 = vmatpush1.bf16.msra.mxu0 0
  %3541 = vmatprep.subr.bf16.mxu0 0
  %3542 = vmatpush1.bf16.msra.mxu0 0
  %3543 = vmatprep.subr.bf16.mxu0 0
  %3544 = vmatpush1.bf16.msra.mxu0 0
  %3545 = vmatprep.subr.bf16.mxu0 0
  %3546 = vmatpush1.bf16.msra.mxu0 0
  %3547 = vmatprep.subr.bf16.mxu0 0
  %3548 = vmatpush1.bf16.msra.mxu0 0
  %3549 = vmatprep.subr.bf16.mxu0 0
  %3550 = vmatpush1.bf16.msra.mxu0 0
  %3551 = vmatprep.subr.bf16.mxu0 0
  %3552 = vmatpush1.bf16.msra.mxu0 0
  %3553 = vmatprep.subr.bf16.mxu0 0
  %3554 = vmatpush1.bf16.msra.mxu0 0
  %3555 = vmatprep.subr.bf16.mxu0 0
  %3556 = vmatpush1.bf16.msra.mxu0 0
  %3557 = vmatprep.subr.bf16.mxu0 0
  %3558 = vmatpush1.bf16.msra.mxu0 0
  %3559 = vmatprep.subr.bf16.mxu0 0
  %3560 = vmatpush1.bf16.msra.mxu0 0
  %3561 = vmatprep.subr.bf16.mxu0 0
  %3562 = vmatpush1.bf16.msra.mxu0 0
  %3563 = vmatprep.mubr.bf16.mxu0 0
  %3564 = vmatmul.mubr.bf16.gmra.mrb[0].mxu0 %v3520
  %v3565 = vpop.f32.mrb[0].mxu0
  %v3566 = vadd.f32 0.0, %v3565
  %v3567 = vpop.f32.mrb[0].mxu0
  %v3568 = vpop.f32.mrb[0].mxu0
  %v3569 = vadd.f32 0.0, %v3568
  %v3570 = vpop.f32.mrb[0].mxu0
  %3571 = vmatprep.mubr.bf16.mxu0 0
  %3572 = vmatmul.mubr.bf16.gmra.mrb[0].mxu0 %v3523
  %v3573 = vpop.f32.mrb[0].mxu0
  %v3574 = vadd.f32 0.0, %v3573
  %v3575 = vpop.f32.mrb[0].mxu0
  %v3576 = vpop.f32.mrb[0].mxu0
  %v3577 = vadd.f32 0.0, %v3576
  %v3578 = vpop.f32.mrb[0].mxu0
  %3579 = vmatprep.mubr.bf16.mxu0 0
  %3580 = vmatmul.mubr.bf16.gmra.mrb[0].mxu0 %v3526
  %v3581 = vpop.f32.mrb[0].mxu0
  %v3582 = vadd.f32 0.0, %v3581
  %v3583 = vpop.f32.mrb[0].mxu0
  %v3584 = vpop.f32.mrb[0].mxu0
  %v3585 = vadd.f32 0.0, %v3584
  %v3586 = vpop.f32.mrb[0].mxu0
  %3587 = vmatprep.mubr.bf16.mxu0 0
  %3588 = vmatmul.mubr.bf16.gmra.mrb[0].mxu0 %v3529
  %v3589 = vpop.f32.mrb[0].mxu0
  %v3590 = vadd.f32 0.0, %v3589
  %v3591 = vpop.f32.mrb[0].mxu0
  %v3592 = vpop.f32.mrb[0].mxu0
  %v3593 = vadd.f32 0.0, %v3592
  %v3594 = vpop.f32.mrb[0].mxu0
  %3595 = vdwg.mxu0
  %v3596 = vpack.c.bf16 %v3569, %v3566
  %v3597 = vpack.c.bf16 %v3577, %v3574
  %v3598 = vpack.c.bf16 %v3585, %v3582
  %v3599 = vpack.c.bf16 %v3593, %v3590
  %3600 = vmatprep.subr.bf16.mxu0 0
  %3601 = vmatpush1.bf16.msra.mxu0 %v3596
  %3602 = vmatprep.subr.bf16.mxu0 0
  %3603 = vmatpush1.bf16.msra.mxu0 %v3597
  %3604 = vmatprep.subr.bf16.mxu0 0
  %3605 = vmatpush1.bf16.msra.mxu0 %v3598
  %3606 = vmatprep.subr.bf16.mxu0 0
  %3607 = vmatpush1.bf16.msra.mxu0 %v3599
  %3608 = vmatprep.subr.bf16.mxu0 0
  %3609 = vmatpush1.bf16.msra.mxu0 0
  %3610 = vmatprep.subr.bf16.mxu0 0
  %3611 = vmatpush1.bf16.msra.mxu0 0
  %3612 = vmatprep.subr.bf16.mxu0 0
  %3613 = vmatpush1.bf16.msra.mxu0 0
  %3614 = vmatprep.subr.bf16.mxu0 0
  %3615 = vmatpush1.bf16.msra.mxu0 0
  %3616 = vmatprep.subr.bf16.mxu0 0
  %3617 = vmatpush1.bf16.msra.mxu0 0
  %3618 = vmatprep.subr.bf16.mxu0 0
  %3619 = vmatpush1.bf16.msra.mxu0 0
  %3620 = vmatprep.subr.bf16.mxu0 0
  %3621 = vmatpush1.bf16.msra.mxu0 0
  %3622 = vmatprep.subr.bf16.mxu0 0
  %3623 = vmatpush1.bf16.msra.mxu0 0
  %3624 = vmatprep.subr.bf16.mxu0 0
  %3625 = vmatpush1.bf16.msra.mxu0 0
  %3626 = vmatprep.subr.bf16.mxu0 0
  %3627 = vmatpush1.bf16.msra.mxu0 0
  %3628 = vmatprep.subr.bf16.mxu0 0
  %3629 = vmatpush1.bf16.msra.mxu0 0
  %3630 = vmatprep.subr.bf16.mxu0 0
  %3631 = vmatpush1.bf16.msra.mxu0 0
  %3632 = vmatprep.mubr.bf16.mxu0 0
  %3633 = vmatmul.mubr.bf16.gmra.mrb[0].mxu0 %v3431
  %v3634 = vpop.f32.mrb[0].mxu0
  %v3635 = vadd.f32 %v3408, %v3634
  %v3636 = vpop.f32.mrb[0].mxu0
  %v3637 = vpop.f32.mrb[0].mxu0
  %v3638 = vadd.f32 %v3408, %v3637
  %v3639 = vpop.f32.mrb[0].mxu0
  %3640 = vmatprep.mubr.bf16.mxu0 0
  %3641 = vmatmul.mubr.bf16.gmra.mrb[0].mxu0 %v3434
  %v3642 = vpop.f32.mrb[0].mxu0
  %v3643 = vadd.f32 %v3408, %v3642
  %v3644 = vpop.f32.mrb[0].mxu0
  %v3645 = vpop.f32.mrb[0].mxu0
  %v3646 = vadd.f32 %v3408, %v3645
  %v3647 = vpop.f32.mrb[0].mxu0
  %3648 = vmatprep.mubr.bf16.mxu0 0
  %3649 = vmatmul.mubr.bf16.gmra.mrb[0].mxu0 %v3437
  %v3650 = vpop.f32.mrb[0].mxu0
  %v3651 = vadd.f32 %v3408, %v3650
  %v3652 = vpop.f32.mrb[0].mxu0
  %v3653 = vpop.f32.mrb[0].mxu0
  %v3654 = vadd.f32 %v3408, %v3653
  %v3655 = vpop.f32.mrb[0].mxu0
  %3656 = vmatprep.mubr.bf16.mxu0 0
  %3657 = vmatmul.mubr.bf16.gmra.mrb[0].mxu0 %v3440
  %v3658 = vpop.f32.mrb[0].mxu0
  %v3659 = vadd.f32 %v3408, %v3658
  %v3660 = vpop.f32.mrb[0].mxu0
  %v3661 = vpop.f32.mrb[0].mxu0
  %v3662 = vadd.f32 %v3408, %v3661
  %v3663 = vpop.f32.mrb[0].mxu0
  %3664 = vdwg.mxu0
  %v3665 = vpack.c.bf16 %v3638, %v3635
  %v3666 = vpack.c.bf16 %v3646, %v3643
  %v3667 = vpack.c.bf16 %v3654, %v3651
  %v3668 = vpack.c.bf16 %v3662, %v3659
  %v3669 = vld [vmem:[%s6] sm:$0xf]
  %v3670 = vld [vmem:[%s6 + $0x4] sm:$0xf]
  %v3671 = vld [vmem:[%s6 + $0x8] sm:$0xf]
  %v3672 = vld [vmem:[%s6 + $0xc] sm:$0xf]
  %v3673 = vlaneseq
  %v3674 = vshrl.u32 %v3673, 7
  %v3675 = vsub.s32 7, %v3674
  %v3676 = vrot.slane %v34, %v3675
  %v3681 = vunpack.c.l.b16 %v3669
  %v3682 = vunpack.c.l.b16 %v3670
  %v3683 = vunpack.c.l.b16 %v3671
  %v3684 = vunpack.c.l.b16 %v3672
  %v3685 = vpack.c.b16 %v3682, %v3681
  %v3686 = vpack.c.b16 %v3684, %v3683
  %v3690 = vsel %vm257, %v3665, 0
  %v3693 = vsel %vm257, %v3666, 0
  %v3696 = vsel %vm257, %v3667, 0
  %v3699 = vsel %vm257, %v3668, 0
  %3701 = vmatprep.subr.bf16.mxu0 0
  %3702 = vmatpush1.bf16.msra.mxu0 %v3685
  %3703 = vmatprep.subr.bf16.mxu0 0
  %3704 = vmatpush1.bf16.msra.mxu0 %v3686
  %3705 = vmatprep.subr.bf16.mxu0 0
  %3706 = vmatpush1.bf16.msra.mxu0 0
  %3707 = vmatprep.subr.bf16.mxu0 0
  %3708 = vmatpush1.bf16.msra.mxu0 0
  %3709 = vmatprep.subr.bf16.mxu0 0
  %3710 = vmatpush1.bf16.msra.mxu0 0
  %3711 = vmatprep.subr.bf16.mxu0 0
  %3712 = vmatpush1.bf16.msra.mxu0 0
  %3713 = vmatprep.subr.bf16.mxu0 0
  %3714 = vmatpush1.bf16.msra.mxu0 0
  %3715 = vmatprep.subr.bf16.mxu0 0
  %3716 = vmatpush1.bf16.msra.mxu0 0
  %3717 = vmatprep.subr.bf16.mxu0 0
  %3718 = vmatpush1.bf16.msra.mxu0 0
  %3719 = vmatprep.subr.bf16.mxu0 0
  %3720 = vmatpush1.bf16.msra.mxu0 0
  %3721 = vmatprep.subr.bf16.mxu0 0
  %3722 = vmatpush1.bf16.msra.mxu0 0
  %3723 = vmatprep.subr.bf16.mxu0 0
  %3724 = vmatpush1.bf16.msra.mxu0 0
  %3725 = vmatprep.subr.bf16.mxu0 0
  %3726 = vmatpush1.bf16.msra.mxu0 0
  %3727 = vmatprep.subr.bf16.mxu0 0
  %3728 = vmatpush1.bf16.msra.mxu0 0
  %3729 = vmatprep.subr.bf16.mxu0 0
  %3730 = vmatpush1.bf16.msra.mxu0 0
  %3731 = vmatprep.subr.bf16.mxu0 0
  %3732 = vmatpush1.bf16.msra.mxu0 0
  %3733 = vmatprep.mubr.bf16.mxu0 0
  %3734 = vmatmul.mubr.bf16.gmra.mrb[0].mxu0 %v3690
  %v3735 = vpop.f32.mrb[0].mxu0
  %v3736 = vadd.f32 %v3676, %v3735
  %v3737 = vpop.f32.mrb[0].mxu0
  %v3738 = vpop.f32.mrb[0].mxu0
  %v3739 = vadd.f32 %v3676, %v3738
  %v3740 = vpop.f32.mrb[0].mxu0
  %3741 = vmatprep.mubr.bf16.mxu0 0
  %3742 = vmatmul.mubr.bf16.gmra.mrb[0].mxu0 %v3693
  %v3743 = vpop.f32.mrb[0].mxu0
  %v3744 = vadd.f32 %v3676, %v3743
  %v3745 = vpop.f32.mrb[0].mxu0
  %v3746 = vpop.f32.mrb[0].mxu0
  %v3747 = vadd.f32 %v3676, %v3746
  %v3748 = vpop.f32.mrb[0].mxu0
  %3749 = vmatprep.mubr.bf16.mxu0 0
  %3750 = vmatmul.mubr.bf16.gmra.mrb[0].mxu0 %v3696
  %v3751 = vpop.f32.mrb[0].mxu0
  %v3752 = vadd.f32 %v3676, %v3751
  %v3753 = vpop.f32.mrb[0].mxu0
  %v3754 = vpop.f32.mrb[0].mxu0
  %v3755 = vadd.f32 %v3676, %v3754
  %v3756 = vpop.f32.mrb[0].mxu0
  %3757 = vmatprep.mubr.bf16.mxu0 0
  %3758 = vmatmul.mubr.bf16.gmra.mrb[0].mxu0 %v3699
  %v3759 = vpop.f32.mrb[0].mxu0
  %v3760 = vadd.f32 %v3676, %v3759
  %v3761 = vpop.f32.mrb[0].mxu0
  %v3762 = vpop.f32.mrb[0].mxu0
  %v3763 = vadd.f32 %v3676, %v3762
  %v3764 = vpop.f32.mrb[0].mxu0
  %3765 = vdwg.mxu0
  %vm3766 = vcmask 80896
  %v3767 = vsel %vm3766, %v3736, -inf
  %3768 = vmax.xlane.f32.xlu0 %v3767
  %v3769 = vpop.xlane.xlu0 %3768
  %v3770 = vsel %vm3766, %v3739, -inf
  %3771 = vmax.xlane.f32.xlu0 %v3770
  %v3772 = vpop.xlane.xlu0 %3771
  %v3773 = vsel %vm3766, %v3744, -inf
  %3774 = vmax.xlane.f32.xlu0 %v3773
  %v3775 = vpop.xlane.xlu0 %3774
  %v3776 = vsel %vm3766, %v3747, -inf
  %3777 = vmax.xlane.f32.xlu0 %v3776
  %v3778 = vpop.xlane.xlu0 %3777
  %v3779 = vsel %vm3766, %v3752, -inf
  %3780 = vmax.xlane.f32.xlu0 %v3779
  %v3781 = vpop.xlane.xlu0 %3780
  %v3782 = vsel %vm3766, %v3755, -inf
  %3783 = vmax.xlane.f32.xlu0 %v3782
  %v3784 = vpop.xlane.xlu0 %3783
  %v3785 = vsel %vm3766, %v3760, -inf
  %3786 = vmax.xlane.f32.xlu0 %v3785
  %v3787 = vpop.xlane.xlu0 %3786
  %v3788 = vsel %vm3766, %v3763, -inf
  %3789 = vmax.xlane.f32.xlu0 %v3788
  %v3790 = vpop.xlane.xlu0 %3789
  %v3791 = vsub.f32 %v3736, %v3769
  %v3792 = vsub.f32 %v3739, %v3772
  %v3793 = vsub.f32 %v3744, %v3775
  %v3794 = vsub.f32 %v3747, %v3778
  %v3795 = vsub.f32 %v3752, %v3781
  %v3796 = vsub.f32 %v3755, %v3784
  %v3797 = vsub.f32 %v3760, %v3787
  %v3798 = vsub.f32 %v3763, %v3790
  %v3799 = vmul.f32 %v3791, 1.442695
  %v3800 = vpow.pop %v3799
  %v3801 = vmul.f32 %v3792, 1.442695
  %v3802 = vpow.pop %v3801
  %v3803 = vmul.f32 %v3793, 1.442695
  %v3804 = vpow.pop %v3803
  %v3805 = vmul.f32 %v3794, 1.442695
  %v3806 = vpow.pop %v3805
  %v3807 = vmul.f32 %v3795, 1.442695
  %v3808 = vpow.pop %v3807
  %v3809 = vmul.f32 %v3796, 1.442695
  %v3810 = vpow.pop %v3809
  %v3811 = vmul.f32 %v3797, 1.442695
  %v3812 = vpow.pop %v3811
  %v3813 = vmul.f32 %v3798, 1.442695
  %v3814 = vpow.pop %v3813
  %v3815 = vsel %vm3766, %v3800, 0.0
  %3816 = vadd.xlane.f32.xlu0 %v3815
  %v3817 = vpop.xlane.xlu0 %3816
  %v3818 = vsel %vm3766, %v3802, 0.0
  %3819 = vadd.xlane.f32.xlu0 %v3818
  %v3820 = vpop.xlane.xlu0 %3819
  %v3821 = vsel %vm3766, %v3804, 0.0
  %3822 = vadd.xlane.f32.xlu0 %v3821
  %v3823 = vpop.xlane.xlu0 %3822
  %v3824 = vsel %vm3766, %v3806, 0.0
  %3825 = vadd.xlane.f32.xlu0 %v3824
  %v3826 = vpop.xlane.xlu0 %3825
  %v3827 = vsel %vm3766, %v3808, 0.0
  %3828 = vadd.xlane.f32.xlu0 %v3827
  %v3829 = vpop.xlane.xlu0 %3828
  %v3830 = vsel %vm3766, %v3810, 0.0
  %3831 = vadd.xlane.f32.xlu0 %v3830
  %v3832 = vpop.xlane.xlu0 %3831
  %v3833 = vsel %vm3766, %v3812, 0.0
  %3834 = vadd.xlane.f32.xlu0 %v3833
  %v3835 = vpop.xlane.xlu0 %3834
  %v3836 = vsel %vm3766, %v3814, 0.0
  %3837 = vadd.xlane.f32.xlu0 %v3836
  %v3838 = vpop.xlane.xlu0 %3837
  %v3839 = vlog2.pop %v3817
  %v3840 = vmul.f32 %v3839, 0.6931472
  %v3841 = vlog2.pop %v3820
  %v3842 = vmul.f32 %v3841, 0.6931472
  %v3843 = vlog2.pop %v3823
  %v3844 = vmul.f32 %v3843, 0.6931472
  %v3845 = vlog2.pop %v3826
  %v3846 = vmul.f32 %v3845, 0.6931472
  %v3847 = vlog2.pop %v3829
  %v3848 = vmul.f32 %v3847, 0.6931472
  %v3849 = vlog2.pop %v3832
  %v3850 = vmul.f32 %v3849, 0.6931472
  %v3851 = vlog2.pop %v3835
  %v3852 = vmul.f32 %v3851, 0.6931472
  %v3853 = vlog2.pop %v3838
  %v3854 = vmul.f32 %v3853, 0.6931472
  %v3855 = vadd.f32 %v3840, %v3769
  %v3856 = vadd.f32 %v3842, %v3772
  %v3857 = vadd.f32 %v3844, %v3775
  %v3858 = vadd.f32 %v3846, %v3778
  %v3859 = vadd.f32 %v3848, %v3781
  %v3860 = vadd.f32 %v3850, %v3784
  %v3861 = vadd.f32 %v3852, %v3787
  %v3862 = vadd.f32 %v3854, %v3790
  %v3863 = vsub.f32 %v3736, %v3855
  %v3864 = vsub.f32 %v3739, %v3856
  %v3865 = vsub.f32 %v3744, %v3857
  %v3866 = vsub.f32 %v3747, %v3858
  %v3867 = vsub.f32 %v3752, %v3859
  %v3868 = vsub.f32 %v3755, %v3860
  %v3869 = vsub.f32 %v3760, %v3861
  %v3870 = vsub.f32 %v3763, %v3862
  %3871 = vst.msk [vmem:[%s9] sm:$0xff] %vm3766, %v3863
  %3872 = vst.msk [vmem:[%s9 + $0x8] sm:$0xff] %vm3766, %v3864
  %3873 = vst.msk [vmem:[%s9 + $0x10] sm:$0xff] %vm3766, %v3865
  %3874 = vst.msk [vmem:[%s9 + $0x18] sm:$0xff] %vm3766, %v3866
  %3875 = vst.msk [vmem:[%s9 + $0x20] sm:$0xff] %vm3766, %v3867
  %3876 = vst.msk [vmem:[%s9 + $0x28] sm:$0xff] %vm3766, %v3868
  %3877 = vst.msk [vmem:[%s9 + $0x30] sm:$0xff] %vm3766, %v3869
  %3878 = vst.msk [vmem:[%s9 + $0x38] sm:$0xff] %vm3766, %v3870
  // Predicated region
  $region38: #{model1_forward.1} parent=0 // pred_check
    _
  $region39: #{model1_forward.1} parent=0 // pred_check_branch
    %3880 = sbr.rel (0) target = $region41
  $region40: #{model1_forward.1} parent=0 // pred_region
    _
  $region41: #{model1_forward.1} parent=0 // pred_fallthru
    _
  // Predicated region
  $region42: #{model1_forward.1} parent=0 // pred_check
    _
  $region43: #{model1_forward.1} parent=0 // pred_check_branch
    %3882 = sbr.rel (0) target = $region45
  $region44: #{model1_forward.1} parent=0 // pred_region
    _
  $region45: #{model1_forward.1} parent=0 // pred_fallthru
    _

</llo_original>
